<compile_context>
chip_gen: v6e
topology: v6e:2x2x1
jax: 0.10.0
libtpu: 0.0.40
codegen_flags: <defaults>
</compile_context>

<pallas_src>
import functools

import jax
import jax.numpy as jnp
from jax import lax
from jax.experimental import pallas as pl
from jax.experimental.pallas import tpu as pltpu

# Model hyper-parameters (mirroring the PyTorch module defaults).
D_MODEL = 64
N_HEAD = 4
HEAD_DIM = D_MODEL // N_HEAD
N_LAYERS = 2
D_FF = 128
NUM_EVENT_TYPES = 5
LN_EPS = 1e-5
NEG_BIAS = -1e30  # large negative instead of -inf (robust, same softmax result)


def _layer_norm(x, w, b):
    mu = jnp.mean(x, axis=-1, keepdims=True)
    xc = x - mu
    var = jnp.mean(xc * xc, axis=-1, keepdims=True)
    return xc * lax.rsqrt(var + LN_EPS) * w + b


def tmhp_kernel(dt_ref, emb_ref, wt_ref, bt_ref,
                wq_ref, bq_ref, wk_ref, bk_ref, wv_ref, bv_ref,
                wo_ref, bo_ref,
                ln1_w_ref, ln1_b_ref, ln2_w_ref, ln2_b_ref,
                ff1_w_ref, ff1_b_ref, ff2_w_ref, ff2_b_ref,
                o_ref, *, rows, seq_len):
    R, S = rows, seq_len

    # time_encoder: nn.Linear(1, D)  ->  dt * W_row + b, added to the event-type
    # embedding.  Everything below operates on the flattened (R, D) row slab,
    # R = TB * S rows (TB sequences stacked per grid step).
    x = dt_ref[...] * wt_ref[...] + bt_ref[...] + emb_ref[...]        # (R, D) f32

    # Block-diagonal causal additive bias, built in-kernel (VPU compares, no
    # (R, R) HBM input, no integer division).  keep(row, col) = same sequence
    # AND col <= row.  Same-sequence test: given col <= row, the pair crosses a
    # sequence boundary iff col < b <= row for some boundary b = t*S.
    row_i = lax.broadcasted_iota(jnp.int32, (R, R), 0)
    col_i = lax.broadcasted_iota(jnp.int32, (R, R), 1)
    keep = col_i <= row_i
    for t in range(1, R // S):
        b = t * S
        keep = keep & jnp.logical_not((col_i < b) & (row_i >= b))
    bias = jnp.where(keep, 0.0, NEG_BIAS).astype(jnp.float32)

    scale = 1.0 / (HEAD_DIM ** 0.5)

    for l in range(N_LAYERS):            # static unroll over encoder layers
        # ---- Multi-head self-attention (post-norm layer) ----
        xb = x.astype(jnp.bfloat16)
        # Fused per-layer projections: (R, D) @ (D, D) on bf16, f32 accumulate.
        q = jnp.dot(xb, wq_ref[l], preferred_element_type=jnp.float32) + bq_ref[l]
        k = jnp.dot(xb, wk_ref[l], preferred_element_type=jnp.float32) + bk_ref[l]
        v = jnp.dot(xb, wv_ref[l], preferred_element_type=jnp.float32) + bv_ref[l]
        qb = q.astype(jnp.bfloat16)
        kb = k.astype(jnp.bfloat16)
        vb = v.astype(jnp.bfloat16)

        ctx_heads = []
        for h in range(N_HEAD):          # static unroll over heads
            lo, hi = h * HEAD_DIM, (h + 1) * HEAD_DIM
            qh = qb[:, lo:hi]            # 16-lane head slice (only for scores)
            kh = kb[:, lo:hi]
            vh = vb[:, lo:hi]
            sc = lax.dot_general(qh, kh, (((1,), (1,)), ((), ())),
                                 preferred_element_type=jnp.float32)
            sc = sc * scale + bias                               # (R, R) f32
            m = jnp.max(sc, axis=-1, keepdims=True)
            e = jnp.exp(sc - m)
            denom = jnp.sum(e, axis=-1, keepdims=True)
            p = e * pl.reciprocal(denom, approx=True)            # EUP reciprocal
            ctx_heads.append(jnp.dot(p.astype(jnp.bfloat16), vh,
                                     preferred_element_type=jnp.float32))
        # Re-fused out-projection: lane-concat (XLU has slack) then one matmul.
        ctx = jnp.concatenate(ctx_heads, axis=-1)                # (R, D) f32
        attn = jnp.dot(ctx.astype(jnp.bfloat16), wo_ref[l],
                       preferred_element_type=jnp.float32) + bo_ref[l]
        x = _layer_norm(x + attn, ln1_w_ref[l], ln1_b_ref[l])

        # ---- Feed-forward (ReLU) ----
        h1 = jnp.dot(x.astype(jnp.bfloat16), ff1_w_ref[l],
                     preferred_element_type=jnp.float32) + ff1_b_ref[l]
        h1 = jnp.maximum(h1, 0.0)
        ff = jnp.dot(h1.astype(jnp.bfloat16), ff2_w_ref[l],
                     preferred_element_type=jnp.float32) + ff2_b_ref[l]
        x = _layer_norm(x + ff, ln2_w_ref[l], ln2_b_ref[l])

    o_ref[...] = x.astype(o_ref.dtype)


def _choose_seqs_per_block(B, S, max_rows=128, max_tb=8):
    """S-aware block sizing: largest divisor TB of B with TB <= max_tb and
    TB*S <= max_rows, then reduced (if possible) so the grid has >= 2 steps
    (keeps both v7x TensorCores busy; bounds block-diagonal softmax waste)."""
    best = 1
    for cand in range(1, B + 1):
        if B % cand == 0 and cand <= max_tb and cand * S <= max_rows:
            best = cand
    while best > 1 and B // best < 2:
        nxt = best - 1
        while nxt > 1 and B % nxt != 0:
            nxt -= 1
        best = nxt
    return best


def tmhp_forward(event_times, event_types, params, *, seqs_per_block=None):
    """event_times: (B, S) float32, event_types: (B, S) int32 -> (B, S, D) float32."""
    B, S = event_times.shape

    # Glue: time intervals and embedding gather, flattened to (B*S, ...) rows.
    dt = jnp.concatenate(
        [jnp.zeros_like(event_times[:, :1]),
         event_times[:, 1:] - event_times[:, :-1]], axis=1)
    dt = dt.reshape(B * S, 1).astype(jnp.float32)                       # (B*S, 1)
    emb = params["embedding"][event_types].reshape(B * S, D_MODEL)      # (B*S, D)
    emb = emb.astype(jnp.float32)

    if seqs_per_block is None:
        seqs_per_block = _choose_seqs_per_block(B, S)
    TB = seqs_per_block
    assert B % TB == 0
    if (TB * S) % 8 != 0 and TB != B:
        TB = B      # block rows must be sublane-aligned unless full-array block
    R = TB * S
    grid = (B // TB,)

    # bf16 weight slabs for the MXU (halves DMA bytes); bias/LN params stay f32.
    bf16 = lambda a: a.astype(jnp.bfloat16)

    row_spec = lambda cols: pl.BlockSpec((R, cols), lambda g: (g, 0))

    def wspec(*shape):
        return pl.BlockSpec(shape, lambda g: (0,) * len(shape))

    kernel = functools.partial(tmhp_kernel, rows=R, seq_len=S)

    out = pl.pallas_call(
        kernel,
        out_shape=jax.ShapeDtypeStruct((B * S, D_MODEL), jnp.float32),
        grid=grid,
        in_specs=[
            row_spec(1),                                         # dt rows
            row_spec(D_MODEL),                                   # type-emb rows
            wspec(1, D_MODEL),                                   # time W (1, D)
            wspec(1, D_MODEL),                                   # time b
            wspec(N_LAYERS, D_MODEL, D_MODEL),                   # Wq (fused heads)
            wspec(N_LAYERS, 1, D_MODEL),                         # bq
            wspec(N_LAYERS, D_MODEL, D_MODEL),                   # Wk
            wspec(N_LAYERS, 1, D_MODEL),                         # bk
            wspec(N_LAYERS, D_MODEL, D_MODEL),                   # Wv
            wspec(N_LAYERS, 1, D_MODEL),                         # bv
            wspec(N_LAYERS, D_MODEL, D_MODEL),                   # Wo (fused heads)
            wspec(N_LAYERS, 1, D_MODEL),                         # bo
            wspec(N_LAYERS, 1, D_MODEL),                         # ln1 w
            wspec(N_LAYERS, 1, D_MODEL),                         # ln1 b
            wspec(N_LAYERS, 1, D_MODEL),                         # ln2 w
            wspec(N_LAYERS, 1, D_MODEL),                         # ln2 b
            wspec(N_LAYERS, D_MODEL, D_FF),                      # ffn W1
            wspec(N_LAYERS, 1, D_FF),                            # ffn b1
            wspec(N_LAYERS, D_FF, D_MODEL),                      # ffn W2
            wspec(N_LAYERS, 1, D_MODEL),                         # ffn b2
        ],
        out_specs=row_spec(D_MODEL),
        compiler_params=pltpu.CompilerParams(dimension_semantics=("parallel",)),
    )(dt, emb,
      params["time_w"], params["time_b"],
      bf16(params["wq"]), params["bq"], bf16(params["wk"]), params["bk"],
      bf16(params["wv"]), params["bv"], bf16(params["wo"]), params["bo"],
      params["ln1_w"], params["ln1_b"], params["ln2_w"], params["ln2_b"],
      bf16(params["ff1_w"]), params["ff1_b"], bf16(params["ff2_w"]), params["ff2_b"])
    return out.reshape(B, S, D_MODEL)


def init_params(key):
    ks = jax.random.split(key, 16)
    nrm = lambda k, shape, s=0.05: (jax.random.normal(k, shape) * s).astype(jnp.float32)
    return {
        "embedding": nrm(ks[0], (NUM_EVENT_TYPES, D_MODEL), 1.0),
        "time_w": nrm(ks[1], (1, D_MODEL)),            # Linear(1, D) weight, transposed
        "time_b": nrm(ks[2], (1, D_MODEL)),
        # Fused (over heads) projection slabs, already transposed to x @ W form.
        "wq": nrm(ks[3], (N_LAYERS, D_MODEL, D_MODEL)),
        "bq": nrm(ks[4], (N_LAYERS, 1, D_MODEL)),
        "wk": nrm(ks[5], (N_LAYERS, D_MODEL, D_MODEL)),
        "bk": nrm(ks[6], (N_LAYERS, 1, D_MODEL)),
        "wv": nrm(ks[7], (N_LAYERS, D_MODEL, D_MODEL)),
        "bv": nrm(ks[8], (N_LAYERS, 1, D_MODEL)),
        "wo": nrm(ks[9], (N_LAYERS, D_MODEL, D_MODEL)),
        "bo": nrm(ks[10], (N_LAYERS, 1, D_MODEL)),
        "ln1_w": jnp.ones((N_LAYERS, 1, D_MODEL), jnp.float32),
        "ln1_b": jnp.zeros((N_LAYERS, 1, D_MODEL), jnp.float32),
        "ln2_w": jnp.ones((N_LAYERS, 1, D_MODEL), jnp.float32),
        "ln2_b": jnp.zeros((N_LAYERS, 1, D_MODEL), jnp.float32),
        "ff1_w": nrm(ks[11], (N_LAYERS, D_MODEL, D_FF)),
        "ff1_b": nrm(ks[12], (N_LAYERS, 1, D_FF)),
        "ff2_w": nrm(ks[13], (N_LAYERS, D_FF, D_MODEL)),
        "ff2_b": nrm(ks[14], (N_LAYERS, 1, D_MODEL)),
    }


if __name__ == "__main__":
    B, S = 2, 8
    key = jax.random.PRNGKey(0)
    k_par, k_t, k_e = jax.random.split(key, 3)

    params = init_params(k_par)
    # Strictly increasing event times per sequence.
    event_times = jnp.cumsum(
        jax.random.uniform(k_t, (B, S), minval=0.1, maxval=1.0), axis=1
    ).astype(jnp.float32)
    event_types = jax.random.randint(k_e, (B, S), 0, NUM_EVENT_TYPES, dtype=jnp.int32)

    hidden = tmhp_forward(event_times, event_types, params)
    hidden = jax.block_until_ready(hidden)

    assert hidden.shape == (B, S, D_MODEL)
    assert bool(jnp.all(jnp.isfinite(hidden)))
    print("KERNEL_OK")
</pallas_src>

<mosaic_0001>
module attributes {stable_mosaic.version = 11 : i64} {
  func.func @tmhp_kernel(%arg0: i32, %arg1: memref<8x1xf32, #tpu.memory_space<vmem>>, %arg2: memref<8x64xf32, #tpu.memory_space<vmem>>, %arg3: memref<1x64xf32, #tpu.memory_space<vmem>>, %arg4: memref<1x64xf32, #tpu.memory_space<vmem>>, %arg5: memref<2x64x64xbf16, #tpu.memory_space<vmem>>, %arg6: memref<2x1x64xf32, #tpu.memory_space<vmem>>, %arg7: memref<2x64x64xbf16, #tpu.memory_space<vmem>>, %arg8: memref<2x1x64xf32, #tpu.memory_space<vmem>>, %arg9: memref<2x64x64xbf16, #tpu.memory_space<vmem>>, %arg10: memref<2x1x64xf32, #tpu.memory_space<vmem>>, %arg11: memref<2x64x64xbf16, #tpu.memory_space<vmem>>, %arg12: memref<2x1x64xf32, #tpu.memory_space<vmem>>, %arg13: memref<2x1x64xf32, #tpu.memory_space<vmem>>, %arg14: memref<2x1x64xf32, #tpu.memory_space<vmem>>, %arg15: memref<2x1x64xf32, #tpu.memory_space<vmem>>, %arg16: memref<2x1x64xf32, #tpu.memory_space<vmem>>, %arg17: memref<2x64x128xbf16, #tpu.memory_space<vmem>>, %arg18: memref<2x1x128xf32, #tpu.memory_space<vmem>>, %arg19: memref<2x128x64xbf16, #tpu.memory_space<vmem>>, %arg20: memref<2x1x64xf32, #tpu.memory_space<vmem>>, %arg21: memref<8x64xf32, #tpu.memory_space<vmem>>) attributes {dimension_semantics = [#tpu.dimension_semantics<parallel>], iteration_bounds = array<i64: 2>, scalar_prefetch = 0 : i64, scratch_operands = 0 : i64, tpu.core_type = #tpu.core_type<tc>, window_params = [{transform_indices = @transform_0, window_bounds = array<i64: 8, 1>}, {transform_indices = @transform_1, window_bounds = array<i64: 8, 64>}, {pipeline_mode = #tpu.pipeline_mode<synchronous>, transform_indices = @transform_2, window_bounds = array<i64: 1, 64>}, {pipeline_mode = #tpu.pipeline_mode<synchronous>, transform_indices = @transform_3, window_bounds = array<i64: 1, 64>}, {pipeline_mode = #tpu.pipeline_mode<synchronous>, transform_indices = @transform_4, window_bounds = array<i64: 2, 64, 64>}, {pipeline_mode = #tpu.pipeline_mode<synchronous>, transform_indices = @transform_5, window_bounds = array<i64: 2, 1, 64>}, {pipeline_mode = #tpu.pipeline_mode<synchronous>, transform_indices = @transform_6, window_bounds = array<i64: 2, 64, 64>}, {pipeline_mode = #tpu.pipeline_mode<synchronous>, transform_indices = @transform_7, window_bounds = array<i64: 2, 1, 64>}, {pipeline_mode = #tpu.pipeline_mode<synchronous>, transform_indices = @transform_8, window_bounds = array<i64: 2, 64, 64>}, {pipeline_mode = #tpu.pipeline_mode<synchronous>, transform_indices = @transform_9, window_bounds = array<i64: 2, 1, 64>}, {pipeline_mode = #tpu.pipeline_mode<synchronous>, transform_indices = @transform_10, window_bounds = array<i64: 2, 64, 64>}, {pipeline_mode = #tpu.pipeline_mode<synchronous>, transform_indices = @transform_11, window_bounds = array<i64: 2, 1, 64>}, {pipeline_mode = #tpu.pipeline_mode<synchronous>, transform_indices = @transform_12, window_bounds = array<i64: 2, 1, 64>}, {pipeline_mode = #tpu.pipeline_mode<synchronous>, transform_indices = @transform_13, window_bounds = array<i64: 2, 1, 64>}, {pipeline_mode = #tpu.pipeline_mode<synchronous>, transform_indices = @transform_14, window_bounds = array<i64: 2, 1, 64>}, {pipeline_mode = #tpu.pipeline_mode<synchronous>, transform_indices = @transform_15, window_bounds = array<i64: 2, 1, 64>}, {pipeline_mode = #tpu.pipeline_mode<synchronous>, transform_indices = @transform_16, window_bounds = array<i64: 2, 64, 128>}, {pipeline_mode = #tpu.pipeline_mode<synchronous>, transform_indices = @transform_17, window_bounds = array<i64: 2, 1, 128>}, {pipeline_mode = #tpu.pipeline_mode<synchronous>, transform_indices = @transform_18, window_bounds = array<i64: 2, 128, 64>}, {pipeline_mode = #tpu.pipeline_mode<synchronous>, transform_indices = @transform_19, window_bounds = array<i64: 2, 1, 64>}, {transform_indices = @transform_20, window_bounds = array<i64: 8, 64>}]} {
    %c0 = arith.constant 0 : index
    %c0_0 = arith.constant 0 : index
    %0 = vector.load %arg1[%c0, %c0_0] : memref<8x1xf32, #tpu.memory_space<vmem>>, vector<8x1xf32>
    %c0_1 = arith.constant 0 : index
    %c0_2 = arith.constant 0 : index
    %1 = vector.load %arg3[%c0_1, %c0_2] : memref<1x64xf32, #tpu.memory_space<vmem>>, vector<1x64xf32>
    %2 = vector.broadcast %0 : vector<8x1xf32> to vector<8x64xf32>
    %3 = vector.broadcast %1 : vector<1x64xf32> to vector<8x64xf32>
    %4 = arith.mulf %2, %3 : vector<8x64xf32>
    %c0_3 = arith.constant 0 : index
    %c0_4 = arith.constant 0 : index
    %5 = vector.load %arg4[%c0_3, %c0_4] : memref<1x64xf32, #tpu.memory_space<vmem>>, vector<1x64xf32>
    %6 = vector.broadcast %5 : vector<1x64xf32> to vector<8x64xf32>
    %7 = arith.addf %4, %6 : vector<8x64xf32>
    %c0_5 = arith.constant 0 : index
    %c0_6 = arith.constant 0 : index
    %8 = vector.load %arg2[%c0_5, %c0_6] : memref<8x64xf32, #tpu.memory_space<vmem>>, vector<8x64xf32>
    %9 = arith.addf %7, %8 : vector<8x64xf32>
    %10 = tpu.iota {dimensions = array<i32: 0>} : vector<8x8xi32>
    %11 = tpu.iota {dimensions = array<i32: 1>} : vector<8x8xi32>
    %12 = arith.cmpi sle, %11, %10 : vector<8x8xi32>
    %cst = arith.constant 0.000000e+00 : f32
    %cst_7 = arith.constant -1.000000e+30 : f32
    %13 = vector.broadcast %cst : f32 to vector<8x8xf32>
    %14 = vector.broadcast %cst_7 : f32 to vector<8x8xf32>
    %15 = arith.select %12, %13, %14 : vector<8x8xi1>, vector<8x8xf32>
    %16 = arith.truncf %9 : vector<8x64xf32> to vector<8x64xbf16>
    %c0_8 = arith.constant 0 : index
    %c0_9 = arith.constant 0 : index
    %c0_10 = arith.constant 0 : index
    %17 = vector.load %arg5[%c0_8, %c0_9, %c0_10] : memref<2x64x64xbf16, #tpu.memory_space<vmem>>, vector<1x64x64xbf16>
    %18 = vector.shape_cast %17 : vector<1x64x64xbf16> to vector<64x64xbf16>
    %cst_11 = arith.constant dense<0.000000e+00> : vector<8x64xf32>
    %19 = tpu.matmul %16, %18, %cst_11 {dimension_numbers = #tpu.dot_dimension_numbers<[1], [0], [0], [1], [0, 0, 1, 1], [], []>} : vector<8x64xbf16>, vector<64x64xbf16>, vector<8x64xf32> -> vector<8x64xf32>
    %c0_12 = arith.constant 0 : index
    %c0_13 = arith.constant 0 : index
    %c0_14 = arith.constant 0 : index
    %20 = vector.load %arg6[%c0_12, %c0_13, %c0_14] : memref<2x1x64xf32, #tpu.memory_space<vmem>>, vector<1x1x64xf32>
    %21 = vector.shape_cast %20 : vector<1x1x64xf32> to vector<1x64xf32>
    %22 = vector.broadcast %21 : vector<1x64xf32> to vector<8x64xf32>
    %23 = arith.addf %19, %22 : vector<8x64xf32>
    %c0_15 = arith.constant 0 : index
    %c0_16 = arith.constant 0 : index
    %c0_17 = arith.constant 0 : index
    %24 = vector.load %arg7[%c0_15, %c0_16, %c0_17] : memref<2x64x64xbf16, #tpu.memory_space<vmem>>, vector<1x64x64xbf16>
    %25 = vector.shape_cast %24 : vector<1x64x64xbf16> to vector<64x64xbf16>
    %cst_18 = arith.constant dense<0.000000e+00> : vector<8x64xf32>
    %26 = tpu.matmul %16, %25, %cst_18 {dimension_numbers = #tpu.dot_dimension_numbers<[1], [0], [0], [1], [0, 0, 1, 1], [], []>} : vector<8x64xbf16>, vector<64x64xbf16>, vector<8x64xf32> -> vector<8x64xf32>
    %c0_19 = arith.constant 0 : index
    %c0_20 = arith.constant 0 : index
    %c0_21 = arith.constant 0 : index
    %27 = vector.load %arg8[%c0_19, %c0_20, %c0_21] : memref<2x1x64xf32, #tpu.memory_space<vmem>>, vector<1x1x64xf32>
    %28 = vector.shape_cast %27 : vector<1x1x64xf32> to vector<1x64xf32>
    %29 = vector.broadcast %28 : vector<1x64xf32> to vector<8x64xf32>
    %30 = arith.addf %26, %29 : vector<8x64xf32>
    %c0_22 = arith.constant 0 : index
    %c0_23 = arith.constant 0 : index
    %c0_24 = arith.constant 0 : index
    %31 = vector.load %arg9[%c0_22, %c0_23, %c0_24] : memref<2x64x64xbf16, #tpu.memory_space<vmem>>, vector<1x64x64xbf16>
    %32 = vector.shape_cast %31 : vector<1x64x64xbf16> to vector<64x64xbf16>
    %cst_25 = arith.constant dense<0.000000e+00> : vector<8x64xf32>
    %33 = tpu.matmul %16, %32, %cst_25 {dimension_numbers = #tpu.dot_dimension_numbers<[1], [0], [0], [1], [0, 0, 1, 1], [], []>} : vector<8x64xbf16>, vector<64x64xbf16>, vector<8x64xf32> -> vector<8x64xf32>
    %c0_26 = arith.constant 0 : index
    %c0_27 = arith.constant 0 : index
    %c0_28 = arith.constant 0 : index
    %34 = vector.load %arg10[%c0_26, %c0_27, %c0_28] : memref<2x1x64xf32, #tpu.memory_space<vmem>>, vector<1x1x64xf32>
    %35 = vector.shape_cast %34 : vector<1x1x64xf32> to vector<1x64xf32>
    %36 = vector.broadcast %35 : vector<1x64xf32> to vector<8x64xf32>
    %37 = arith.addf %33, %36 : vector<8x64xf32>
    %38 = arith.truncf %23 : vector<8x64xf32> to vector<8x64xbf16>
    %39 = arith.truncf %30 : vector<8x64xf32> to vector<8x64xbf16>
    %40 = arith.truncf %37 : vector<8x64xf32> to vector<8x64xbf16>
    %41 = vector.extract_strided_slice %38 {offsets = [0, 0], sizes = [8, 16], strides = [1, 1]} : vector<8x64xbf16> to vector<8x16xbf16>
    %42 = vector.extract_strided_slice %39 {offsets = [0, 0], sizes = [8, 16], strides = [1, 1]} : vector<8x64xbf16> to vector<8x16xbf16>
    %43 = vector.extract_strided_slice %40 {offsets = [0, 0], sizes = [8, 16], strides = [1, 1]} : vector<8x64xbf16> to vector<8x16xbf16>
    %cst_29 = arith.constant dense<0.000000e+00> : vector<8x8xf32>
    %44 = tpu.matmul %41, %42, %cst_29 {dimension_numbers = #tpu.dot_dimension_numbers<[1], [1], [0], [0], [0, 0, 1, 0], [], []>} : vector<8x16xbf16>, vector<8x16xbf16>, vector<8x8xf32> -> vector<8x8xf32>
    %cst_30 = arith.constant 2.500000e-01 : f32
    %45 = vector.broadcast %cst_30 : f32 to vector<8x8xf32>
    %46 = arith.mulf %44, %45 : vector<8x8xf32>
    %47 = arith.addf %46, %15 : vector<8x8xf32>
    %cst_31 = arith.constant dense<0xFF800000> : vector<8xf32>
    %48 = vector.multi_reduction <maximumf>, %47, %cst_31 [1] : vector<8x8xf32> to vector<8xf32>
    %49 = vector.shape_cast %48 : vector<8xf32> to vector<8x1xf32>
    %50 = vector.broadcast %49 : vector<8x1xf32> to vector<8x8xf32>
    %51 = arith.subf %47, %50 : vector<8x8xf32>
    %52 = math.exp %51 : vector<8x8xf32>
    %cst_32 = arith.constant dense<0.000000e+00> : vector<8xf32>
    %53 = vector.multi_reduction <add>, %52, %cst_32 [1] : vector<8x8xf32> to vector<8xf32>
    %54 = vector.shape_cast %53 : vector<8xf32> to vector<8x1xf32>
    %55 = tpu.reciprocal %54 {approx = true} : vector<8x1xf32> -> vector<8x1xf32>
    %56 = vector.broadcast %55 : vector<8x1xf32> to vector<8x8xf32>
    %57 = arith.mulf %52, %56 : vector<8x8xf32>
    %58 = arith.truncf %57 : vector<8x8xf32> to vector<8x8xbf16>
    %cst_33 = arith.constant dense<0.000000e+00> : vector<8x16xf32>
    %59 = tpu.matmul %58, %43, %cst_33 {dimension_numbers = #tpu.dot_dimension_numbers<[1], [0], [0], [1], [0, 0, 1, 1], [], []>} : vector<8x8xbf16>, vector<8x16xbf16>, vector<8x16xf32> -> vector<8x16xf32>
    %60 = vector.extract_strided_slice %38 {offsets = [0, 16], sizes = [8, 16], strides = [1, 1]} : vector<8x64xbf16> to vector<8x16xbf16>
    %61 = vector.extract_strided_slice %39 {offsets = [0, 16], sizes = [8, 16], strides = [1, 1]} : vector<8x64xbf16> to vector<8x16xbf16>
    %62 = vector.extract_strided_slice %40 {offsets = [0, 16], sizes = [8, 16], strides = [1, 1]} : vector<8x64xbf16> to vector<8x16xbf16>
    %cst_34 = arith.constant dense<0.000000e+00> : vector<8x8xf32>
    %63 = tpu.matmul %60, %61, %cst_34 {dimension_numbers = #tpu.dot_dimension_numbers<[1], [1], [0], [0], [0, 0, 1, 0], [], []>} : vector<8x16xbf16>, vector<8x16xbf16>, vector<8x8xf32> -> vector<8x8xf32>
    %cst_35 = arith.constant 2.500000e-01 : f32
    %64 = vector.broadcast %cst_35 : f32 to vector<8x8xf32>
    %65 = arith.mulf %63, %64 : vector<8x8xf32>
    %66 = arith.addf %65, %15 : vector<8x8xf32>
    %cst_36 = arith.constant dense<0xFF800000> : vector<8xf32>
    %67 = vector.multi_reduction <maximumf>, %66, %cst_36 [1] : vector<8x8xf32> to vector<8xf32>
    %68 = vector.shape_cast %67 : vector<8xf32> to vector<8x1xf32>
    %69 = vector.broadcast %68 : vector<8x1xf32> to vector<8x8xf32>
    %70 = arith.subf %66, %69 : vector<8x8xf32>
    %71 = math.exp %70 : vector<8x8xf32>
    %cst_37 = arith.constant dense<0.000000e+00> : vector<8xf32>
    %72 = vector.multi_reduction <add>, %71, %cst_37 [1] : vector<8x8xf32> to vector<8xf32>
    %73 = vector.shape_cast %72 : vector<8xf32> to vector<8x1xf32>
    %74 = tpu.reciprocal %73 {approx = true} : vector<8x1xf32> -> vector<8x1xf32>
    %75 = vector.broadcast %74 : vector<8x1xf32> to vector<8x8xf32>
    %76 = arith.mulf %71, %75 : vector<8x8xf32>
    %77 = arith.truncf %76 : vector<8x8xf32> to vector<8x8xbf16>
    %cst_38 = arith.constant dense<0.000000e+00> : vector<8x16xf32>
    %78 = tpu.matmul %77, %62, %cst_38 {dimension_numbers = #tpu.dot_dimension_numbers<[1], [0], [0], [1], [0, 0, 1, 1], [], []>} : vector<8x8xbf16>, vector<8x16xbf16>, vector<8x16xf32> -> vector<8x16xf32>
    %79 = vector.extract_strided_slice %38 {offsets = [0, 32], sizes = [8, 16], strides = [1, 1]} : vector<8x64xbf16> to vector<8x16xbf16>
    %80 = vector.extract_strided_slice %39 {offsets = [0, 32], sizes = [8, 16], strides = [1, 1]} : vector<8x64xbf16> to vector<8x16xbf16>
    %81 = vector.extract_strided_slice %40 {offsets = [0, 32], sizes = [8, 16], strides = [1, 1]} : vector<8x64xbf16> to vector<8x16xbf16>
    %cst_39 = arith.constant dense<0.000000e+00> : vector<8x8xf32>
    %82 = tpu.matmul %79, %80, %cst_39 {dimension_numbers = #tpu.dot_dimension_numbers<[1], [1], [0], [0], [0, 0, 1, 0], [], []>} : vector<8x16xbf16>, vector<8x16xbf16>, vector<8x8xf32> -> vector<8x8xf32>
    %cst_40 = arith.constant 2.500000e-01 : f32
    %83 = vector.broadcast %cst_40 : f32 to vector<8x8xf32>
    %84 = arith.mulf %82, %83 : vector<8x8xf32>
    %85 = arith.addf %84, %15 : vector<8x8xf32>
    %cst_41 = arith.constant dense<0xFF800000> : vector<8xf32>
    %86 = vector.multi_reduction <maximumf>, %85, %cst_41 [1] : vector<8x8xf32> to vector<8xf32>
    %87 = vector.shape_cast %86 : vector<8xf32> to vector<8x1xf32>
    %88 = vector.broadcast %87 : vector<8x1xf32> to vector<8x8xf32>
    %89 = arith.subf %85, %88 : vector<8x8xf32>
    %90 = math.exp %89 : vector<8x8xf32>
    %cst_42 = arith.constant dense<0.000000e+00> : vector<8xf32>
    %91 = vector.multi_reduction <add>, %90, %cst_42 [1] : vector<8x8xf32> to vector<8xf32>
    %92 = vector.shape_cast %91 : vector<8xf32> to vector<8x1xf32>
    %93 = tpu.reciprocal %92 {approx = true} : vector<8x1xf32> -> vector<8x1xf32>
    %94 = vector.broadcast %93 : vector<8x1xf32> to vector<8x8xf32>
    %95 = arith.mulf %90, %94 : vector<8x8xf32>
    %96 = arith.truncf %95 : vector<8x8xf32> to vector<8x8xbf16>
    %cst_43 = arith.constant dense<0.000000e+00> : vector<8x16xf32>
    %97 = tpu.matmul %96, %81, %cst_43 {dimension_numbers = #tpu.dot_dimension_numbers<[1], [0], [0], [1], [0, 0, 1, 1], [], []>} : vector<8x8xbf16>, vector<8x16xbf16>, vector<8x16xf32> -> vector<8x16xf32>
    %98 = vector.extract_strided_slice %38 {offsets = [0, 48], sizes = [8, 16], strides = [1, 1]} : vector<8x64xbf16> to vector<8x16xbf16>
    %99 = vector.extract_strided_slice %39 {offsets = [0, 48], sizes = [8, 16], strides = [1, 1]} : vector<8x64xbf16> to vector<8x16xbf16>
    %100 = vector.extract_strided_slice %40 {offsets = [0, 48], sizes = [8, 16], strides = [1, 1]} : vector<8x64xbf16> to vector<8x16xbf16>
    %cst_44 = arith.constant dense<0.000000e+00> : vector<8x8xf32>
    %101 = tpu.matmul %98, %99, %cst_44 {dimension_numbers = #tpu.dot_dimension_numbers<[1], [1], [0], [0], [0, 0, 1, 0], [], []>} : vector<8x16xbf16>, vector<8x16xbf16>, vector<8x8xf32> -> vector<8x8xf32>
    %cst_45 = arith.constant 2.500000e-01 : f32
    %102 = vector.broadcast %cst_45 : f32 to vector<8x8xf32>
    %103 = arith.mulf %101, %102 : vector<8x8xf32>
    %104 = arith.addf %103, %15 : vector<8x8xf32>
    %cst_46 = arith.constant dense<0xFF800000> : vector<8xf32>
    %105 = vector.multi_reduction <maximumf>, %104, %cst_46 [1] : vector<8x8xf32> to vector<8xf32>
    %106 = vector.shape_cast %105 : vector<8xf32> to vector<8x1xf32>
    %107 = vector.broadcast %106 : vector<8x1xf32> to vector<8x8xf32>
    %108 = arith.subf %104, %107 : vector<8x8xf32>
    %109 = math.exp %108 : vector<8x8xf32>
    %cst_47 = arith.constant dense<0.000000e+00> : vector<8xf32>
    %110 = vector.multi_reduction <add>, %109, %cst_47 [1] : vector<8x8xf32> to vector<8xf32>
    %111 = vector.shape_cast %110 : vector<8xf32> to vector<8x1xf32>
    %112 = tpu.reciprocal %111 {approx = true} : vector<8x1xf32> -> vector<8x1xf32>
    %113 = vector.broadcast %112 : vector<8x1xf32> to vector<8x8xf32>
    %114 = arith.mulf %109, %113 : vector<8x8xf32>
    %115 = arith.truncf %114 : vector<8x8xf32> to vector<8x8xbf16>
    %cst_48 = arith.constant dense<0.000000e+00> : vector<8x16xf32>
    %116 = tpu.matmul %115, %100, %cst_48 {dimension_numbers = #tpu.dot_dimension_numbers<[1], [0], [0], [1], [0, 0, 1, 1], [], []>} : vector<8x8xbf16>, vector<8x16xbf16>, vector<8x16xf32> -> vector<8x16xf32>
    %117 = tpu.concatenate %59, %78, %97, %116 in 1 : vector<8x16xf32>, vector<8x16xf32>, vector<8x16xf32>, vector<8x16xf32> -> vector<8x64xf32>
    %118 = arith.truncf %117 : vector<8x64xf32> to vector<8x64xbf16>
    %c0_49 = arith.constant 0 : index
    %c0_50 = arith.constant 0 : index
    %c0_51 = arith.constant 0 : index
    %119 = vector.load %arg11[%c0_49, %c0_50, %c0_51] : memref<2x64x64xbf16, #tpu.memory_space<vmem>>, vector<1x64x64xbf16>
    %120 = vector.shape_cast %119 : vector<1x64x64xbf16> to vector<64x64xbf16>
    %cst_52 = arith.constant dense<0.000000e+00> : vector<8x64xf32>
    %121 = tpu.matmul %118, %120, %cst_52 {dimension_numbers = #tpu.dot_dimension_numbers<[1], [0], [0], [1], [0, 0, 1, 1], [], []>} : vector<8x64xbf16>, vector<64x64xbf16>, vector<8x64xf32> -> vector<8x64xf32>
    %c0_53 = arith.constant 0 : index
    %c0_54 = arith.constant 0 : index
    %c0_55 = arith.constant 0 : index
    %122 = vector.load %arg12[%c0_53, %c0_54, %c0_55] : memref<2x1x64xf32, #tpu.memory_space<vmem>>, vector<1x1x64xf32>
    %123 = vector.shape_cast %122 : vector<1x1x64xf32> to vector<1x64xf32>
    %124 = vector.broadcast %123 : vector<1x64xf32> to vector<8x64xf32>
    %125 = arith.addf %121, %124 : vector<8x64xf32>
    %126 = arith.addf %9, %125 : vector<8x64xf32>
    %c0_56 = arith.constant 0 : index
    %c0_57 = arith.constant 0 : index
    %c0_58 = arith.constant 0 : index
    %127 = vector.load %arg13[%c0_56, %c0_57, %c0_58] : memref<2x1x64xf32, #tpu.memory_space<vmem>>, vector<1x1x64xf32>
    %128 = vector.shape_cast %127 : vector<1x1x64xf32> to vector<1x64xf32>
    %c0_59 = arith.constant 0 : index
    %c0_60 = arith.constant 0 : index
    %c0_61 = arith.constant 0 : index
    %129 = vector.load %arg14[%c0_59, %c0_60, %c0_61] : memref<2x1x64xf32, #tpu.memory_space<vmem>>, vector<1x1x64xf32>
    %130 = vector.shape_cast %129 : vector<1x1x64xf32> to vector<1x64xf32>
    %cst_62 = arith.constant dense<0.000000e+00> : vector<8xf32>
    %131 = vector.multi_reduction <add>, %126, %cst_62 [1] : vector<8x64xf32> to vector<8xf32>
    %132 = vector.shape_cast %131 : vector<8xf32> to vector<8x1xf32>
    %cst_63 = arith.constant 6.400000e+01 : f32
    %133 = vector.broadcast %cst_63 : f32 to vector<8x1xf32>
    %134 = arith.divf %132, %133 : vector<8x1xf32>
    %135 = vector.broadcast %134 : vector<8x1xf32> to vector<8x64xf32>
    %136 = arith.subf %126, %135 : vector<8x64xf32>
    %137 = arith.mulf %136, %136 : vector<8x64xf32>
    %cst_64 = arith.constant dense<0.000000e+00> : vector<8xf32>
    %138 = vector.multi_reduction <add>, %137, %cst_64 [1] : vector<8x64xf32> to vector<8xf32>
    %139 = vector.shape_cast %138 : vector<8xf32> to vector<8x1xf32>
    %cst_65 = arith.constant 6.400000e+01 : f32
    %140 = vector.broadcast %cst_65 : f32 to vector<8x1xf32>
    %141 = arith.divf %139, %140 : vector<8x1xf32>
    %cst_66 = arith.constant 9.99999974E-6 : f32
    %142 = vector.broadcast %cst_66 : f32 to vector<8x1xf32>
    %143 = arith.addf %141, %142 : vector<8x1xf32>
    %144 = math.rsqrt %143 : vector<8x1xf32>
    %145 = vector.broadcast %144 : vector<8x1xf32> to vector<8x64xf32>
    %146 = arith.mulf %136, %145 : vector<8x64xf32>
    %147 = vector.broadcast %128 : vector<1x64xf32> to vector<8x64xf32>
    %148 = arith.mulf %146, %147 : vector<8x64xf32>
    %149 = vector.broadcast %130 : vector<1x64xf32> to vector<8x64xf32>
    %150 = arith.addf %148, %149 : vector<8x64xf32>
    %151 = arith.truncf %150 : vector<8x64xf32> to vector<8x64xbf16>
    %c0_67 = arith.constant 0 : index
    %c0_68 = arith.constant 0 : index
    %c0_69 = arith.constant 0 : index
    %152 = vector.load %arg17[%c0_67, %c0_68, %c0_69] : memref<2x64x128xbf16, #tpu.memory_space<vmem>>, vector<1x64x128xbf16>
    %153 = vector.shape_cast %152 : vector<1x64x128xbf16> to vector<64x128xbf16>
    %cst_70 = arith.constant dense<0.000000e+00> : vector<8x128xf32>
    %154 = tpu.matmul %151, %153, %cst_70 {dimension_numbers = #tpu.dot_dimension_numbers<[1], [0], [0], [1], [0, 0, 1, 1], [], []>} : vector<8x64xbf16>, vector<64x128xbf16>, vector<8x128xf32> -> vector<8x128xf32>
    %c0_71 = arith.constant 0 : index
    %c0_72 = arith.constant 0 : index
    %c0_73 = arith.constant 0 : index
    %155 = vector.load %arg18[%c0_71, %c0_72, %c0_73] : memref<2x1x128xf32, #tpu.memory_space<vmem>>, vector<1x1x128xf32>
    %156 = vector.shape_cast %155 : vector<1x1x128xf32> to vector<1x128xf32>
    %157 = vector.broadcast %156 : vector<1x128xf32> to vector<8x128xf32>
    %158 = arith.addf %154, %157 : vector<8x128xf32>
    %cst_74 = arith.constant 0.000000e+00 : f32
    %159 = vector.broadcast %cst_74 : f32 to vector<8x128xf32>
    %160 = arith.maximumf %158, %159 : vector<8x128xf32>
    %161 = arith.truncf %160 : vector<8x128xf32> to vector<8x128xbf16>
    %c0_75 = arith.constant 0 : index
    %c0_76 = arith.constant 0 : index
    %c0_77 = arith.constant 0 : index
    %162 = vector.load %arg19[%c0_75, %c0_76, %c0_77] : memref<2x128x64xbf16, #tpu.memory_space<vmem>>, vector<1x128x64xbf16>
    %163 = vector.shape_cast %162 : vector<1x128x64xbf16> to vector<128x64xbf16>
    %cst_78 = arith.constant dense<0.000000e+00> : vector<8x64xf32>
    %164 = tpu.matmul %161, %163, %cst_78 {dimension_numbers = #tpu.dot_dimension_numbers<[1], [0], [0], [1], [0, 0, 1, 1], [], []>} : vector<8x128xbf16>, vector<128x64xbf16>, vector<8x64xf32> -> vector<8x64xf32>
    %c0_79 = arith.constant 0 : index
    %c0_80 = arith.constant 0 : index
    %c0_81 = arith.constant 0 : index
    %165 = vector.load %arg20[%c0_79, %c0_80, %c0_81] : memref<2x1x64xf32, #tpu.memory_space<vmem>>, vector<1x1x64xf32>
    %166 = vector.shape_cast %165 : vector<1x1x64xf32> to vector<1x64xf32>
    %167 = vector.broadcast %166 : vector<1x64xf32> to vector<8x64xf32>
    %168 = arith.addf %164, %167 : vector<8x64xf32>
    %169 = arith.addf %150, %168 : vector<8x64xf32>
    %c0_82 = arith.constant 0 : index
    %c0_83 = arith.constant 0 : index
    %c0_84 = arith.constant 0 : index
    %170 = vector.load %arg15[%c0_82, %c0_83, %c0_84] : memref<2x1x64xf32, #tpu.memory_space<vmem>>, vector<1x1x64xf32>
    %171 = vector.shape_cast %170 : vector<1x1x64xf32> to vector<1x64xf32>
    %c0_85 = arith.constant 0 : index
    %c0_86 = arith.constant 0 : index
    %c0_87 = arith.constant 0 : index
    %172 = vector.load %arg16[%c0_85, %c0_86, %c0_87] : memref<2x1x64xf32, #tpu.memory_space<vmem>>, vector<1x1x64xf32>
    %173 = vector.shape_cast %172 : vector<1x1x64xf32> to vector<1x64xf32>
    %cst_88 = arith.constant dense<0.000000e+00> : vector<8xf32>
    %174 = vector.multi_reduction <add>, %169, %cst_88 [1] : vector<8x64xf32> to vector<8xf32>
    %175 = vector.shape_cast %174 : vector<8xf32> to vector<8x1xf32>
    %cst_89 = arith.constant 6.400000e+01 : f32
    %176 = vector.broadcast %cst_89 : f32 to vector<8x1xf32>
    %177 = arith.divf %175, %176 : vector<8x1xf32>
    %178 = vector.broadcast %177 : vector<8x1xf32> to vector<8x64xf32>
    %179 = arith.subf %169, %178 : vector<8x64xf32>
    %180 = arith.mulf %179, %179 : vector<8x64xf32>
    %cst_90 = arith.constant dense<0.000000e+00> : vector<8xf32>
    %181 = vector.multi_reduction <add>, %180, %cst_90 [1] : vector<8x64xf32> to vector<8xf32>
    %182 = vector.shape_cast %181 : vector<8xf32> to vector<8x1xf32>
    %cst_91 = arith.constant 6.400000e+01 : f32
    %183 = vector.broadcast %cst_91 : f32 to vector<8x1xf32>
    %184 = arith.divf %182, %183 : vector<8x1xf32>
    %cst_92 = arith.constant 9.99999974E-6 : f32
    %185 = vector.broadcast %cst_92 : f32 to vector<8x1xf32>
    %186 = arith.addf %184, %185 : vector<8x1xf32>
    %187 = math.rsqrt %186 : vector<8x1xf32>
    %188 = vector.broadcast %187 : vector<8x1xf32> to vector<8x64xf32>
    %189 = arith.mulf %179, %188 : vector<8x64xf32>
    %190 = vector.broadcast %171 : vector<1x64xf32> to vector<8x64xf32>
    %191 = arith.mulf %189, %190 : vector<8x64xf32>
    %192 = vector.broadcast %173 : vector<1x64xf32> to vector<8x64xf32>
    %193 = arith.addf %191, %192 : vector<8x64xf32>
    %194 = arith.truncf %193 : vector<8x64xf32> to vector<8x64xbf16>
    %c1 = arith.constant 1 : index
    %c0_93 = arith.constant 0 : index
    %c0_94 = arith.constant 0 : index
    %195 = vector.load %arg5[%c1, %c0_93, %c0_94] : memref<2x64x64xbf16, #tpu.memory_space<vmem>>, vector<1x64x64xbf16>
    %196 = vector.shape_cast %195 : vector<1x64x64xbf16> to vector<64x64xbf16>
    %cst_95 = arith.constant dense<0.000000e+00> : vector<8x64xf32>
    %197 = tpu.matmul %194, %196, %cst_95 {dimension_numbers = #tpu.dot_dimension_numbers<[1], [0], [0], [1], [0, 0, 1, 1], [], []>} : vector<8x64xbf16>, vector<64x64xbf16>, vector<8x64xf32> -> vector<8x64xf32>
    %c1_96 = arith.constant 1 : index
    %c0_97 = arith.constant 0 : index
    %c0_98 = arith.constant 0 : index
    %198 = vector.load %arg6[%c1_96, %c0_97, %c0_98] : memref<2x1x64xf32, #tpu.memory_space<vmem>>, vector<1x1x64xf32>
    %199 = vector.shape_cast %198 : vector<1x1x64xf32> to vector<1x64xf32>
    %200 = vector.broadcast %199 : vector<1x64xf32> to vector<8x64xf32>
    %201 = arith.addf %197, %200 : vector<8x64xf32>
    %c1_99 = arith.constant 1 : index
    %c0_100 = arith.constant 0 : index
    %c0_101 = arith.constant 0 : index
    %202 = vector.load %arg7[%c1_99, %c0_100, %c0_101] : memref<2x64x64xbf16, #tpu.memory_space<vmem>>, vector<1x64x64xbf16>
    %203 = vector.shape_cast %202 : vector<1x64x64xbf16> to vector<64x64xbf16>
    %cst_102 = arith.constant dense<0.000000e+00> : vector<8x64xf32>
    %204 = tpu.matmul %194, %203, %cst_102 {dimension_numbers = #tpu.dot_dimension_numbers<[1], [0], [0], [1], [0, 0, 1, 1], [], []>} : vector<8x64xbf16>, vector<64x64xbf16>, vector<8x64xf32> -> vector<8x64xf32>
    %c1_103 = arith.constant 1 : index
    %c0_104 = arith.constant 0 : index
    %c0_105 = arith.constant 0 : index
    %205 = vector.load %arg8[%c1_103, %c0_104, %c0_105] : memref<2x1x64xf32, #tpu.memory_space<vmem>>, vector<1x1x64xf32>
    %206 = vector.shape_cast %205 : vector<1x1x64xf32> to vector<1x64xf32>
    %207 = vector.broadcast %206 : vector<1x64xf32> to vector<8x64xf32>
    %208 = arith.addf %204, %207 : vector<8x64xf32>
    %c1_106 = arith.constant 1 : index
    %c0_107 = arith.constant 0 : index
    %c0_108 = arith.constant 0 : index
    %209 = vector.load %arg9[%c1_106, %c0_107, %c0_108] : memref<2x64x64xbf16, #tpu.memory_space<vmem>>, vector<1x64x64xbf16>
    %210 = vector.shape_cast %209 : vector<1x64x64xbf16> to vector<64x64xbf16>
    %cst_109 = arith.constant dense<0.000000e+00> : vector<8x64xf32>
    %211 = tpu.matmul %194, %210, %cst_109 {dimension_numbers = #tpu.dot_dimension_numbers<[1], [0], [0], [1], [0, 0, 1, 1], [], []>} : vector<8x64xbf16>, vector<64x64xbf16>, vector<8x64xf32> -> vector<8x64xf32>
    %c1_110 = arith.constant 1 : index
    %c0_111 = arith.constant 0 : index
    %c0_112 = arith.constant 0 : index
    %212 = vector.load %arg10[%c1_110, %c0_111, %c0_112] : memref<2x1x64xf32, #tpu.memory_space<vmem>>, vector<1x1x64xf32>
    %213 = vector.shape_cast %212 : vector<1x1x64xf32> to vector<1x64xf32>
    %214 = vector.broadcast %213 : vector<1x64xf32> to vector<8x64xf32>
    %215 = arith.addf %211, %214 : vector<8x64xf32>
    %216 = arith.truncf %201 : vector<8x64xf32> to vector<8x64xbf16>
    %217 = arith.truncf %208 : vector<8x64xf32> to vector<8x64xbf16>
    %218 = arith.truncf %215 : vector<8x64xf32> to vector<8x64xbf16>
    %219 = vector.extract_strided_slice %216 {offsets = [0, 0], sizes = [8, 16], strides = [1, 1]} : vector<8x64xbf16> to vector<8x16xbf16>
    %220 = vector.extract_strided_slice %217 {offsets = [0, 0], sizes = [8, 16], strides = [1, 1]} : vector<8x64xbf16> to vector<8x16xbf16>
    %221 = vector.extract_strided_slice %218 {offsets = [0, 0], sizes = [8, 16], strides = [1, 1]} : vector<8x64xbf16> to vector<8x16xbf16>
    %cst_113 = arith.constant dense<0.000000e+00> : vector<8x8xf32>
    %222 = tpu.matmul %219, %220, %cst_113 {dimension_numbers = #tpu.dot_dimension_numbers<[1], [1], [0], [0], [0, 0, 1, 0], [], []>} : vector<8x16xbf16>, vector<8x16xbf16>, vector<8x8xf32> -> vector<8x8xf32>
    %cst_114 = arith.constant 2.500000e-01 : f32
    %223 = vector.broadcast %cst_114 : f32 to vector<8x8xf32>
    %224 = arith.mulf %222, %223 : vector<8x8xf32>
    %225 = arith.addf %224, %15 : vector<8x8xf32>
    %cst_115 = arith.constant dense<0xFF800000> : vector<8xf32>
    %226 = vector.multi_reduction <maximumf>, %225, %cst_115 [1] : vector<8x8xf32> to vector<8xf32>
    %227 = vector.shape_cast %226 : vector<8xf32> to vector<8x1xf32>
    %228 = vector.broadcast %227 : vector<8x1xf32> to vector<8x8xf32>
    %229 = arith.subf %225, %228 : vector<8x8xf32>
    %230 = math.exp %229 : vector<8x8xf32>
    %cst_116 = arith.constant dense<0.000000e+00> : vector<8xf32>
    %231 = vector.multi_reduction <add>, %230, %cst_116 [1] : vector<8x8xf32> to vector<8xf32>
    %232 = vector.shape_cast %231 : vector<8xf32> to vector<8x1xf32>
    %233 = tpu.reciprocal %232 {approx = true} : vector<8x1xf32> -> vector<8x1xf32>
    %234 = vector.broadcast %233 : vector<8x1xf32> to vector<8x8xf32>
    %235 = arith.mulf %230, %234 : vector<8x8xf32>
    %236 = arith.truncf %235 : vector<8x8xf32> to vector<8x8xbf16>
    %cst_117 = arith.constant dense<0.000000e+00> : vector<8x16xf32>
    %237 = tpu.matmul %236, %221, %cst_117 {dimension_numbers = #tpu.dot_dimension_numbers<[1], [0], [0], [1], [0, 0, 1, 1], [], []>} : vector<8x8xbf16>, vector<8x16xbf16>, vector<8x16xf32> -> vector<8x16xf32>
    %238 = vector.extract_strided_slice %216 {offsets = [0, 16], sizes = [8, 16], strides = [1, 1]} : vector<8x64xbf16> to vector<8x16xbf16>
    %239 = vector.extract_strided_slice %217 {offsets = [0, 16], sizes = [8, 16], strides = [1, 1]} : vector<8x64xbf16> to vector<8x16xbf16>
    %240 = vector.extract_strided_slice %218 {offsets = [0, 16], sizes = [8, 16], strides = [1, 1]} : vector<8x64xbf16> to vector<8x16xbf16>
    %cst_118 = arith.constant dense<0.000000e+00> : vector<8x8xf32>
    %241 = tpu.matmul %238, %239, %cst_118 {dimension_numbers = #tpu.dot_dimension_numbers<[1], [1], [0], [0], [0, 0, 1, 0], [], []>} : vector<8x16xbf16>, vector<8x16xbf16>, vector<8x8xf32> -> vector<8x8xf32>
    %cst_119 = arith.constant 2.500000e-01 : f32
    %242 = vector.broadcast %cst_119 : f32 to vector<8x8xf32>
    %243 = arith.mulf %241, %242 : vector<8x8xf32>
    %244 = arith.addf %243, %15 : vector<8x8xf32>
    %cst_120 = arith.constant dense<0xFF800000> : vector<8xf32>
    %245 = vector.multi_reduction <maximumf>, %244, %cst_120 [1] : vector<8x8xf32> to vector<8xf32>
    %246 = vector.shape_cast %245 : vector<8xf32> to vector<8x1xf32>
    %247 = vector.broadcast %246 : vector<8x1xf32> to vector<8x8xf32>
    %248 = arith.subf %244, %247 : vector<8x8xf32>
    %249 = math.exp %248 : vector<8x8xf32>
    %cst_121 = arith.constant dense<0.000000e+00> : vector<8xf32>
    %250 = vector.multi_reduction <add>, %249, %cst_121 [1] : vector<8x8xf32> to vector<8xf32>
    %251 = vector.shape_cast %250 : vector<8xf32> to vector<8x1xf32>
    %252 = tpu.reciprocal %251 {approx = true} : vector<8x1xf32> -> vector<8x1xf32>
    %253 = vector.broadcast %252 : vector<8x1xf32> to vector<8x8xf32>
    %254 = arith.mulf %249, %253 : vector<8x8xf32>
    %255 = arith.truncf %254 : vector<8x8xf32> to vector<8x8xbf16>
    %cst_122 = arith.constant dense<0.000000e+00> : vector<8x16xf32>
    %256 = tpu.matmul %255, %240, %cst_122 {dimension_numbers = #tpu.dot_dimension_numbers<[1], [0], [0], [1], [0, 0, 1, 1], [], []>} : vector<8x8xbf16>, vector<8x16xbf16>, vector<8x16xf32> -> vector<8x16xf32>
    %257 = vector.extract_strided_slice %216 {offsets = [0, 32], sizes = [8, 16], strides = [1, 1]} : vector<8x64xbf16> to vector<8x16xbf16>
    %258 = vector.extract_strided_slice %217 {offsets = [0, 32], sizes = [8, 16], strides = [1, 1]} : vector<8x64xbf16> to vector<8x16xbf16>
    %259 = vector.extract_strided_slice %218 {offsets = [0, 32], sizes = [8, 16], strides = [1, 1]} : vector<8x64xbf16> to vector<8x16xbf16>
    %cst_123 = arith.constant dense<0.000000e+00> : vector<8x8xf32>
    %260 = tpu.matmul %257, %258, %cst_123 {dimension_numbers = #tpu.dot_dimension_numbers<[1], [1], [0], [0], [0, 0, 1, 0], [], []>} : vector<8x16xbf16>, vector<8x16xbf16>, vector<8x8xf32> -> vector<8x8xf32>
    %cst_124 = arith.constant 2.500000e-01 : f32
    %261 = vector.broadcast %cst_124 : f32 to vector<8x8xf32>
    %262 = arith.mulf %260, %261 : vector<8x8xf32>
    %263 = arith.addf %262, %15 : vector<8x8xf32>
    %cst_125 = arith.constant dense<0xFF800000> : vector<8xf32>
    %264 = vector.multi_reduction <maximumf>, %263, %cst_125 [1] : vector<8x8xf32> to vector<8xf32>
    %265 = vector.shape_cast %264 : vector<8xf32> to vector<8x1xf32>
    %266 = vector.broadcast %265 : vector<8x1xf32> to vector<8x8xf32>
    %267 = arith.subf %263, %266 : vector<8x8xf32>
    %268 = math.exp %267 : vector<8x8xf32>
    %cst_126 = arith.constant dense<0.000000e+00> : vector<8xf32>
    %269 = vector.multi_reduction <add>, %268, %cst_126 [1] : vector<8x8xf32> to vector<8xf32>
    %270 = vector.shape_cast %269 : vector<8xf32> to vector<8x1xf32>
    %271 = tpu.reciprocal %270 {approx = true} : vector<8x1xf32> -> vector<8x1xf32>
    %272 = vector.broadcast %271 : vector<8x1xf32> to vector<8x8xf32>
    %273 = arith.mulf %268, %272 : vector<8x8xf32>
    %274 = arith.truncf %273 : vector<8x8xf32> to vector<8x8xbf16>
    %cst_127 = arith.constant dense<0.000000e+00> : vector<8x16xf32>
    %275 = tpu.matmul %274, %259, %cst_127 {dimension_numbers = #tpu.dot_dimension_numbers<[1], [0], [0], [1], [0, 0, 1, 1], [], []>} : vector<8x8xbf16>, vector<8x16xbf16>, vector<8x16xf32> -> vector<8x16xf32>
    %276 = vector.extract_strided_slice %216 {offsets = [0, 48], sizes = [8, 16], strides = [1, 1]} : vector<8x64xbf16> to vector<8x16xbf16>
    %277 = vector.extract_strided_slice %217 {offsets = [0, 48], sizes = [8, 16], strides = [1, 1]} : vector<8x64xbf16> to vector<8x16xbf16>
    %278 = vector.extract_strided_slice %218 {offsets = [0, 48], sizes = [8, 16], strides = [1, 1]} : vector<8x64xbf16> to vector<8x16xbf16>
    %cst_128 = arith.constant dense<0.000000e+00> : vector<8x8xf32>
    %279 = tpu.matmul %276, %277, %cst_128 {dimension_numbers = #tpu.dot_dimension_numbers<[1], [1], [0], [0], [0, 0, 1, 0], [], []>} : vector<8x16xbf16>, vector<8x16xbf16>, vector<8x8xf32> -> vector<8x8xf32>
    %cst_129 = arith.constant 2.500000e-01 : f32
    %280 = vector.broadcast %cst_129 : f32 to vector<8x8xf32>
    %281 = arith.mulf %279, %280 : vector<8x8xf32>
    %282 = arith.addf %281, %15 : vector<8x8xf32>
    %cst_130 = arith.constant dense<0xFF800000> : vector<8xf32>
    %283 = vector.multi_reduction <maximumf>, %282, %cst_130 [1] : vector<8x8xf32> to vector<8xf32>
    %284 = vector.shape_cast %283 : vector<8xf32> to vector<8x1xf32>
    %285 = vector.broadcast %284 : vector<8x1xf32> to vector<8x8xf32>
    %286 = arith.subf %282, %285 : vector<8x8xf32>
    %287 = math.exp %286 : vector<8x8xf32>
    %cst_131 = arith.constant dense<0.000000e+00> : vector<8xf32>
    %288 = vector.multi_reduction <add>, %287, %cst_131 [1] : vector<8x8xf32> to vector<8xf32>
    %289 = vector.shape_cast %288 : vector<8xf32> to vector<8x1xf32>
    %290 = tpu.reciprocal %289 {approx = true} : vector<8x1xf32> -> vector<8x1xf32>
    %291 = vector.broadcast %290 : vector<8x1xf32> to vector<8x8xf32>
    %292 = arith.mulf %287, %291 : vector<8x8xf32>
    %293 = arith.truncf %292 : vector<8x8xf32> to vector<8x8xbf16>
    %cst_132 = arith.constant dense<0.000000e+00> : vector<8x16xf32>
    %294 = tpu.matmul %293, %278, %cst_132 {dimension_numbers = #tpu.dot_dimension_numbers<[1], [0], [0], [1], [0, 0, 1, 1], [], []>} : vector<8x8xbf16>, vector<8x16xbf16>, vector<8x16xf32> -> vector<8x16xf32>
    %295 = tpu.concatenate %237, %256, %275, %294 in 1 : vector<8x16xf32>, vector<8x16xf32>, vector<8x16xf32>, vector<8x16xf32> -> vector<8x64xf32>
    %296 = arith.truncf %295 : vector<8x64xf32> to vector<8x64xbf16>
    %c1_133 = arith.constant 1 : index
    %c0_134 = arith.constant 0 : index
    %c0_135 = arith.constant 0 : index
    %297 = vector.load %arg11[%c1_133, %c0_134, %c0_135] : memref<2x64x64xbf16, #tpu.memory_space<vmem>>, vector<1x64x64xbf16>
    %298 = vector.shape_cast %297 : vector<1x64x64xbf16> to vector<64x64xbf16>
    %cst_136 = arith.constant dense<0.000000e+00> : vector<8x64xf32>
    %299 = tpu.matmul %296, %298, %cst_136 {dimension_numbers = #tpu.dot_dimension_numbers<[1], [0], [0], [1], [0, 0, 1, 1], [], []>} : vector<8x64xbf16>, vector<64x64xbf16>, vector<8x64xf32> -> vector<8x64xf32>
    %c1_137 = arith.constant 1 : index
    %c0_138 = arith.constant 0 : index
    %c0_139 = arith.constant 0 : index
    %300 = vector.load %arg12[%c1_137, %c0_138, %c0_139] : memref<2x1x64xf32, #tpu.memory_space<vmem>>, vector<1x1x64xf32>
    %301 = vector.shape_cast %300 : vector<1x1x64xf32> to vector<1x64xf32>
    %302 = vector.broadcast %301 : vector<1x64xf32> to vector<8x64xf32>
    %303 = arith.addf %299, %302 : vector<8x64xf32>
    %304 = arith.addf %193, %303 : vector<8x64xf32>
    %c1_140 = arith.constant 1 : index
    %c0_141 = arith.constant 0 : index
    %c0_142 = arith.constant 0 : index
    %305 = vector.load %arg13[%c1_140, %c0_141, %c0_142] : memref<2x1x64xf32, #tpu.memory_space<vmem>>, vector<1x1x64xf32>
    %306 = vector.shape_cast %305 : vector<1x1x64xf32> to vector<1x64xf32>
    %c1_143 = arith.constant 1 : index
    %c0_144 = arith.constant 0 : index
    %c0_145 = arith.constant 0 : index
    %307 = vector.load %arg14[%c1_143, %c0_144, %c0_145] : memref<2x1x64xf32, #tpu.memory_space<vmem>>, vector<1x1x64xf32>
    %308 = vector.shape_cast %307 : vector<1x1x64xf32> to vector<1x64xf32>
    %cst_146 = arith.constant dense<0.000000e+00> : vector<8xf32>
    %309 = vector.multi_reduction <add>, %304, %cst_146 [1] : vector<8x64xf32> to vector<8xf32>
    %310 = vector.shape_cast %309 : vector<8xf32> to vector<8x1xf32>
    %cst_147 = arith.constant 6.400000e+01 : f32
    %311 = vector.broadcast %cst_147 : f32 to vector<8x1xf32>
    %312 = arith.divf %310, %311 : vector<8x1xf32>
    %313 = vector.broadcast %312 : vector<8x1xf32> to vector<8x64xf32>
    %314 = arith.subf %304, %313 : vector<8x64xf32>
    %315 = arith.mulf %314, %314 : vector<8x64xf32>
    %cst_148 = arith.constant dense<0.000000e+00> : vector<8xf32>
    %316 = vector.multi_reduction <add>, %315, %cst_148 [1] : vector<8x64xf32> to vector<8xf32>
    %317 = vector.shape_cast %316 : vector<8xf32> to vector<8x1xf32>
    %cst_149 = arith.constant 6.400000e+01 : f32
    %318 = vector.broadcast %cst_149 : f32 to vector<8x1xf32>
    %319 = arith.divf %317, %318 : vector<8x1xf32>
    %cst_150 = arith.constant 9.99999974E-6 : f32
    %320 = vector.broadcast %cst_150 : f32 to vector<8x1xf32>
    %321 = arith.addf %319, %320 : vector<8x1xf32>
    %322 = math.rsqrt %321 : vector<8x1xf32>
    %323 = vector.broadcast %322 : vector<8x1xf32> to vector<8x64xf32>
    %324 = arith.mulf %314, %323 : vector<8x64xf32>
    %325 = vector.broadcast %306 : vector<1x64xf32> to vector<8x64xf32>
    %326 = arith.mulf %324, %325 : vector<8x64xf32>
    %327 = vector.broadcast %308 : vector<1x64xf32> to vector<8x64xf32>
    %328 = arith.addf %326, %327 : vector<8x64xf32>
    %329 = arith.truncf %328 : vector<8x64xf32> to vector<8x64xbf16>
    %c1_151 = arith.constant 1 : index
    %c0_152 = arith.constant 0 : index
    %c0_153 = arith.constant 0 : index
    %330 = vector.load %arg17[%c1_151, %c0_152, %c0_153] : memref<2x64x128xbf16, #tpu.memory_space<vmem>>, vector<1x64x128xbf16>
    %331 = vector.shape_cast %330 : vector<1x64x128xbf16> to vector<64x128xbf16>
    %cst_154 = arith.constant dense<0.000000e+00> : vector<8x128xf32>
    %332 = tpu.matmul %329, %331, %cst_154 {dimension_numbers = #tpu.dot_dimension_numbers<[1], [0], [0], [1], [0, 0, 1, 1], [], []>} : vector<8x64xbf16>, vector<64x128xbf16>, vector<8x128xf32> -> vector<8x128xf32>
    %c1_155 = arith.constant 1 : index
    %c0_156 = arith.constant 0 : index
    %c0_157 = arith.constant 0 : index
    %333 = vector.load %arg18[%c1_155, %c0_156, %c0_157] : memref<2x1x128xf32, #tpu.memory_space<vmem>>, vector<1x1x128xf32>
    %334 = vector.shape_cast %333 : vector<1x1x128xf32> to vector<1x128xf32>
    %335 = vector.broadcast %334 : vector<1x128xf32> to vector<8x128xf32>
    %336 = arith.addf %332, %335 : vector<8x128xf32>
    %cst_158 = arith.constant 0.000000e+00 : f32
    %337 = vector.broadcast %cst_158 : f32 to vector<8x128xf32>
    %338 = arith.maximumf %336, %337 : vector<8x128xf32>
    %339 = arith.truncf %338 : vector<8x128xf32> to vector<8x128xbf16>
    %c1_159 = arith.constant 1 : index
    %c0_160 = arith.constant 0 : index
    %c0_161 = arith.constant 0 : index
    %340 = vector.load %arg19[%c1_159, %c0_160, %c0_161] : memref<2x128x64xbf16, #tpu.memory_space<vmem>>, vector<1x128x64xbf16>
    %341 = vector.shape_cast %340 : vector<1x128x64xbf16> to vector<128x64xbf16>
    %cst_162 = arith.constant dense<0.000000e+00> : vector<8x64xf32>
    %342 = tpu.matmul %339, %341, %cst_162 {dimension_numbers = #tpu.dot_dimension_numbers<[1], [0], [0], [1], [0, 0, 1, 1], [], []>} : vector<8x128xbf16>, vector<128x64xbf16>, vector<8x64xf32> -> vector<8x64xf32>
    %c1_163 = arith.constant 1 : index
    %c0_164 = arith.constant 0 : index
    %c0_165 = arith.constant 0 : index
    %343 = vector.load %arg20[%c1_163, %c0_164, %c0_165] : memref<2x1x64xf32, #tpu.memory_space<vmem>>, vector<1x1x64xf32>
    %344 = vector.shape_cast %343 : vector<1x1x64xf32> to vector<1x64xf32>
    %345 = vector.broadcast %344 : vector<1x64xf32> to vector<8x64xf32>
    %346 = arith.addf %342, %345 : vector<8x64xf32>
    %347 = arith.addf %328, %346 : vector<8x64xf32>
    %c1_166 = arith.constant 1 : index
    %c0_167 = arith.constant 0 : index
    %c0_168 = arith.constant 0 : index
    %348 = vector.load %arg15[%c1_166, %c0_167, %c0_168] : memref<2x1x64xf32, #tpu.memory_space<vmem>>, vector<1x1x64xf32>
    %349 = vector.shape_cast %348 : vector<1x1x64xf32> to vector<1x64xf32>
    %c1_169 = arith.constant 1 : index
    %c0_170 = arith.constant 0 : index
    %c0_171 = arith.constant 0 : index
    %350 = vector.load %arg16[%c1_169, %c0_170, %c0_171] : memref<2x1x64xf32, #tpu.memory_space<vmem>>, vector<1x1x64xf32>
    %351 = vector.shape_cast %350 : vector<1x1x64xf32> to vector<1x64xf32>
    %cst_172 = arith.constant dense<0.000000e+00> : vector<8xf32>
    %352 = vector.multi_reduction <add>, %347, %cst_172 [1] : vector<8x64xf32> to vector<8xf32>
    %353 = vector.shape_cast %352 : vector<8xf32> to vector<8x1xf32>
    %cst_173 = arith.constant 6.400000e+01 : f32
    %354 = vector.broadcast %cst_173 : f32 to vector<8x1xf32>
    %355 = arith.divf %353, %354 : vector<8x1xf32>
    %356 = vector.broadcast %355 : vector<8x1xf32> to vector<8x64xf32>
    %357 = arith.subf %347, %356 : vector<8x64xf32>
    %358 = arith.mulf %357, %357 : vector<8x64xf32>
    %cst_174 = arith.constant dense<0.000000e+00> : vector<8xf32>
    %359 = vector.multi_reduction <add>, %358, %cst_174 [1] : vector<8x64xf32> to vector<8xf32>
    %360 = vector.shape_cast %359 : vector<8xf32> to vector<8x1xf32>
    %cst_175 = arith.constant 6.400000e+01 : f32
    %361 = vector.broadcast %cst_175 : f32 to vector<8x1xf32>
    %362 = arith.divf %360, %361 : vector<8x1xf32>
    %cst_176 = arith.constant 9.99999974E-6 : f32
    %363 = vector.broadcast %cst_176 : f32 to vector<8x1xf32>
    %364 = arith.addf %362, %363 : vector<8x1xf32>
    %365 = math.rsqrt %364 : vector<8x1xf32>
    %366 = vector.broadcast %365 : vector<8x1xf32> to vector<8x64xf32>
    %367 = arith.mulf %357, %366 : vector<8x64xf32>
    %368 = vector.broadcast %349 : vector<1x64xf32> to vector<8x64xf32>
    %369 = arith.mulf %367, %368 : vector<8x64xf32>
    %370 = vector.broadcast %351 : vector<1x64xf32> to vector<8x64xf32>
    %371 = arith.addf %369, %370 : vector<8x64xf32>
    %c0_177 = arith.constant 0 : index
    %c0_178 = arith.constant 0 : index
    %372 = vector.load %arg21[%c0_177, %c0_178] : memref<8x64xf32, #tpu.memory_space<vmem>>, vector<8x64xf32>
    tpu.vector_store %arg21[%c0_177, %c0_178], %371 {strides = array<i32>} : memref<8x64xf32, #tpu.memory_space<vmem>>, vector<8x64xf32>,
    return
  }
  func.func @transform_0(%arg0: i32) -> (i32, i32) {
    %c0_i32 = arith.constant 0 : i32
    %c0_i32_0 = arith.constant 0 : i32
    return %arg0, %c0_i32 : i32, i32
  }
  func.func @transform_1(%arg0: i32) -> (i32, i32) {
    %c0_i32 = arith.constant 0 : i32
    %c0_i32_0 = arith.constant 0 : i32
    return %arg0, %c0_i32 : i32, i32
  }
  func.func @transform_2(%arg0: i32) -> (i32, i32) {
    %c0_i32 = arith.constant 0 : i32
    %c0_i32_0 = arith.constant 0 : i32
    %c0_i32_1 = arith.constant 0 : i32
    return %c0_i32, %c0_i32_0 : i32, i32
  }
  func.func @transform_3(%arg0: i32) -> (i32, i32) {
    %c0_i32 = arith.constant 0 : i32
    %c0_i32_0 = arith.constant 0 : i32
    %c0_i32_1 = arith.constant 0 : i32
    return %c0_i32, %c0_i32_0 : i32, i32
  }
  func.func @transform_4(%arg0: i32) -> (i32, i32, i32) {
    %c0_i32 = arith.constant 0 : i32
    %c0_i32_0 = arith.constant 0 : i32
    %c0_i32_1 = arith.constant 0 : i32
    %c0_i32_2 = arith.constant 0 : i32
    return %c0_i32, %c0_i32_0, %c0_i32_1 : i32, i32, i32
  }
  func.func @transform_5(%arg0: i32) -> (i32, i32, i32) {
    %c0_i32 = arith.constant 0 : i32
    %c0_i32_0 = arith.constant 0 : i32
    %c0_i32_1 = arith.constant 0 : i32
    %c0_i32_2 = arith.constant 0 : i32
    return %c0_i32, %c0_i32_0, %c0_i32_1 : i32, i32, i32
  }
  func.func @transform_6(%arg0: i32) -> (i32, i32, i32) {
    %c0_i32 = arith.constant 0 : i32
    %c0_i32_0 = arith.constant 0 : i32
    %c0_i32_1 = arith.constant 0 : i32
    %c0_i32_2 = arith.constant 0 : i32
    return %c0_i32, %c0_i32_0, %c0_i32_1 : i32, i32, i32
  }
  func.func @transform_7(%arg0: i32) -> (i32, i32, i32) {
    %c0_i32 = arith.constant 0 : i32
    %c0_i32_0 = arith.constant 0 : i32
    %c0_i32_1 = arith.constant 0 : i32
    %c0_i32_2 = arith.constant 0 : i32
    return %c0_i32, %c0_i32_0, %c0_i32_1 : i32, i32, i32
  }
  func.func @transform_8(%arg0: i32) -> (i32, i32, i32) {
    %c0_i32 = arith.constant 0 : i32
    %c0_i32_0 = arith.constant 0 : i32
    %c0_i32_1 = arith.constant 0 : i32
    %c0_i32_2 = arith.constant 0 : i32
    return %c0_i32, %c0_i32_0, %c0_i32_1 : i32, i32, i32
  }
  func.func @transform_9(%arg0: i32) -> (i32, i32, i32) {
    %c0_i32 = arith.constant 0 : i32
    %c0_i32_0 = arith.constant 0 : i32
    %c0_i32_1 = arith.constant 0 : i32
    %c0_i32_2 = arith.constant 0 : i32
    return %c0_i32, %c0_i32_0, %c0_i32_1 : i32, i32, i32
  }
  func.func @transform_10(%arg0: i32) -> (i32, i32, i32) {
    %c0_i32 = arith.constant 0 : i32
    %c0_i32_0 = arith.constant 0 : i32
    %c0_i32_1 = arith.constant 0 : i32
    %c0_i32_2 = arith.constant 0 : i32
    return %c0_i32, %c0_i32_0, %c0_i32_1 : i32, i32, i32
  }
  func.func @transform_11(%arg0: i32) -> (i32, i32, i32) {
    %c0_i32 = arith.constant 0 : i32
    %c0_i32_0 = arith.constant 0 : i32
    %c0_i32_1 = arith.constant 0 : i32
    %c0_i32_2 = arith.constant 0 : i32
    return %c0_i32, %c0_i32_0, %c0_i32_1 : i32, i32, i32
  }
  func.func @transform_12(%arg0: i32) -> (i32, i32, i32) {
    %c0_i32 = arith.constant 0 : i32
    %c0_i32_0 = arith.constant 0 : i32
    %c0_i32_1 = arith.constant 0 : i32
    %c0_i32_2 = arith.constant 0 : i32
    return %c0_i32, %c0_i32_0, %c0_i32_1 : i32, i32, i32
  }
  func.func @transform_13(%arg0: i32) -> (i32, i32, i32) {
    %c0_i32 = arith.constant 0 : i32
    %c0_i32_0 = arith.constant 0 : i32
    %c0_i32_1 = arith.constant 0 : i32
    %c0_i32_2 = arith.constant 0 : i32
    return %c0_i32, %c0_i32_0, %c0_i32_1 : i32, i32, i32
  }
  func.func @transform_14(%arg0: i32) -> (i32, i32, i32) {
    %c0_i32 = arith.constant 0 : i32
    %c0_i32_0 = arith.constant 0 : i32
    %c0_i32_1 = arith.constant 0 : i32
    %c0_i32_2 = arith.constant 0 : i32
    return %c0_i32, %c0_i32_0, %c0_i32_1 : i32, i32, i32
  }
  func.func @transform_15(%arg0: i32) -> (i32, i32, i32) {
    %c0_i32 = arith.constant 0 : i32
    %c0_i32_0 = arith.constant 0 : i32
    %c0_i32_1 = arith.constant 0 : i32
    %c0_i32_2 = arith.constant 0 : i32
    return %c0_i32, %c0_i32_0, %c0_i32_1 : i32, i32, i32
  }
  func.func @transform_16(%arg0: i32) -> (i32, i32, i32) {
    %c0_i32 = arith.constant 0 : i32
    %c0_i32_0 = arith.constant 0 : i32
    %c0_i32_1 = arith.constant 0 : i32
    %c0_i32_2 = arith.constant 0 : i32
    return %c0_i32, %c0_i32_0, %c0_i32_1 : i32, i32, i32
  }
  func.func @transform_17(%arg0: i32) -> (i32, i32, i32) {
    %c0_i32 = arith.constant 0 : i32
    %c0_i32_0 = arith.constant 0 : i32
    %c0_i32_1 = arith.constant 0 : i32
    %c0_i32_2 = arith.constant 0 : i32
    return %c0_i32, %c0_i32_0, %c0_i32_1 : i32, i32, i32
  }
  func.func @transform_18(%arg0: i32) -> (i32, i32, i32) {
    %c0_i32 = arith.constant 0 : i32
    %c0_i32_0 = arith.constant 0 : i32
    %c0_i32_1 = arith.constant 0 : i32
    %c0_i32_2 = arith.constant 0 : i32
    return %c0_i32, %c0_i32_0, %c0_i32_1 : i32, i32, i32
  }
  func.func @transform_19(%arg0: i32) -> (i32, i32, i32) {
    %c0_i32 = arith.constant 0 : i32
    %c0_i32_0 = arith.constant 0 : i32
    %c0_i32_1 = arith.constant 0 : i32
    %c0_i32_2 = arith.constant 0 : i32
    return %c0_i32, %c0_i32_0, %c0_i32_1 : i32, i32, i32
  }
  func.func @transform_20(%arg0: i32) -> (i32, i32) {
    %c0_i32 = arith.constant 0 : i32
    %c0_i32_0 = arith.constant 0 : i32
    return %arg0, %c0_i32 : i32, i32
  }
}

</mosaic_0001>

<llo_original>
// kernel: tpu_custom_call.1
$region0: #{tpu_custom_call.1}
  #allocation0 [shape = 'u32[]', space=smem, size = 0x4, offset = 0x4, fixed_abs, tag = 'smem constant byte address 0x4 - core index']
  #allocation1 [shape = 'u32[144,128]{1,0:T(1,128)}', space=vmem, size = 0x12000, scoped, tag = 'internal scratch']
  %s0 = inlined_call_operand.vmem [shape: f32[16,1], index: 0, kind: input, shape index: {}]
  %s1 = inlined_call_operand.vmem [shape: f32[16,64], index: 1, kind: input, shape index: {}]
  %s2 = inlined_call_operand.hbm [shape: f32[1,64], index: 2, kind: input, shape index: {}]
  %s3 = inlined_call_operand.hbm [shape: f32[1,64], index: 3, kind: input, shape index: {}]
  %s4 = inlined_call_operand.vmem [shape: bf16[2,64,64], index: 4, kind: input, shape index: {}]
  %s5 = inlined_call_operand.vmem [shape: f32[2,1,64], index: 5, kind: input, shape index: {}]
  %s6 = inlined_call_operand.vmem [shape: bf16[2,64,64], index: 6, kind: input, shape index: {}]
  %s7 = inlined_call_operand.vmem [shape: f32[2,1,64], index: 7, kind: input, shape index: {}]
  %s8 = inlined_call_operand.vmem [shape: bf16[2,64,64], index: 8, kind: input, shape index: {}]
  %s9 = inlined_call_operand.vmem [shape: f32[2,1,64], index: 9, kind: input, shape index: {}]
  %s10 = inlined_call_operand.hbm [shape: bf16[2,64,64], index: 10, kind: input, shape index: {}]
  %s11 = inlined_call_operand.vmem [shape: f32[2,1,64], index: 11, kind: input, shape index: {}]
  %s12 = inlined_call_operand.vmem [shape: f32[2,1,64], index: 12, kind: input, shape index: {}]
  %s13 = inlined_call_operand.vmem [shape: f32[2,1,64], index: 13, kind: input, shape index: {}]
  %s14 = inlined_call_operand.vmem [shape: f32[2,1,64], index: 14, kind: input, shape index: {}]
  %s15 = inlined_call_operand.vmem [shape: f32[2,1,64], index: 15, kind: input, shape index: {}]
  %s16 = inlined_call_operand.hbm [shape: bf16[2,64,128], index: 16, kind: input, shape index: {}]
  %s17 = inlined_call_operand.vmem [shape: f32[2,1,128], index: 17, kind: input, shape index: {}]
  %s18 = inlined_call_operand.vmem [shape: bf16[2,128,64], index: 18, kind: input, shape index: {}]
  %s19 = inlined_call_operand.vmem [shape: f32[2,1,64], index: 19, kind: input, shape index: {}]
  %s20 = inlined_call_operand.hbm [shape: f32[16,64], index: 20, kind: output, shape index: {}]
  %s21 = sld [smem:[#allocation0]]
  $region129: #{tpu_custom_call.1} parent=0
    _
  %s23 = ssub.s32 1, %s21
  %s24 = scalar_select 0, %s23, %s21
  $region1: #{tpu_custom_call.1} parent=0
    #allocation2 [shape = 'u8[512]{0}', space=vmem, size = 0x400, scoped, tag = 'input window, operand 2, single buffered']
    #allocation3 [shape = 's32[2]{0}', space=sflag, size = 0x8, scoped, tag = 'scoped memory for tpu_custom_call.1']
    #allocation4 [shape = 's32[2]{0}', space=sflag, size = 0x8, scoped, tag = 'scoped memory for tpu_custom_call.1']
    #allocation5 [shape = 'u8[512]{0}', space=vmem, size = 0x400, scoped, tag = 'input window, operand 3, single buffered']
    #allocation6 [shape = 's32[1]{0}', space=sflag, size = 0x4, scoped, tag = 'scoped memory for tpu_custom_call.1']
    #allocation7 [shape = 'u8[32768]{0}', space=vmem, size = 0x8000, scoped, tag = 'input window, operand 10, single buffered']
    #allocation8 [shape = 'u8[32768]{0}', space=vmem, size = 0x8000, scoped, tag = 'input window, operand 16, single buffered']
    #allocation9 [shape = 's32[1]{0}', space=sflag, size = 0x4, scoped, tag = 'scoped memory for tpu_custom_call.1']
    #allocation10 [shape = 'u8[8192]{0}', space=vmem, size = 0x2000, scoped, tag = 'output window, operand 0']
    %25 = vsyncpa [#allocation3], 0
    %26 = vsyncpa [#allocation6], 0
    %27 = vsyncpa [#allocation9], 0
    %28 = vsyncpa [#allocation4], 0
    %s29 = scalar_lea.sflag [#allocation4], 1
    %30 = vsyncpa %s29, 0
    loop: start=0, step=1, limit=4
    $region2: #{tpu_custom_call.1} parent=1 // loop_pre_header
      _
    $region3: #{tpu_custom_call.1} parent=1 // loop_header
      %s32 = sphi 0, %s36
      %p33 = scmp.ge.s32.totalorder %s32, 4
      %s42 = sphi 0, %s44
      %s45 = sphi 0, %s42
      %s46 = sphi 0, %s45
      %s62 = sphi 0, %s46
      %s68 = sphi 0, %s70
      %s71 = sphi 0, %s68
      %s72 = sphi 0, %s71
      %s88 = sphi 0, %s72
      %s92 = sphi 0, %s92
      %s94 = sphi 0, %s92
      %s95 = sphi 0, %s94
      %s109 = sphi 0, %s95
      %s113 = sphi 0, %s113
      %s115 = sphi 0, %s113
      %s116 = sphi 0, %s115
      %s130 = sphi 0, %s116
      %s134 = sphi 0, %s134
      %s136 = sphi 0, %s134
      %s137 = sphi 0, %s136
      %s151 = sphi 0, %s137
      %s155 = sphi 0, %s155
      %s157 = sphi 0, %s155
      %s158 = sphi 0, %s157
      %s172 = sphi 0, %s158
      %s176 = sphi 0, %s176
      %s178 = sphi 0, %s176
      %s179 = sphi 0, %s178
      %s193 = sphi 0, %s179
      %s197 = sphi 0, %s197
      %s199 = sphi 0, %s197
      %s200 = sphi 0, %s199
      %s214 = sphi 0, %s200
      %s218 = sphi 0, %s218
      %s220 = sphi 0, %s218
      %s221 = sphi 0, %s220
      %s235 = sphi 0, %s221
      %s239 = sphi 0, %s239
      %s241 = sphi 0, %s239
      %s242 = sphi 0, %s241
      %s256 = sphi 0, %s242
      %s260 = sphi 0, %s260
      %s262 = sphi 0, %s260
      %s263 = sphi 0, %s262
      %s277 = sphi 0, %s263
      %s281 = sphi 0, %s281
      %s283 = sphi 0, %s281
      %s284 = sphi 0, %s283
      %s298 = sphi 0, %s284
      %s302 = sphi 0, %s302
      %s304 = sphi 0, %s302
      %s305 = sphi 0, %s304
      %s319 = sphi 0, %s305
      %s323 = sphi 0, %s323
      %s325 = sphi 0, %s323
      %s326 = sphi 0, %s325
      %s340 = sphi 0, %s326
      %s344 = sphi 0, %s344
      %s346 = sphi 0, %s344
      %s347 = sphi 0, %s346
      %s361 = sphi 0, %s347
      %s365 = sphi 0, %s365
      %s367 = sphi 0, %s365
      %s368 = sphi 0, %s367
      %s382 = sphi 0, %s368
      %s386 = sphi 0, %s386
      %s388 = sphi 0, %s386
      %s389 = sphi 0, %s388
      %s403 = sphi 0, %s389
      %s407 = sphi 0, %s407
      %s409 = sphi 0, %s407
      %s410 = sphi 0, %s409
      %s424 = sphi 0, %s410
      %s428 = sphi 0, %s428
      %s430 = sphi 0, %s428
      %s431 = sphi 0, %s430
      %s445 = sphi 0, %s431
      %s449 = sphi 0, %s449
      %s451 = sphi 0, %s449
      %s452 = sphi 0, %s451
      %s466 = sphi 0, %s452
      %s472 = sphi 0, %s474
      %s475 = sphi 0, %s472
      %s476 = sphi 0, %s475
      %s492 = sphi 0, %s476
    $region4: #{tpu_custom_call.1} parent=1 // loop_header_branch
      %35 = sbr.rel (%p33) target = $region8
    $region5: #{tpu_custom_call.1} parent=1 // loop_body
      %s37 = ssub.s32 %s32, 1
      %s38 = ssub.s32 %s32, 2
      %s39 = sadd.s32 %s32, 1
      %s40 = ssub.s32 %s32, %s39
      %p41 = scmp.eq.s32.totalorder %s40, 0
      %s43 = sadd.s32 %s42, 1
      %s44 = scalar_select %p41, %s42, %s43
      %p47 = pneg %p41
      %p48 = scmp.eq.s32.totalorder %s32, 1
      %p49 = por %p47, %p48
      %p50 = scmp.ne.s32.totalorder %s42, %s45
      %p51 = scmp.eq.s32.totalorder %s32, 0
      %p52 = por %p50, %p51
      %p53 = scmp.ne.s32.totalorder %s42, %s45
      %p54 = scmp.eq.s32.totalorder %s37, 1
      %p55 = por %p53, %p54
      %p56 = scmp.ne.s32.totalorder %s45, %s46
      %p57 = scmp.eq.s32.totalorder %s37, 0
      %p58 = por %p56, %p57
      %p59 = scmp.ne.s32.totalorder %s45, %s46
      %p60 = scmp.eq.s32.totalorder %s38, 1
      %p61 = por %p59, %p60
      %p63 = scmp.ne.s32.totalorder %s46, %s62
      %p64 = scmp.eq.s32.totalorder %s38, 0
      %p65 = por %p63, %p64
      %s66 = ssub.s32 %s32, %s39
      %p67 = scmp.eq.s32.totalorder %s66, 0
      %s69 = sadd.s32 %s68, 1
      %s70 = scalar_select %p67, %s68, %s69
      %p73 = pneg %p67
      %p74 = scmp.eq.s32.totalorder %s32, 1
      %p75 = por %p73, %p74
      %p76 = scmp.ne.s32.totalorder %s68, %s71
      %p77 = scmp.eq.s32.totalorder %s32, 0
      %p78 = por %p76, %p77
      %p79 = scmp.ne.s32.totalorder %s68, %s71
      %p80 = scmp.eq.s32.totalorder %s37, 1
      %p81 = por %p79, %p80
      %p82 = scmp.ne.s32.totalorder %s71, %s72
      %p83 = scmp.eq.s32.totalorder %s37, 0
      %p84 = por %p82, %p83
      %p85 = scmp.ne.s32.totalorder %s71, %s72
      %p86 = scmp.eq.s32.totalorder %s38, 1
      %p87 = por %p85, %p86
      %p89 = scmp.ne.s32.totalorder %s72, %s88
      %p90 = scmp.eq.s32.totalorder %s38, 0
      %p91 = por %p89, %p90
      %s93 = sadd.s32 %s92, 1
      %p96 = scmp.eq.s32.totalorder %s32, 1
      %p97 = scmp.ne.s32.totalorder %s92, %s94
      %p98 = scmp.eq.s32.totalorder %s32, 0
      %p99 = por %p97, %p98
      %p100 = scmp.ne.s32.totalorder %s92, %s94
      %p101 = scmp.eq.s32.totalorder %s37, 1
      %p102 = por %p100, %p101
      %p103 = scmp.ne.s32.totalorder %s94, %s95
      %p104 = scmp.eq.s32.totalorder %s37, 0
      %p105 = por %p103, %p104
      %p106 = scmp.ne.s32.totalorder %s94, %s95
      %p107 = scmp.eq.s32.totalorder %s38, 1
      %p108 = por %p106, %p107
      %p110 = scmp.ne.s32.totalorder %s95, %s109
      %p111 = scmp.eq.s32.totalorder %s38, 0
      %p112 = por %p110, %p111
      %s114 = sadd.s32 %s113, 1
      %p117 = scmp.eq.s32.totalorder %s32, 1
      %p118 = scmp.ne.s32.totalorder %s113, %s115
      %p119 = scmp.eq.s32.totalorder %s32, 0
      %p120 = por %p118, %p119
      %p121 = scmp.ne.s32.totalorder %s113, %s115
      %p122 = scmp.eq.s32.totalorder %s37, 1
      %p123 = por %p121, %p122
      %p124 = scmp.ne.s32.totalorder %s115, %s116
      %p125 = scmp.eq.s32.totalorder %s37, 0
      %p126 = por %p124, %p125
      %p127 = scmp.ne.s32.totalorder %s115, %s116
      %p128 = scmp.eq.s32.totalorder %s38, 1
      %p129 = por %p127, %p128
      %p131 = scmp.ne.s32.totalorder %s116, %s130
      %p132 = scmp.eq.s32.totalorder %s38, 0
      %p133 = por %p131, %p132
      %s135 = sadd.s32 %s134, 1
      %p138 = scmp.eq.s32.totalorder %s32, 1
      %p139 = scmp.ne.s32.totalorder %s134, %s136
      %p140 = scmp.eq.s32.totalorder %s32, 0
      %p141 = por %p139, %p140
      %p142 = scmp.ne.s32.totalorder %s134, %s136
      %p143 = scmp.eq.s32.totalorder %s37, 1
      %p144 = por %p142, %p143
      %p145 = scmp.ne.s32.totalorder %s136, %s137
      %p146 = scmp.eq.s32.totalorder %s37, 0
      %p147 = por %p145, %p146
      %p148 = scmp.ne.s32.totalorder %s136, %s137
      %p149 = scmp.eq.s32.totalorder %s38, 1
      %p150 = por %p148, %p149
      %p152 = scmp.ne.s32.totalorder %s137, %s151
      %p153 = scmp.eq.s32.totalorder %s38, 0
      %p154 = por %p152, %p153
      %s156 = sadd.s32 %s155, 1
      %p159 = scmp.eq.s32.totalorder %s32, 1
      %p160 = scmp.ne.s32.totalorder %s155, %s157
      %p161 = scmp.eq.s32.totalorder %s32, 0
      %p162 = por %p160, %p161
      %p163 = scmp.ne.s32.totalorder %s155, %s157
      %p164 = scmp.eq.s32.totalorder %s37, 1
      %p165 = por %p163, %p164
      %p166 = scmp.ne.s32.totalorder %s157, %s158
      %p167 = scmp.eq.s32.totalorder %s37, 0
      %p168 = por %p166, %p167
      %p169 = scmp.ne.s32.totalorder %s157, %s158
      %p170 = scmp.eq.s32.totalorder %s38, 1
      %p171 = por %p169, %p170
      %p173 = scmp.ne.s32.totalorder %s158, %s172
      %p174 = scmp.eq.s32.totalorder %s38, 0
      %p175 = por %p173, %p174
      %s177 = sadd.s32 %s176, 1
      %p180 = scmp.eq.s32.totalorder %s32, 1
      %p181 = scmp.ne.s32.totalorder %s176, %s178
      %p182 = scmp.eq.s32.totalorder %s32, 0
      %p183 = por %p181, %p182
      %p184 = scmp.ne.s32.totalorder %s176, %s178
      %p185 = scmp.eq.s32.totalorder %s37, 1
      %p186 = por %p184, %p185
      %p187 = scmp.ne.s32.totalorder %s178, %s179
      %p188 = scmp.eq.s32.totalorder %s37, 0
      %p189 = por %p187, %p188
      %p190 = scmp.ne.s32.totalorder %s178, %s179
      %p191 = scmp.eq.s32.totalorder %s38, 1
      %p192 = por %p190, %p191
      %p194 = scmp.ne.s32.totalorder %s179, %s193
      %p195 = scmp.eq.s32.totalorder %s38, 0
      %p196 = por %p194, %p195
      %s198 = sadd.s32 %s197, 1
      %p201 = scmp.eq.s32.totalorder %s32, 1
      %p202 = scmp.ne.s32.totalorder %s197, %s199
      %p203 = scmp.eq.s32.totalorder %s32, 0
      %p204 = por %p202, %p203
      %p205 = scmp.ne.s32.totalorder %s197, %s199
      %p206 = scmp.eq.s32.totalorder %s37, 1
      %p207 = por %p205, %p206
      %p208 = scmp.ne.s32.totalorder %s199, %s200
      %p209 = scmp.eq.s32.totalorder %s37, 0
      %p210 = por %p208, %p209
      %p211 = scmp.ne.s32.totalorder %s199, %s200
      %p212 = scmp.eq.s32.totalorder %s38, 1
      %p213 = por %p211, %p212
      %p215 = scmp.ne.s32.totalorder %s200, %s214
      %p216 = scmp.eq.s32.totalorder %s38, 0
      %p217 = por %p215, %p216
      %s219 = sadd.s32 %s218, 1
      %p222 = scmp.eq.s32.totalorder %s32, 1
      %p223 = scmp.ne.s32.totalorder %s218, %s220
      %p224 = scmp.eq.s32.totalorder %s32, 0
      %p225 = por %p223, %p224
      %p226 = scmp.ne.s32.totalorder %s218, %s220
      %p227 = scmp.eq.s32.totalorder %s37, 1
      %p228 = por %p226, %p227
      %p229 = scmp.ne.s32.totalorder %s220, %s221
      %p230 = scmp.eq.s32.totalorder %s37, 0
      %p231 = por %p229, %p230
      %p232 = scmp.ne.s32.totalorder %s220, %s221
      %p233 = scmp.eq.s32.totalorder %s38, 1
      %p234 = por %p232, %p233
      %p236 = scmp.ne.s32.totalorder %s221, %s235
      %p237 = scmp.eq.s32.totalorder %s38, 0
      %p238 = por %p236, %p237
      %s240 = sadd.s32 %s239, 1
      %p243 = scmp.eq.s32.totalorder %s32, 1
      %p244 = scmp.ne.s32.totalorder %s239, %s241
      %p245 = scmp.eq.s32.totalorder %s32, 0
      %p246 = por %p244, %p245
      %p247 = scmp.ne.s32.totalorder %s239, %s241
      %p248 = scmp.eq.s32.totalorder %s37, 1
      %p249 = por %p247, %p248
      %p250 = scmp.ne.s32.totalorder %s241, %s242
      %p251 = scmp.eq.s32.totalorder %s37, 0
      %p252 = por %p250, %p251
      %p253 = scmp.ne.s32.totalorder %s241, %s242
      %p254 = scmp.eq.s32.totalorder %s38, 1
      %p255 = por %p253, %p254
      %p257 = scmp.ne.s32.totalorder %s242, %s256
      %p258 = scmp.eq.s32.totalorder %s38, 0
      %p259 = por %p257, %p258
      %s261 = sadd.s32 %s260, 1
      %p264 = scmp.eq.s32.totalorder %s32, 1
      %p265 = scmp.ne.s32.totalorder %s260, %s262
      %p266 = scmp.eq.s32.totalorder %s32, 0
      %p267 = por %p265, %p266
      %p268 = scmp.ne.s32.totalorder %s260, %s262
      %p269 = scmp.eq.s32.totalorder %s37, 1
      %p270 = por %p268, %p269
      %p271 = scmp.ne.s32.totalorder %s262, %s263
      %p272 = scmp.eq.s32.totalorder %s37, 0
      %p273 = por %p271, %p272
      %p274 = scmp.ne.s32.totalorder %s262, %s263
      %p275 = scmp.eq.s32.totalorder %s38, 1
      %p276 = por %p274, %p275
      %p278 = scmp.ne.s32.totalorder %s263, %s277
      %p279 = scmp.eq.s32.totalorder %s38, 0
      %p280 = por %p278, %p279
      %s282 = sadd.s32 %s281, 1
      %p285 = scmp.eq.s32.totalorder %s32, 1
      %p286 = scmp.ne.s32.totalorder %s281, %s283
      %p287 = scmp.eq.s32.totalorder %s32, 0
      %p288 = por %p286, %p287
      %p289 = scmp.ne.s32.totalorder %s281, %s283
      %p290 = scmp.eq.s32.totalorder %s37, 1
      %p291 = por %p289, %p290
      %p292 = scmp.ne.s32.totalorder %s283, %s284
      %p293 = scmp.eq.s32.totalorder %s37, 0
      %p294 = por %p292, %p293
      %p295 = scmp.ne.s32.totalorder %s283, %s284
      %p296 = scmp.eq.s32.totalorder %s38, 1
      %p297 = por %p295, %p296
      %p299 = scmp.ne.s32.totalorder %s284, %s298
      %p300 = scmp.eq.s32.totalorder %s38, 0
      %p301 = por %p299, %p300
      %s303 = sadd.s32 %s302, 1
      %p306 = scmp.eq.s32.totalorder %s32, 1
      %p307 = scmp.ne.s32.totalorder %s302, %s304
      %p308 = scmp.eq.s32.totalorder %s32, 0
      %p309 = por %p307, %p308
      %p310 = scmp.ne.s32.totalorder %s302, %s304
      %p311 = scmp.eq.s32.totalorder %s37, 1
      %p312 = por %p310, %p311
      %p313 = scmp.ne.s32.totalorder %s304, %s305
      %p314 = scmp.eq.s32.totalorder %s37, 0
      %p315 = por %p313, %p314
      %p316 = scmp.ne.s32.totalorder %s304, %s305
      %p317 = scmp.eq.s32.totalorder %s38, 1
      %p318 = por %p316, %p317
      %p320 = scmp.ne.s32.totalorder %s305, %s319
      %p321 = scmp.eq.s32.totalorder %s38, 0
      %p322 = por %p320, %p321
      %s324 = sadd.s32 %s323, 1
      %p327 = scmp.eq.s32.totalorder %s32, 1
      %p328 = scmp.ne.s32.totalorder %s323, %s325
      %p329 = scmp.eq.s32.totalorder %s32, 0
      %p330 = por %p328, %p329
      %p331 = scmp.ne.s32.totalorder %s323, %s325
      %p332 = scmp.eq.s32.totalorder %s37, 1
      %p333 = por %p331, %p332
      %p334 = scmp.ne.s32.totalorder %s325, %s326
      %p335 = scmp.eq.s32.totalorder %s37, 0
      %p336 = por %p334, %p335
      %p337 = scmp.ne.s32.totalorder %s325, %s326
      %p338 = scmp.eq.s32.totalorder %s38, 1
      %p339 = por %p337, %p338
      %p341 = scmp.ne.s32.totalorder %s326, %s340
      %p342 = scmp.eq.s32.totalorder %s38, 0
      %p343 = por %p341, %p342
      %s345 = sadd.s32 %s344, 1
      %p348 = scmp.eq.s32.totalorder %s32, 1
      %p349 = scmp.ne.s32.totalorder %s344, %s346
      %p350 = scmp.eq.s32.totalorder %s32, 0
      %p351 = por %p349, %p350
      %p352 = scmp.ne.s32.totalorder %s344, %s346
      %p353 = scmp.eq.s32.totalorder %s37, 1
      %p354 = por %p352, %p353
      %p355 = scmp.ne.s32.totalorder %s346, %s347
      %p356 = scmp.eq.s32.totalorder %s37, 0
      %p357 = por %p355, %p356
      %p358 = scmp.ne.s32.totalorder %s346, %s347
      %p359 = scmp.eq.s32.totalorder %s38, 1
      %p360 = por %p358, %p359
      %p362 = scmp.ne.s32.totalorder %s347, %s361
      %p363 = scmp.eq.s32.totalorder %s38, 0
      %p364 = por %p362, %p363
      %s366 = sadd.s32 %s365, 1
      %p369 = scmp.eq.s32.totalorder %s32, 1
      %p370 = scmp.ne.s32.totalorder %s365, %s367
      %p371 = scmp.eq.s32.totalorder %s32, 0
      %p372 = por %p370, %p371
      %p373 = scmp.ne.s32.totalorder %s365, %s367
      %p374 = scmp.eq.s32.totalorder %s37, 1
      %p375 = por %p373, %p374
      %p376 = scmp.ne.s32.totalorder %s367, %s368
      %p377 = scmp.eq.s32.totalorder %s37, 0
      %p378 = por %p376, %p377
      %p379 = scmp.ne.s32.totalorder %s367, %s368
      %p380 = scmp.eq.s32.totalorder %s38, 1
      %p381 = por %p379, %p380
      %p383 = scmp.ne.s32.totalorder %s368, %s382
      %p384 = scmp.eq.s32.totalorder %s38, 0
      %p385 = por %p383, %p384
      %s387 = sadd.s32 %s386, 1
      %p390 = scmp.eq.s32.totalorder %s32, 1
      %p391 = scmp.ne.s32.totalorder %s386, %s388
      %p392 = scmp.eq.s32.totalorder %s32, 0
      %p393 = por %p391, %p392
      %p394 = scmp.ne.s32.totalorder %s386, %s388
      %p395 = scmp.eq.s32.totalorder %s37, 1
      %p396 = por %p394, %p395
      %p397 = scmp.ne.s32.totalorder %s388, %s389
      %p398 = scmp.eq.s32.totalorder %s37, 0
      %p399 = por %p397, %p398
      %p400 = scmp.ne.s32.totalorder %s388, %s389
      %p401 = scmp.eq.s32.totalorder %s38, 1
      %p402 = por %p400, %p401
      %p404 = scmp.ne.s32.totalorder %s389, %s403
      %p405 = scmp.eq.s32.totalorder %s38, 0
      %p406 = por %p404, %p405
      %s408 = sadd.s32 %s407, 1
      %p411 = scmp.eq.s32.totalorder %s32, 1
      %p412 = scmp.ne.s32.totalorder %s407, %s409
      %p413 = scmp.eq.s32.totalorder %s32, 0
      %p414 = por %p412, %p413
      %p415 = scmp.ne.s32.totalorder %s407, %s409
      %p416 = scmp.eq.s32.totalorder %s37, 1
      %p417 = por %p415, %p416
      %p418 = scmp.ne.s32.totalorder %s409, %s410
      %p419 = scmp.eq.s32.totalorder %s37, 0
      %p420 = por %p418, %p419
      %p421 = scmp.ne.s32.totalorder %s409, %s410
      %p422 = scmp.eq.s32.totalorder %s38, 1
      %p423 = por %p421, %p422
      %p425 = scmp.ne.s32.totalorder %s410, %s424
      %p426 = scmp.eq.s32.totalorder %s38, 0
      %p427 = por %p425, %p426
      %s429 = sadd.s32 %s428, 1
      %p432 = scmp.eq.s32.totalorder %s32, 1
      %p433 = scmp.ne.s32.totalorder %s428, %s430
      %p434 = scmp.eq.s32.totalorder %s32, 0
      %p435 = por %p433, %p434
      %p436 = scmp.ne.s32.totalorder %s428, %s430
      %p437 = scmp.eq.s32.totalorder %s37, 1
      %p438 = por %p436, %p437
      %p439 = scmp.ne.s32.totalorder %s430, %s431
      %p440 = scmp.eq.s32.totalorder %s37, 0
      %p441 = por %p439, %p440
      %p442 = scmp.ne.s32.totalorder %s430, %s431
      %p443 = scmp.eq.s32.totalorder %s38, 1
      %p444 = por %p442, %p443
      %p446 = scmp.ne.s32.totalorder %s431, %s445
      %p447 = scmp.eq.s32.totalorder %s38, 0
      %p448 = por %p446, %p447
      %s450 = sadd.s32 %s449, 1
      %p453 = scmp.eq.s32.totalorder %s32, 1
      %p454 = scmp.ne.s32.totalorder %s449, %s451
      %p455 = scmp.eq.s32.totalorder %s32, 0
      %p456 = por %p454, %p455
      %p457 = scmp.ne.s32.totalorder %s449, %s451
      %p458 = scmp.eq.s32.totalorder %s37, 1
      %p459 = por %p457, %p458
      %p460 = scmp.ne.s32.totalorder %s451, %s452
      %p461 = scmp.eq.s32.totalorder %s37, 0
      %p462 = por %p460, %p461
      %p463 = scmp.ne.s32.totalorder %s451, %s452
      %p464 = scmp.eq.s32.totalorder %s38, 1
      %p465 = por %p463, %p464
      %p467 = scmp.ne.s32.totalorder %s452, %s466
      %p468 = scmp.eq.s32.totalorder %s38, 0
      %p469 = por %p467, %p468
      %s470 = ssub.s32 %s32, %s39
      %p471 = scmp.eq.s32.totalorder %s470, 0
      %s473 = sadd.s32 %s472, 1
      %s474 = scalar_select %p471, %s472, %s473
      %p477 = pneg %p471
      %p478 = scmp.eq.s32.totalorder %s32, 1
      %p479 = por %p477, %p478
      %p480 = scmp.ne.s32.totalorder %s472, %s475
      %p481 = scmp.eq.s32.totalorder %s32, 0
      %p482 = por %p480, %p481
      %p483 = scmp.ne.s32.totalorder %s472, %s475
      %p484 = scmp.eq.s32.totalorder %s37, 1
      %p485 = por %p483, %p484
      %p486 = scmp.ne.s32.totalorder %s475, %s476
      %p487 = scmp.eq.s32.totalorder %s37, 0
      %p488 = por %p486, %p487
      %p489 = scmp.ne.s32.totalorder %s475, %s476
      %p490 = scmp.eq.s32.totalorder %s38, 1
      %p491 = por %p489, %p490
      %p493 = scmp.ne.s32.totalorder %s476, %s492
      %p494 = scmp.eq.s32.totalorder %s38, 0
      %p495 = por %p493, %p494
      %p496 = scmp.le.s32.totalorder 1, %s32
      %p497 = scmp.lt.s32.totalorder %s32, 3
      %p498 = pnand %p496, %p497
      %p499 = pneg %p498
      // Predicated region
      $region9: #{tpu_custom_call.1} parent=5 // pred_check
        _
      $region10: #{tpu_custom_call.1} parent=5 // pred_check_branch
        %501 = sbr.rel (%p498) target = $region12
      $region11: #{tpu_custom_call.1} parent=5 // pred_region
        %s502 = ssub.s32 %s32, 1
        // Predicated region
        $region13: #{tpu_custom_call.1} parent=11 // pred_check
          %p503 = pneg %p105
        $region14: #{tpu_custom_call.1} parent=11 // pred_check_branch
          %505 = sbr.rel (%p503) target = $region16
        $region15: #{tpu_custom_call.1} parent=11 // pred_region
          %s507 = ssub.s32 16, 16
          %508 = vsyncadd [#allocation3], %s507
          %s510 = sshll.u32 [#allocation2], 4
          %s511 = int_to_ptr.vmem [resolvable:$true] %s510
          %513 = dma.hbm_to_vmem [thread:$0]  %s2, 16, %s511, [#allocation3]
        $region16: #{tpu_custom_call.1} parent=11 // pred_fallthru
          _
        // Predicated region
        $region17: #{tpu_custom_call.1} parent=11 // pred_check
          %p514 = pneg %p126
        $region18: #{tpu_custom_call.1} parent=11 // pred_check_branch
          %516 = sbr.rel (%p514) target = $region20
        $region19: #{tpu_custom_call.1} parent=11 // pred_region
          %s518 = ssub.s32 16, 16
          %519 = vsyncadd [#allocation6], %s518
          %s521 = sshll.u32 [#allocation5], 4
          %s522 = int_to_ptr.vmem [resolvable:$true] %s521
          %524 = dma.hbm_to_vmem [thread:$0]  %s3, 16, %s522, [#allocation6]
        $region20: #{tpu_custom_call.1} parent=11 // pred_fallthru
          _
        // Predicated region
        $region21: #{tpu_custom_call.1} parent=11 // pred_check
          %p525 = pneg %p147
        $region22: #{tpu_custom_call.1} parent=11 // pred_check_branch
          %527 = sbr.rel (%p525) target = $region24
        $region23: #{tpu_custom_call.1} parent=11 // pred_region
          _
        $region24: #{tpu_custom_call.1} parent=11 // pred_fallthru
          _
        // Predicated region
        $region25: #{tpu_custom_call.1} parent=11 // pred_check
          %p528 = pneg %p168
        $region26: #{tpu_custom_call.1} parent=11 // pred_check_branch
          %530 = sbr.rel (%p528) target = $region28
        $region27: #{tpu_custom_call.1} parent=11 // pred_region
          _
        $region28: #{tpu_custom_call.1} parent=11 // pred_fallthru
          _
        // Predicated region
        $region29: #{tpu_custom_call.1} parent=11 // pred_check
          %p531 = pneg %p189
        $region30: #{tpu_custom_call.1} parent=11 // pred_check_branch
          %533 = sbr.rel (%p531) target = $region32
        $region31: #{tpu_custom_call.1} parent=11 // pred_region
          _
        $region32: #{tpu_custom_call.1} parent=11 // pred_fallthru
          _
        // Predicated region
        $region33: #{tpu_custom_call.1} parent=11 // pred_check
          %p534 = pneg %p210
        $region34: #{tpu_custom_call.1} parent=11 // pred_check_branch
          %536 = sbr.rel (%p534) target = $region36
        $region35: #{tpu_custom_call.1} parent=11 // pred_region
          _
        $region36: #{tpu_custom_call.1} parent=11 // pred_fallthru
          _
        // Predicated region
        $region37: #{tpu_custom_call.1} parent=11 // pred_check
          %p537 = pneg %p231
        $region38: #{tpu_custom_call.1} parent=11 // pred_check_branch
          %539 = sbr.rel (%p537) target = $region40
        $region39: #{tpu_custom_call.1} parent=11 // pred_region
          _
        $region40: #{tpu_custom_call.1} parent=11 // pred_fallthru
          _
        // Predicated region
        $region41: #{tpu_custom_call.1} parent=11 // pred_check
          %p540 = pneg %p252
        $region42: #{tpu_custom_call.1} parent=11 // pred_check_branch
          %542 = sbr.rel (%p540) target = $region44
        $region43: #{tpu_custom_call.1} parent=11 // pred_region
          _
        $region44: #{tpu_custom_call.1} parent=11 // pred_fallthru
          _
        // Predicated region
        $region45: #{tpu_custom_call.1} parent=11 // pred_check
          %p543 = pneg %p273
        $region46: #{tpu_custom_call.1} parent=11 // pred_check_branch
          %545 = sbr.rel (%p543) target = $region48
        $region47: #{tpu_custom_call.1} parent=11 // pred_region
          %s547 = ssub.s32 1024, 1024
          %548 = vsyncadd [#allocation6], %s547
          %s549 = sshll.u32 [#allocation7], 4
          %s550 = int_to_ptr.vmem [resolvable:$true] %s549
          %555 = dma.hbm_to_vmem [thread:$0]  %s10, 1024, %s550, [#allocation6], 64, 64, 4
        $region48: #{tpu_custom_call.1} parent=11 // pred_fallthru
          _
        // Predicated region
        $region49: #{tpu_custom_call.1} parent=11 // pred_check
          %p556 = pneg %p294
        $region50: #{tpu_custom_call.1} parent=11 // pred_check_branch
          %558 = sbr.rel (%p556) target = $region52
        $region51: #{tpu_custom_call.1} parent=11 // pred_region
          _
        $region52: #{tpu_custom_call.1} parent=11 // pred_fallthru
          _
        // Predicated region
        $region53: #{tpu_custom_call.1} parent=11 // pred_check
          %p559 = pneg %p315
        $region54: #{tpu_custom_call.1} parent=11 // pred_check_branch
          %561 = sbr.rel (%p559) target = $region56
        $region55: #{tpu_custom_call.1} parent=11 // pred_region
          _
        $region56: #{tpu_custom_call.1} parent=11 // pred_fallthru
          _
        // Predicated region
        $region57: #{tpu_custom_call.1} parent=11 // pred_check
          %p562 = pneg %p336
        $region58: #{tpu_custom_call.1} parent=11 // pred_check_branch
          %564 = sbr.rel (%p562) target = $region60
        $region59: #{tpu_custom_call.1} parent=11 // pred_region
          _
        $region60: #{tpu_custom_call.1} parent=11 // pred_fallthru
          _
        // Predicated region
        $region61: #{tpu_custom_call.1} parent=11 // pred_check
          %p565 = pneg %p357
        $region62: #{tpu_custom_call.1} parent=11 // pred_check_branch
          %567 = sbr.rel (%p565) target = $region64
        $region63: #{tpu_custom_call.1} parent=11 // pred_region
          _
        $region64: #{tpu_custom_call.1} parent=11 // pred_fallthru
          _
        // Predicated region
        $region65: #{tpu_custom_call.1} parent=11 // pred_check
          %p568 = pneg %p378
        $region66: #{tpu_custom_call.1} parent=11 // pred_check_branch
          %570 = sbr.rel (%p568) target = $region68
        $region67: #{tpu_custom_call.1} parent=11 // pred_region
          _
        $region68: #{tpu_custom_call.1} parent=11 // pred_fallthru
          _
        // Predicated region
        $region69: #{tpu_custom_call.1} parent=11 // pred_check
          %p571 = pneg %p399
        $region70: #{tpu_custom_call.1} parent=11 // pred_check_branch
          %573 = sbr.rel (%p571) target = $region72
        $region71: #{tpu_custom_call.1} parent=11 // pred_region
          %s575 = ssub.s32 1024, 1024
          %576 = vsyncadd [#allocation9], %s575
          %s577 = sshll.u32 [#allocation8], 4
          %s578 = int_to_ptr.vmem [resolvable:$true] %s577
          %583 = dma.hbm_to_vmem [thread:$0]  %s16, 1024, %s578, [#allocation9], 64, 64, 4
        $region72: #{tpu_custom_call.1} parent=11 // pred_fallthru
          _
        // Predicated region
        $region73: #{tpu_custom_call.1} parent=11 // pred_check
          %p584 = pneg %p420
        $region74: #{tpu_custom_call.1} parent=11 // pred_check_branch
          %586 = sbr.rel (%p584) target = $region76
        $region75: #{tpu_custom_call.1} parent=11 // pred_region
          _
        $region76: #{tpu_custom_call.1} parent=11 // pred_fallthru
          _
        // Predicated region
        $region77: #{tpu_custom_call.1} parent=11 // pred_check
          %p587 = pneg %p441
        $region78: #{tpu_custom_call.1} parent=11 // pred_check_branch
          %589 = sbr.rel (%p587) target = $region80
        $region79: #{tpu_custom_call.1} parent=11 // pred_region
          _
        $region80: #{tpu_custom_call.1} parent=11 // pred_fallthru
          _
        // Predicated region
        $region81: #{tpu_custom_call.1} parent=11 // pred_check
          %p590 = pneg %p462
        $region82: #{tpu_custom_call.1} parent=11 // pred_check_branch
          %592 = sbr.rel (%p590) target = $region84
        $region83: #{tpu_custom_call.1} parent=11 // pred_region
          _
        $region84: #{tpu_custom_call.1} parent=11 // pred_fallthru
          _
      $region12: #{tpu_custom_call.1} parent=5 // pred_fallthru
        _
      %p593 = scmp.lt.s32.totalorder %s32, 2
      // Predicated region
      $region85: #{tpu_custom_call.1} parent=5 // pred_check
        %p594 = pneg %p593
      $region86: #{tpu_custom_call.1} parent=5 // pred_check_branch
        %596 = sbr.rel (%p594) target = $region88
      $region87: #{tpu_custom_call.1} parent=5 // pred_region
        // Predicated region
        $region89: #{tpu_custom_call.1} parent=87 // pred_check
          %p597 = pneg %p52
        $region90: #{tpu_custom_call.1} parent=87 // pred_check_branch
          %599 = sbr.rel (%p597) target = $region92
        $region91: #{tpu_custom_call.1} parent=87 // pred_region
          %p600 = scmp.lt.s32.totalorder %s32, 1
          %s601 = scalar_select %p600, %s32, 1
          %s602 = smul.addr %s601, 8
          %s603 = scalar_lea.vmem %s0, %s602
        $region92: #{tpu_custom_call.1} parent=87 // pred_fallthru
          _
        // Predicated region
        $region93: #{tpu_custom_call.1} parent=87 // pred_check
          %p604 = pneg %p78
        $region94: #{tpu_custom_call.1} parent=87 // pred_check_branch
          %606 = sbr.rel (%p604) target = $region96
        $region95: #{tpu_custom_call.1} parent=87 // pred_region
          %p607 = scmp.lt.s32.totalorder %s32, 1
          %s608 = scalar_select %p607, %s32, 1
          %s609 = smul.addr %s608, 8
          %s610 = scalar_lea.vmem %s1, %s609
        $region96: #{tpu_custom_call.1} parent=87 // pred_fallthru
          _
      $region88: #{tpu_custom_call.1} parent=5 // pred_fallthru
        _
      %p611 = scmp.le.s32.totalorder 1, %s32
      %p612 = scmp.lt.s32.totalorder %s32, 3
      %p613 = pnand %p611, %p612
      %p614 = pneg %p613
      // Predicated region
      $region97: #{tpu_custom_call.1} parent=5 // pred_check
        _
      $region98: #{tpu_custom_call.1} parent=5 // pred_check_branch
        %616 = sbr.rel (%p613) target = $region100
      $region99: #{tpu_custom_call.1} parent=5 // pred_region
        %s617 = ssub.s32 %s32, 1
        // Predicated region
        $region101: #{tpu_custom_call.1} parent=99 // pred_check
          %p618 = pneg %p105
        $region102: #{tpu_custom_call.1} parent=99 // pred_check_branch
          %620 = sbr.rel (%p618) target = $region104
        $region103: #{tpu_custom_call.1} parent=99 // pred_region
          %621 = dma.done [#allocation3], 16
        $region104: #{tpu_custom_call.1} parent=99 // pred_fallthru
          _
        // Predicated region
        $region105: #{tpu_custom_call.1} parent=99 // pred_check
          %p622 = pneg %p126
        $region106: #{tpu_custom_call.1} parent=99 // pred_check_branch
          %624 = sbr.rel (%p622) target = $region108
        $region107: #{tpu_custom_call.1} parent=99 // pred_region
          %625 = dma.done [#allocation6], 16
        $region108: #{tpu_custom_call.1} parent=99 // pred_fallthru
          _
        // Predicated region
        $region109: #{tpu_custom_call.1} parent=99 // pred_check
          %p626 = pneg %p273
        $region110: #{tpu_custom_call.1} parent=99 // pred_check_branch
          %628 = sbr.rel (%p626) target = $region112
        $region111: #{tpu_custom_call.1} parent=99 // pred_region
          %629 = dma.done [#allocation6], 1024
        $region112: #{tpu_custom_call.1} parent=99 // pred_fallthru
          _
        // Predicated region
        $region113: #{tpu_custom_call.1} parent=99 // pred_check
          %p630 = pneg %p399
        $region114: #{tpu_custom_call.1} parent=99 // pred_check_branch
          %632 = sbr.rel (%p630) target = $region116
        $region115: #{tpu_custom_call.1} parent=99 // pred_region
          %633 = dma.done [#allocation9], 1024
        $region116: #{tpu_custom_call.1} parent=99 // pred_fallthru
          _
        %p634 = scmp.lt.s32.totalorder %s37, 1
        %s635 = scalar_select %p634, %s37, 1
        %s636 = smul.addr %s635, 8
        %s637 = scalar_lea.vmem %s0, %s636
        %p638 = pneg %p58
        %p639 = pneg %p55
        %p640 = scmp.lt.s32.totalorder %s37, 1
        %s641 = scalar_select %p640, %s37, 1
        %s642 = smul.addr %s641, 8
        %s643 = scalar_lea.vmem %s1, %s642
        %p644 = pneg %p84
        %p645 = pneg %p81
        %p646 = pneg %p105
        %p647 = pneg %p102
        %p648 = pneg %p126
        %p649 = pneg %p123
        %p650 = pneg %p147
        %p651 = pneg %p144
        %p652 = pneg %p168
        %p653 = pneg %p165
        %p654 = pneg %p189
        %p655 = pneg %p186
        %p656 = pneg %p210
        %p657 = pneg %p207
        %p658 = pneg %p231
        %p659 = pneg %p228
        %p660 = pneg %p252
        %p661 = pneg %p249
        %p662 = pneg %p273
        %p663 = pneg %p270
        %p664 = pneg %p294
        %p665 = pneg %p291
        %p666 = pneg %p315
        %p667 = pneg %p312
        %p668 = pneg %p336
        %p669 = pneg %p333
        %p670 = pneg %p357
        %p671 = pneg %p354
        %p672 = pneg %p378
        %p673 = pneg %p375
        %p674 = pneg %p399
        %p675 = pneg %p396
        %p676 = pneg %p420
        %p677 = pneg %p417
        %p678 = pneg %p441
        %p679 = pneg %p438
        %p680 = pneg %p462
        %p681 = pneg %p459
        %p682 = pneg %p488
        %p683 = pneg %p485
        %s684 = sand.u32 %s475, 1
        %s685 = scalar_lea.sflag [#allocation4], %s684
        %s686 = sand.u32 %s475, 1
        %s687 = smul.addr %s686, 8
        %s688 = scalar_lea.vmem [#allocation10], %s687
        %p689 = scmp.lt.s32.totalorder %s37, 1
        %s690 = scalar_select %p689, %s37, 1
        %s691 = smul.addr %s690, 8
        %s692 = scalar_lea.vmem %s0, %s691
        %p693 = scmp.lt.s32.totalorder %s37, 1
        %s694 = scalar_select %p693, %s37, 1
        %s695 = smul.addr %s694, 8
        %s696 = scalar_lea.vmem %s1, %s695
        %v698 = vld [vmem:[%s692] sm:$0xff]
        %v699 = vld [vmem:[#allocation2] sm:$0x1]
        %701 = vset.pattern.permute.xlu0 0
        %702 = vperm.xlu0 %701, %v698
        %v703 = vpop.permute.xlu0 %702
        %v706 = vlaneseq
        %v707 = vshrl.u32 %v706, 7
        %v708 = vsub.s32 0, %v707
        %v709 = vrot.slane %v699, %v708
        %v711 = vmul.f32 %v703, %v709
        %v712 = vld [vmem:[#allocation5] sm:$0x1]
        %v714 = vlaneseq
        %v715 = vshrl.u32 %v714, 7
        %v716 = vsub.s32 0, %v715
        %v717 = vrot.slane %v712, %v716
        %v719 = vadd.f32 %v711, %v717
        %v720 = vld [vmem:[%s696] sm:$0xff]
        %v721 = vadd.f32 %v719, %v720
        %v722 = vlaneseq
        %v723 = vshrl.u32 %v722, 7
        %v724 = vlaneseq
        %v725 = vand.u32 %v724, 127
        %vm726 = vcmp.le.s32.totalorder %v725, %v723
        %v727 = vsel %vm726, 0.0, -1e+30
        %v728 = vpack.c.bf16 %v721, %v721
        %v729 = vld [vmem:[%s4] sm:$0xf]
        %v730 = vld [vmem:[%s4 + $0x4] sm:$0xf]
        %v731 = vld [vmem:[%s4 + $0x8] sm:$0xf]
        %v732 = vld [vmem:[%s4 + $0xc] sm:$0xf]
        %v733 = vld [vmem:[%s4 + $0x10] sm:$0xf]
        %v734 = vld [vmem:[%s4 + $0x14] sm:$0xf]
        %v735 = vld [vmem:[%s4 + $0x18] sm:$0xf]
        %v736 = vld [vmem:[%s4 + $0x1c] sm:$0xf]
        %v737 = vld [vmem:[%s5] sm:$0x1]
        %v739 = vlaneseq
        %v740 = vshrl.u32 %v739, 7
        %v741 = vsub.s32 0, %v740
        %v742 = vrot.slane %v737, %v741
        %v752 = vunpack.c.l.b16 %v729
        %v753 = vunpack.c.l.b16 %v730
        %v754 = vunpack.c.l.b16 %v731
        %v755 = vunpack.c.l.b16 %v732
        %v756 = vunpack.c.l.b16 %v733
        %v757 = vunpack.c.l.b16 %v734
        %v758 = vunpack.c.l.b16 %v735
        %v759 = vunpack.c.l.b16 %v736
        %v760 = vpack.c.b16 %v753, %v752
        %v761 = vpack.c.b16 %v755, %v754
        %v762 = vpack.c.b16 %v757, %v756
        %v763 = vpack.c.b16 %v759, %v758
        %vm768 = vcmask 523264
        %v770 = vsel %vm768, %v728, 0
        %772 = vmatprep.subr.bf16.mxu0 0
        %773 = vmatpush1.bf16.msra.mxu0 0
        %774 = vmatprep.subr.bf16.mxu0 0
        %775 = vmatpush1.bf16.msra.mxu0 0
        %776 = vmatprep.subr.bf16.mxu0 0
        %777 = vmatpush1.bf16.msra.mxu0 0
        %778 = vmatprep.subr.bf16.mxu0 0
        %779 = vmatpush1.bf16.msra.mxu0 0
        %780 = vmatprep.subr.bf16.mxu0 0
        %781 = vmatpush1.bf16.msra.mxu0 %v763
        %782 = vmatprep.subr.bf16.mxu0 0
        %783 = vmatpush1.bf16.msra.mxu0 %v762
        %784 = vmatprep.subr.bf16.mxu0 0
        %785 = vmatpush1.bf16.msra.mxu0 %v761
        %786 = vmatprep.subr.bf16.mxu0 0
        %787 = vmatpush1.bf16.msra.mxu0 %v760
        %788 = vmatprep.subr.bf16.mxu0 0
        %789 = vmatpush2.bf16.msra.mxu0 0
        %790 = vmatprep.subr.bf16.mxu0 0
        %791 = vmatpush2.bf16.msra.mxu0 0
        %792 = vmatprep.subr.bf16.mxu0 0
        %793 = vmatpush2.bf16.msra.mxu0 0
        %794 = vmatprep.subr.bf16.mxu0 0
        %795 = vmatpush2.bf16.msra.mxu0 0
        %796 = vmatprep.subr.bf16.mxu0 0
        %797 = vmatpush2.bf16.msra.mxu0 0
        %798 = vmatprep.subr.bf16.mxu0 0
        %799 = vmatpush2.bf16.msra.mxu0 0
        %800 = vmatprep.subr.bf16.mxu0 0
        %801 = vmatpush2.bf16.msra.mxu0 0
        %802 = vmatprep.subr.bf16.mxu0 0
        %803 = vmatpush2.bf16.msra.mxu0 0
        %804 = vmatprep.mubr.bf16.mxu0 0
        %805 = vmatmul.mubr.bf16.gmra.mxu0 %v770
        %v806 = vpop.f32.mrf.mxu0
        %v807 = vadd.f32 %v742, %v806
        %v808 = vpop.f32.mrf.mxu0
        %v809 = vpop.f32.mrf.mxu0
        %v810 = vpop.f32.mrf.mxu0
        %811 = vdwg.mxu0
        %v812 = vld [vmem:[%s6] sm:$0xf]
        %v813 = vld [vmem:[%s6 + $0x4] sm:$0xf]
        %v814 = vld [vmem:[%s6 + $0x8] sm:$0xf]
        %v815 = vld [vmem:[%s6 + $0xc] sm:$0xf]
        %v816 = vld [vmem:[%s6 + $0x10] sm:$0xf]
        %v817 = vld [vmem:[%s6 + $0x14] sm:$0xf]
        %v818 = vld [vmem:[%s6 + $0x18] sm:$0xf]
        %v819 = vld [vmem:[%s6 + $0x1c] sm:$0xf]
        %v820 = vld [vmem:[%s7] sm:$0x1]
        %v822 = vlaneseq
        %v823 = vshrl.u32 %v822, 7
        %v824 = vsub.s32 0, %v823
        %v825 = vrot.slane %v820, %v824
        %v835 = vunpack.c.l.b16 %v812
        %v836 = vunpack.c.l.b16 %v813
        %v837 = vunpack.c.l.b16 %v814
        %v838 = vunpack.c.l.b16 %v815
        %v839 = vunpack.c.l.b16 %v816
        %v840 = vunpack.c.l.b16 %v817
        %v841 = vunpack.c.l.b16 %v818
        %v842 = vunpack.c.l.b16 %v819
        %v843 = vpack.c.b16 %v836, %v835
        %v844 = vpack.c.b16 %v838, %v837
        %v845 = vpack.c.b16 %v840, %v839
        %v846 = vpack.c.b16 %v842, %v841
        %851 = vmatprep.subr.bf16.mxu0 0
        %852 = vmatpush1.bf16.msra.mxu0 0
        %853 = vmatprep.subr.bf16.mxu0 0
        %854 = vmatpush1.bf16.msra.mxu0 0
        %855 = vmatprep.subr.bf16.mxu0 0
        %856 = vmatpush1.bf16.msra.mxu0 0
        %857 = vmatprep.subr.bf16.mxu0 0
        %858 = vmatpush1.bf16.msra.mxu0 0
        %859 = vmatprep.subr.bf16.mxu0 0
        %860 = vmatpush1.bf16.msra.mxu0 %v846
        %861 = vmatprep.subr.bf16.mxu0 0
        %862 = vmatpush1.bf16.msra.mxu0 %v845
        %863 = vmatprep.subr.bf16.mxu0 0
        %864 = vmatpush1.bf16.msra.mxu0 %v844
        %865 = vmatprep.subr.bf16.mxu0 0
        %866 = vmatpush1.bf16.msra.mxu0 %v843
        %867 = vmatprep.subr.bf16.mxu0 0
        %868 = vmatpush2.bf16.msra.mxu0 0
        %869 = vmatprep.subr.bf16.mxu0 0
        %870 = vmatpush2.bf16.msra.mxu0 0
        %871 = vmatprep.subr.bf16.mxu0 0
        %872 = vmatpush2.bf16.msra.mxu0 0
        %873 = vmatprep.subr.bf16.mxu0 0
        %874 = vmatpush2.bf16.msra.mxu0 0
        %875 = vmatprep.subr.bf16.mxu0 0
        %876 = vmatpush2.bf16.msra.mxu0 0
        %877 = vmatprep.subr.bf16.mxu0 0
        %878 = vmatpush2.bf16.msra.mxu0 0
        %879 = vmatprep.subr.bf16.mxu0 0
        %880 = vmatpush2.bf16.msra.mxu0 0
        %881 = vmatprep.subr.bf16.mxu0 0
        %882 = vmatpush2.bf16.msra.mxu0 0
        %883 = vmatprep.mubr.bf16.mxu0 0
        %884 = vmatmul.mubr.bf16.gmra.mxu0 %v770
        %v885 = vpop.f32.mrf.mxu0
        %v886 = vadd.f32 %v825, %v885
        %v887 = vpop.f32.mrf.mxu0
        %v888 = vpop.f32.mrf.mxu0
        %v889 = vpop.f32.mrf.mxu0
        %890 = vdwg.mxu0
        %v891 = vld [vmem:[%s8] sm:$0xf]
        %v892 = vld [vmem:[%s8 + $0x4] sm:$0xf]
        %v893 = vld [vmem:[%s8 + $0x8] sm:$0xf]
        %v894 = vld [vmem:[%s8 + $0xc] sm:$0xf]
        %v895 = vld [vmem:[%s8 + $0x10] sm:$0xf]
        %v896 = vld [vmem:[%s8 + $0x14] sm:$0xf]
        %v897 = vld [vmem:[%s8 + $0x18] sm:$0xf]
        %v898 = vld [vmem:[%s8 + $0x1c] sm:$0xf]
        %v899 = vld [vmem:[%s9] sm:$0x1]
        %v901 = vlaneseq
        %v902 = vshrl.u32 %v901, 7
        %v903 = vsub.s32 0, %v902
        %v904 = vrot.slane %v899, %v903
        %v914 = vunpack.c.l.b16 %v891
        %v915 = vunpack.c.l.b16 %v892
        %v916 = vunpack.c.l.b16 %v893
        %v917 = vunpack.c.l.b16 %v894
        %v918 = vunpack.c.l.b16 %v895
        %v919 = vunpack.c.l.b16 %v896
        %v920 = vunpack.c.l.b16 %v897
        %v921 = vunpack.c.l.b16 %v898
        %v922 = vpack.c.b16 %v915, %v914
        %v923 = vpack.c.b16 %v917, %v916
        %v924 = vpack.c.b16 %v919, %v918
        %v925 = vpack.c.b16 %v921, %v920
        %930 = vmatprep.subr.bf16.mxu0 0
        %931 = vmatpush1.bf16.msra.mxu0 0
        %932 = vmatprep.subr.bf16.mxu0 0
        %933 = vmatpush1.bf16.msra.mxu0 0
        %934 = vmatprep.subr.bf16.mxu0 0
        %935 = vmatpush1.bf16.msra.mxu0 0
        %936 = vmatprep.subr.bf16.mxu0 0
        %937 = vmatpush1.bf16.msra.mxu0 0
        %938 = vmatprep.subr.bf16.mxu0 0
        %939 = vmatpush1.bf16.msra.mxu0 %v925
        %940 = vmatprep.subr.bf16.mxu0 0
        %941 = vmatpush1.bf16.msra.mxu0 %v924
        %942 = vmatprep.subr.bf16.mxu0 0
        %943 = vmatpush1.bf16.msra.mxu0 %v923
        %944 = vmatprep.subr.bf16.mxu0 0
        %945 = vmatpush1.bf16.msra.mxu0 %v922
        %946 = vmatprep.subr.bf16.mxu0 0
        %947 = vmatpush2.bf16.msra.mxu0 0
        %948 = vmatprep.subr.bf16.mxu0 0
        %949 = vmatpush2.bf16.msra.mxu0 0
        %950 = vmatprep.subr.bf16.mxu0 0
        %951 = vmatpush2.bf16.msra.mxu0 0
        %952 = vmatprep.subr.bf16.mxu0 0
        %953 = vmatpush2.bf16.msra.mxu0 0
        %954 = vmatprep.subr.bf16.mxu0 0
        %955 = vmatpush2.bf16.msra.mxu0 0
        %956 = vmatprep.subr.bf16.mxu0 0
        %957 = vmatpush2.bf16.msra.mxu0 0
        %958 = vmatprep.subr.bf16.mxu0 0
        %959 = vmatpush2.bf16.msra.mxu0 0
        %960 = vmatprep.subr.bf16.mxu0 0
        %961 = vmatpush2.bf16.msra.mxu0 0
        %962 = vmatprep.mubr.bf16.mxu0 0
        %963 = vmatmul.mubr.bf16.gmra.mxu0 %v770
        %v964 = vpop.f32.mrf.mxu0
        %v965 = vadd.f32 %v904, %v964
        %v966 = vpop.f32.mrf.mxu0
        %v967 = vpop.f32.mrf.mxu0
        %v968 = vpop.f32.mrf.mxu0
        %969 = vdwg.mxu0
        %v970 = vpack.c.bf16 %v807, %v807
        %v971 = vpack.c.bf16 %v886, %v886
        %v972 = vpack.c.bf16 %v965, %v965
        %vm973 = vcmask 130048
        %v975 = vsel %vm973, %v970, 0
        %v978 = vsel %vm973, %v971, 0
        %980 = vmatprep.subr.bf16.mxu0 0
        %981 = vmatpush1.bf16.xpose.msra.mxu0 0
        %982 = vmatprep.subr.bf16.mxu0 0
        %983 = vmatpush1.bf16.xpose.msra.mxu0 0
        %984 = vmatprep.subr.bf16.mxu0 0
        %985 = vmatpush1.bf16.xpose.msra.mxu0 0
        %986 = vmatprep.subr.bf16.mxu0 0
        %987 = vmatpush1.bf16.xpose.msra.mxu0 0
        %988 = vmatprep.subr.bf16.mxu0 0
        %989 = vmatpush1.bf16.xpose.msra.mxu0 0
        %990 = vmatprep.subr.bf16.mxu0 0
        %991 = vmatpush1.bf16.xpose.msra.mxu0 0
        %992 = vmatprep.subr.bf16.mxu0 0
        %993 = vmatpush1.bf16.xpose.msra.mxu0 0
        %994 = vmatprep.subr.bf16.mxu0 0
        %995 = vmatpush1.bf16.xpose.msra.mxu0 %v978
        %996 = vmatprep.subr.bf16.mxu0 0
        %997 = vmatpush2.bf16.xpose.msra.mxu0 0
        %998 = vmatprep.subr.bf16.mxu0 0
        %999 = vmatpush2.bf16.xpose.msra.mxu0 0
        %1000 = vmatprep.subr.bf16.mxu0 0
        %1001 = vmatpush2.bf16.xpose.msra.mxu0 0
        %1002 = vmatprep.subr.bf16.mxu0 0
        %1003 = vmatpush2.bf16.xpose.msra.mxu0 0
        %1004 = vmatprep.subr.bf16.mxu0 0
        %1005 = vmatpush2.bf16.xpose.msra.mxu0 0
        %1006 = vmatprep.subr.bf16.mxu0 0
        %1007 = vmatpush2.bf16.xpose.msra.mxu0 0
        %1008 = vmatprep.subr.bf16.mxu0 0
        %1009 = vmatpush2.bf16.xpose.msra.mxu0 0
        %1010 = vmatprep.subr.bf16.mxu0 0
        %1011 = vmatpush2.bf16.xpose.msra.mxu0 0
        %1012 = vmatprep.mubr.bf16.mxu0 0
        %1013 = vmatmul.mubr.bf16.gmra.mxu0 %v975
        %v1014 = vpop.f32.mrf.mxu0
        %v1015 = vadd.f32 0.0, %v1014
        %v1016 = vpop.f32.mrf.mxu0
        %v1017 = vpop.f32.mrf.mxu0
        %v1018 = vpop.f32.mrf.mxu0
        %1019 = vdwg.mxu0
        %v1020 = vmul.f32 %v1015, 0.25
        %v1021 = vadd.f32 %v1020, %v727
        %vm1022 = vcmask 64512
        %v1023 = vsel %vm1022, %v1021, -inf
        %1024 = vmax.xlane.f32.xlu0 %v1023
        %v1025 = vpop.xlane.xlu0 %1024
        %v1026 = vsub.f32 %v1021, %v1025
        %v1027 = vmul.f32 %v1026, 1.442695
        %v1028 = vpow.pop %v1027
        %v1029 = vsel %vm1022, %v1028, 0.0
        %1030 = vadd.xlane.f32.xlu0 %v1029
        %v1031 = vpop.xlane.xlu0 %1030
        %v1032 = vrcp.pop %v1031
        %v1033 = vmul.f32 %v1028, %v1032
        %v1034 = vpack.c.bf16 %v1033, %v1033
        %v1036 = vsel %vm1022, %v1034, 0
        %vm1038 = vcmask 1043456
        %v1040 = vsel %vm1038, %v972, 0
        %1042 = vmatprep.subr.bf16.mxu0 0
        %1043 = vmatpush1.bf16.msra.mxu0 0
        %1044 = vmatprep.subr.bf16.mxu0 0
        %1045 = vmatpush1.bf16.msra.mxu0 0
        %1046 = vmatprep.subr.bf16.mxu0 0
        %1047 = vmatpush1.bf16.msra.mxu0 0
        %1048 = vmatprep.subr.bf16.mxu0 0
        %1049 = vmatpush1.bf16.msra.mxu0 0
        %1050 = vmatprep.subr.bf16.mxu0 0
        %1051 = vmatpush1.bf16.msra.mxu0 0
        %1052 = vmatprep.subr.bf16.mxu0 0
        %1053 = vmatpush1.bf16.msra.mxu0 0
        %1054 = vmatprep.subr.bf16.mxu0 0
        %1055 = vmatpush1.bf16.msra.mxu0 0
        %1056 = vmatprep.subr.bf16.mxu0 0
        %1057 = vmatpush1.bf16.msra.mxu0 %v1040
        %1058 = vmatprep.subr.bf16.mxu0 0
        %1059 = vmatpush2.bf16.msra.mxu0 0
        %1060 = vmatprep.subr.bf16.mxu0 0
        %1061 = vmatpush2.bf16.msra.mxu0 0
        %1062 = vmatprep.subr.bf16.mxu0 0
        %1063 = vmatpush2.bf16.msra.mxu0 0
        %1064 = vmatprep.subr.bf16.mxu0 0
        %1065 = vmatpush2.bf16.msra.mxu0 0
        %1066 = vmatprep.subr.bf16.mxu0 0
        %1067 = vmatpush2.bf16.msra.mxu0 0
        %1068 = vmatprep.subr.bf16.mxu0 0
        %1069 = vmatpush2.bf16.msra.mxu0 0
        %1070 = vmatprep.subr.bf16.mxu0 0
        %1071 = vmatpush2.bf16.msra.mxu0 0
        %1072 = vmatprep.subr.bf16.mxu0 0
        %1073 = vmatpush2.bf16.msra.mxu0 0
        %1074 = vmatprep.mubr.bf16.mxu0 0
        %1075 = vmatmul.mubr.bf16.gmra.mxu0 %v1036
        %v1076 = vpop.f32.mrf.mxu0
        %v1077 = vadd.f32 0.0, %v1076
        %v1078 = vpop.f32.mrf.mxu0
        %v1079 = vpop.f32.mrf.mxu0
        %v1080 = vpop.f32.mrf.mxu0
        %1081 = vdwg.mxu0
        %1083 = vrot.lane.b32.xlu0 %v970, 112
        %v1084 = vpop.permute.xlu0 %1083
        %1086 = vrot.lane.b32.xlu0 %v971, 112
        %v1087 = vpop.permute.xlu0 %1086
        %v1089 = vsel %vm973, %v1084, 0
        %v1092 = vsel %vm973, %v1087, 0
        %1094 = vmatprep.subr.bf16.mxu0 0
        %1095 = vmatpush1.bf16.xpose.msra.mxu0 0
        %1096 = vmatprep.subr.bf16.mxu0 0
        %1097 = vmatpush1.bf16.xpose.msra.mxu0 0
        %1098 = vmatprep.subr.bf16.mxu0 0
        %1099 = vmatpush1.bf16.xpose.msra.mxu0 0
        %1100 = vmatprep.subr.bf16.mxu0 0
        %1101 = vmatpush1.bf16.xpose.msra.mxu0 0
        %1102 = vmatprep.subr.bf16.mxu0 0
        %1103 = vmatpush1.bf16.xpose.msra.mxu0 0
        %1104 = vmatprep.subr.bf16.mxu0 0
        %1105 = vmatpush1.bf16.xpose.msra.mxu0 0
        %1106 = vmatprep.subr.bf16.mxu0 0
        %1107 = vmatpush1.bf16.xpose.msra.mxu0 0
        %1108 = vmatprep.subr.bf16.mxu0 0
        %1109 = vmatpush1.bf16.xpose.msra.mxu0 %v1092
        %1110 = vmatprep.subr.bf16.mxu0 0
        %1111 = vmatpush2.bf16.xpose.msra.mxu0 0
        %1112 = vmatprep.subr.bf16.mxu0 0
        %1113 = vmatpush2.bf16.xpose.msra.mxu0 0
        %1114 = vmatprep.subr.bf16.mxu0 0
        %1115 = vmatpush2.bf16.xpose.msra.mxu0 0
        %1116 = vmatprep.subr.bf16.mxu0 0
        %1117 = vmatpush2.bf16.xpose.msra.mxu0 0
        %1118 = vmatprep.subr.bf16.mxu0 0
        %1119 = vmatpush2.bf16.xpose.msra.mxu0 0
        %1120 = vmatprep.subr.bf16.mxu0 0
        %1121 = vmatpush2.bf16.xpose.msra.mxu0 0
        %1122 = vmatprep.subr.bf16.mxu0 0
        %1123 = vmatpush2.bf16.xpose.msra.mxu0 0
        %1124 = vmatprep.subr.bf16.mxu0 0
        %1125 = vmatpush2.bf16.xpose.msra.mxu0 0
        %1126 = vmatprep.mubr.bf16.mxu0 0
        %1127 = vmatmul.mubr.bf16.gmra.mxu0 %v1089
        %v1128 = vpop.f32.mrf.mxu0
        %v1129 = vadd.f32 0.0, %v1128
        %v1130 = vpop.f32.mrf.mxu0
        %v1131 = vpop.f32.mrf.mxu0
        %v1132 = vpop.f32.mrf.mxu0
        %1133 = vdwg.mxu0
        %v1134 = vmul.f32 %v1129, 0.25
        %v1135 = vadd.f32 %v1134, %v727
        %v1136 = vsel %vm1022, %v1135, -inf
        %1137 = vmax.xlane.f32.xlu0 %v1136
        %v1138 = vpop.xlane.xlu0 %1137
        %v1139 = vsub.f32 %v1135, %v1138
        %v1140 = vmul.f32 %v1139, 1.442695
        %v1141 = vpow.pop %v1140
        %v1142 = vsel %vm1022, %v1141, 0.0
        %1143 = vadd.xlane.f32.xlu0 %v1142
        %v1144 = vpop.xlane.xlu0 %1143
        %v1145 = vrcp.pop %v1144
        %v1146 = vmul.f32 %v1141, %v1145
        %v1147 = vpack.c.bf16 %v1146, %v1146
        %1149 = vrot.lane.b32.xlu0 %v972, 112
        %v1150 = vpop.permute.xlu0 %1149
        %v1152 = vsel %vm1022, %v1147, 0
        %v1155 = vsel %vm1038, %v1150, 0
        %1157 = vmatprep.subr.bf16.mxu0 0
        %1158 = vmatpush1.bf16.msra.mxu0 0
        %1159 = vmatprep.subr.bf16.mxu0 0
        %1160 = vmatpush1.bf16.msra.mxu0 0
        %1161 = vmatprep.subr.bf16.mxu0 0
        %1162 = vmatpush1.bf16.msra.mxu0 0
        %1163 = vmatprep.subr.bf16.mxu0 0
        %1164 = vmatpush1.bf16.msra.mxu0 0
        %1165 = vmatprep.subr.bf16.mxu0 0
        %1166 = vmatpush1.bf16.msra.mxu0 0
        %1167 = vmatprep.subr.bf16.mxu0 0
        %1168 = vmatpush1.bf16.msra.mxu0 0
        %1169 = vmatprep.subr.bf16.mxu0 0
        %1170 = vmatpush1.bf16.msra.mxu0 0
        %1171 = vmatprep.subr.bf16.mxu0 0
        %1172 = vmatpush1.bf16.msra.mxu0 %v1155
        %1173 = vmatprep.subr.bf16.mxu0 0
        %1174 = vmatpush2.bf16.msra.mxu0 0
        %1175 = vmatprep.subr.bf16.mxu0 0
        %1176 = vmatpush2.bf16.msra.mxu0 0
        %1177 = vmatprep.subr.bf16.mxu0 0
        %1178 = vmatpush2.bf16.msra.mxu0 0
        %1179 = vmatprep.subr.bf16.mxu0 0
        %1180 = vmatpush2.bf16.msra.mxu0 0
        %1181 = vmatprep.subr.bf16.mxu0 0
        %1182 = vmatpush2.bf16.msra.mxu0 0
        %1183 = vmatprep.subr.bf16.mxu0 0
        %1184 = vmatpush2.bf16.msra.mxu0 0
        %1185 = vmatprep.subr.bf16.mxu0 0
        %1186 = vmatpush2.bf16.msra.mxu0 0
        %1187 = vmatprep.subr.bf16.mxu0 0
        %1188 = vmatpush2.bf16.msra.mxu0 0
        %1189 = vmatprep.mubr.bf16.mxu0 0
        %1190 = vmatmul.mubr.bf16.gmra.mxu0 %v1152
        %v1191 = vpop.f32.mrf.mxu0
        %v1192 = vadd.f32 0.0, %v1191
        %v1193 = vpop.f32.mrf.mxu0
        %v1194 = vpop.f32.mrf.mxu0
        %v1195 = vpop.f32.mrf.mxu0
        %1196 = vdwg.mxu0
        %1197 = vrot.lane.b32.xlu0 %v970, 96
        %v1198 = vpop.permute.xlu0 %1197
        %1199 = vrot.lane.b32.xlu0 %v971, 96
        %v1200 = vpop.permute.xlu0 %1199
        %v1202 = vsel %vm973, %v1198, 0
        %v1205 = vsel %vm973, %v1200, 0
        %1207 = vmatprep.subr.bf16.mxu0 0
        %1208 = vmatpush1.bf16.xpose.msra.mxu0 0
        %1209 = vmatprep.subr.bf16.mxu0 0
        %1210 = vmatpush1.bf16.xpose.msra.mxu0 0
        %1211 = vmatprep.subr.bf16.mxu0 0
        %1212 = vmatpush1.bf16.xpose.msra.mxu0 0
        %1213 = vmatprep.subr.bf16.mxu0 0
        %1214 = vmatpush1.bf16.xpose.msra.mxu0 0
        %1215 = vmatprep.subr.bf16.mxu0 0
        %1216 = vmatpush1.bf16.xpose.msra.mxu0 0
        %1217 = vmatprep.subr.bf16.mxu0 0
        %1218 = vmatpush1.bf16.xpose.msra.mxu0 0
        %1219 = vmatprep.subr.bf16.mxu0 0
        %1220 = vmatpush1.bf16.xpose.msra.mxu0 0
        %1221 = vmatprep.subr.bf16.mxu0 0
        %1222 = vmatpush1.bf16.xpose.msra.mxu0 %v1205
        %1223 = vmatprep.subr.bf16.mxu0 0
        %1224 = vmatpush2.bf16.xpose.msra.mxu0 0
        %1225 = vmatprep.subr.bf16.mxu0 0
        %1226 = vmatpush2.bf16.xpose.msra.mxu0 0
        %1227 = vmatprep.subr.bf16.mxu0 0
        %1228 = vmatpush2.bf16.xpose.msra.mxu0 0
        %1229 = vmatprep.subr.bf16.mxu0 0
        %1230 = vmatpush2.bf16.xpose.msra.mxu0 0
        %1231 = vmatprep.subr.bf16.mxu0 0
        %1232 = vmatpush2.bf16.xpose.msra.mxu0 0
        %1233 = vmatprep.subr.bf16.mxu0 0
        %1234 = vmatpush2.bf16.xpose.msra.mxu0 0
        %1235 = vmatprep.subr.bf16.mxu0 0
        %1236 = vmatpush2.bf16.xpose.msra.mxu0 0
        %1237 = vmatprep.subr.bf16.mxu0 0
        %1238 = vmatpush2.bf16.xpose.msra.mxu0 0
        %1239 = vmatprep.mubr.bf16.mxu0 0
        %1240 = vmatmul.mubr.bf16.gmra.mxu0 %v1202
        %v1241 = vpop.f32.mrf.mxu0
        %v1242 = vadd.f32 0.0, %v1241
        %v1243 = vpop.f32.mrf.mxu0
        %v1244 = vpop.f32.mrf.mxu0
        %v1245 = vpop.f32.mrf.mxu0
        %1246 = vdwg.mxu0
        %v1247 = vmul.f32 %v1242, 0.25
        %v1248 = vadd.f32 %v1247, %v727
        %v1249 = vsel %vm1022, %v1248, -inf
        %1250 = vmax.xlane.f32.xlu0 %v1249
        %v1251 = vpop.xlane.xlu0 %1250
        %v1252 = vsub.f32 %v1248, %v1251
        %v1253 = vmul.f32 %v1252, 1.442695
        %v1254 = vpow.pop %v1253
        %v1255 = vsel %vm1022, %v1254, 0.0
        %1256 = vadd.xlane.f32.xlu0 %v1255
        %v1257 = vpop.xlane.xlu0 %1256
        %v1258 = vrcp.pop %v1257
        %v1259 = vmul.f32 %v1254, %v1258
        %v1260 = vpack.c.bf16 %v1259, %v1259
        %1261 = vrot.lane.b32.xlu0 %v972, 96
        %v1262 = vpop.permute.xlu0 %1261
        %v1264 = vsel %vm1022, %v1260, 0
        %v1267 = vsel %vm1038, %v1262, 0
        %1269 = vmatprep.subr.bf16.mxu0 0
        %1270 = vmatpush1.bf16.msra.mxu0 0
        %1271 = vmatprep.subr.bf16.mxu0 0
        %1272 = vmatpush1.bf16.msra.mxu0 0
        %1273 = vmatprep.subr.bf16.mxu0 0
        %1274 = vmatpush1.bf16.msra.mxu0 0
        %1275 = vmatprep.subr.bf16.mxu0 0
        %1276 = vmatpush1.bf16.msra.mxu0 0
        %1277 = vmatprep.subr.bf16.mxu0 0
        %1278 = vmatpush1.bf16.msra.mxu0 0
        %1279 = vmatprep.subr.bf16.mxu0 0
        %1280 = vmatpush1.bf16.msra.mxu0 0
        %1281 = vmatprep.subr.bf16.mxu0 0
        %1282 = vmatpush1.bf16.msra.mxu0 0
        %1283 = vmatprep.subr.bf16.mxu0 0
        %1284 = vmatpush1.bf16.msra.mxu0 %v1267
        %1285 = vmatprep.subr.bf16.mxu0 0
        %1286 = vmatpush2.bf16.msra.mxu0 0
        %1287 = vmatprep.subr.bf16.mxu0 0
        %1288 = vmatpush2.bf16.msra.mxu0 0
        %1289 = vmatprep.subr.bf16.mxu0 0
        %1290 = vmatpush2.bf16.msra.mxu0 0
        %1291 = vmatprep.subr.bf16.mxu0 0
        %1292 = vmatpush2.bf16.msra.mxu0 0
        %1293 = vmatprep.subr.bf16.mxu0 0
        %1294 = vmatpush2.bf16.msra.mxu0 0
        %1295 = vmatprep.subr.bf16.mxu0 0
        %1296 = vmatpush2.bf16.msra.mxu0 0
        %1297 = vmatprep.subr.bf16.mxu0 0
        %1298 = vmatpush2.bf16.msra.mxu0 0
        %1299 = vmatprep.subr.bf16.mxu0 0
        %1300 = vmatpush2.bf16.msra.mxu0 0
        %1301 = vmatprep.mubr.bf16.mxu0 0
        %1302 = vmatmul.mubr.bf16.gmra.mxu0 %v1264
        %v1303 = vpop.f32.mrf.mxu0
        %v1304 = vadd.f32 0.0, %v1303
        %v1305 = vpop.f32.mrf.mxu0
        %v1306 = vpop.f32.mrf.mxu0
        %v1307 = vpop.f32.mrf.mxu0
        %1308 = vdwg.mxu0
        %1309 = vrot.lane.b32.xlu0 %v970, 80
        %v1310 = vpop.permute.xlu0 %1309
        %1311 = vrot.lane.b32.xlu0 %v971, 80
        %v1312 = vpop.permute.xlu0 %1311
        %v1314 = vsel %vm973, %v1310, 0
        %v1317 = vsel %vm973, %v1312, 0
        %1319 = vmatprep.subr.bf16.mxu0 0
        %1320 = vmatpush1.bf16.xpose.msra.mxu0 0
        %1321 = vmatprep.subr.bf16.mxu0 0
        %1322 = vmatpush1.bf16.xpose.msra.mxu0 0
        %1323 = vmatprep.subr.bf16.mxu0 0
        %1324 = vmatpush1.bf16.xpose.msra.mxu0 0
        %1325 = vmatprep.subr.bf16.mxu0 0
        %1326 = vmatpush1.bf16.xpose.msra.mxu0 0
        %1327 = vmatprep.subr.bf16.mxu0 0
        %1328 = vmatpush1.bf16.xpose.msra.mxu0 0
        %1329 = vmatprep.subr.bf16.mxu0 0
        %1330 = vmatpush1.bf16.xpose.msra.mxu0 0
        %1331 = vmatprep.subr.bf16.mxu0 0
        %1332 = vmatpush1.bf16.xpose.msra.mxu0 0
        %1333 = vmatprep.subr.bf16.mxu0 0
        %1334 = vmatpush1.bf16.xpose.msra.mxu0 %v1317
        %1335 = vmatprep.subr.bf16.mxu0 0
        %1336 = vmatpush2.bf16.xpose.msra.mxu0 0
        %1337 = vmatprep.subr.bf16.mxu0 0
        %1338 = vmatpush2.bf16.xpose.msra.mxu0 0
        %1339 = vmatprep.subr.bf16.mxu0 0
        %1340 = vmatpush2.bf16.xpose.msra.mxu0 0
        %1341 = vmatprep.subr.bf16.mxu0 0
        %1342 = vmatpush2.bf16.xpose.msra.mxu0 0
        %1343 = vmatprep.subr.bf16.mxu0 0
        %1344 = vmatpush2.bf16.xpose.msra.mxu0 0
        %1345 = vmatprep.subr.bf16.mxu0 0
        %1346 = vmatpush2.bf16.xpose.msra.mxu0 0
        %1347 = vmatprep.subr.bf16.mxu0 0
        %1348 = vmatpush2.bf16.xpose.msra.mxu0 0
        %1349 = vmatprep.subr.bf16.mxu0 0
        %1350 = vmatpush2.bf16.xpose.msra.mxu0 0
        %1351 = vmatprep.mubr.bf16.mxu0 0
        %1352 = vmatmul.mubr.bf16.gmra.mxu0 %v1314
        %v1353 = vpop.f32.mrf.mxu0
        %v1354 = vadd.f32 0.0, %v1353
        %v1355 = vpop.f32.mrf.mxu0
        %v1356 = vpop.f32.mrf.mxu0
        %v1357 = vpop.f32.mrf.mxu0
        %1358 = vdwg.mxu0
        %v1359 = vmul.f32 %v1354, 0.25
        %v1360 = vadd.f32 %v1359, %v727
        %v1361 = vsel %vm1022, %v1360, -inf
        %1362 = vmax.xlane.f32.xlu0 %v1361
        %v1363 = vpop.xlane.xlu0 %1362
        %v1364 = vsub.f32 %v1360, %v1363
        %v1365 = vmul.f32 %v1364, 1.442695
        %v1366 = vpow.pop %v1365
        %v1367 = vsel %vm1022, %v1366, 0.0
        %1368 = vadd.xlane.f32.xlu0 %v1367
        %v1369 = vpop.xlane.xlu0 %1368
        %v1370 = vrcp.pop %v1369
        %v1371 = vmul.f32 %v1366, %v1370
        %v1372 = vpack.c.bf16 %v1371, %v1371
        %1373 = vrot.lane.b32.xlu0 %v972, 80
        %v1374 = vpop.permute.xlu0 %1373
        %v1376 = vsel %vm1022, %v1372, 0
        %v1379 = vsel %vm1038, %v1374, 0
        %1381 = vmatprep.subr.bf16.mxu0 0
        %1382 = vmatpush1.bf16.msra.mxu0 0
        %1383 = vmatprep.subr.bf16.mxu0 0
        %1384 = vmatpush1.bf16.msra.mxu0 0
        %1385 = vmatprep.subr.bf16.mxu0 0
        %1386 = vmatpush1.bf16.msra.mxu0 0
        %1387 = vmatprep.subr.bf16.mxu0 0
        %1388 = vmatpush1.bf16.msra.mxu0 0
        %1389 = vmatprep.subr.bf16.mxu0 0
        %1390 = vmatpush1.bf16.msra.mxu0 0
        %1391 = vmatprep.subr.bf16.mxu0 0
        %1392 = vmatpush1.bf16.msra.mxu0 0
        %1393 = vmatprep.subr.bf16.mxu0 0
        %1394 = vmatpush1.bf16.msra.mxu0 0
        %1395 = vmatprep.subr.bf16.mxu0 0
        %1396 = vmatpush1.bf16.msra.mxu0 %v1379
        %1397 = vmatprep.subr.bf16.mxu0 0
        %1398 = vmatpush2.bf16.msra.mxu0 0
        %1399 = vmatprep.subr.bf16.mxu0 0
        %1400 = vmatpush2.bf16.msra.mxu0 0
        %1401 = vmatprep.subr.bf16.mxu0 0
        %1402 = vmatpush2.bf16.msra.mxu0 0
        %1403 = vmatprep.subr.bf16.mxu0 0
        %1404 = vmatpush2.bf16.msra.mxu0 0
        %1405 = vmatprep.subr.bf16.mxu0 0
        %1406 = vmatpush2.bf16.msra.mxu0 0
        %1407 = vmatprep.subr.bf16.mxu0 0
        %1408 = vmatpush2.bf16.msra.mxu0 0
        %1409 = vmatprep.subr.bf16.mxu0 0
        %1410 = vmatpush2.bf16.msra.mxu0 0
        %1411 = vmatprep.subr.bf16.mxu0 0
        %1412 = vmatpush2.bf16.msra.mxu0 0
        %1413 = vmatprep.mubr.bf16.mxu0 0
        %1414 = vmatmul.mubr.bf16.gmra.mxu0 %v1376
        %v1415 = vpop.f32.mrf.mxu0
        %v1416 = vadd.f32 0.0, %v1415
        %v1417 = vpop.f32.mrf.mxu0
        %v1418 = vpop.f32.mrf.mxu0
        %v1419 = vpop.f32.mrf.mxu0
        %1420 = vdwg.mxu0
        %1422 = vrot.lane.b32.xlu0 %v1192, 16
        %v1423 = vpop.permute.xlu0 %1422
        %1426 = vrot.lane.b32.xlu0 %v1304, 32
        %v1427 = vpop.permute.xlu0 %1426
        %1430 = vrot.lane.b32.xlu0 %v1416, 48
        %v1431 = vpop.permute.xlu0 %1430
        %v1433 = vsel %vm973, %v1077, %v1423
        %vm1434 = vcmask 261120
        %v1435 = vsel %vm1434, %v1433, %v1427
        %vm1436 = vcmask 392192
        %v1437 = vsel %vm1436, %v1435, %v1431
        %v1438 = vpack.c.bf16 %v1437, %v1437
        %v1439 = vld [vmem:[#allocation7] sm:$0xf]
        %v1440 = vld [vmem:[#allocation7 + $0x4] sm:$0xf]
        %v1441 = vld [vmem:[#allocation7 + $0x8] sm:$0xf]
        %v1442 = vld [vmem:[#allocation7 + $0xc] sm:$0xf]
        %v1443 = vld [vmem:[#allocation7 + $0x10] sm:$0xf]
        %v1444 = vld [vmem:[#allocation7 + $0x14] sm:$0xf]
        %v1445 = vld [vmem:[#allocation7 + $0x18] sm:$0xf]
        %v1446 = vld [vmem:[#allocation7 + $0x1c] sm:$0xf]
        %v1447 = vld [vmem:[%s11] sm:$0x1]
        %v1449 = vlaneseq
        %v1450 = vshrl.u32 %v1449, 7
        %v1451 = vsub.s32 0, %v1450
        %v1452 = vrot.slane %v1447, %v1451
        %v1462 = vunpack.c.l.b16 %v1439
        %v1463 = vunpack.c.l.b16 %v1440
        %v1464 = vunpack.c.l.b16 %v1441
        %v1465 = vunpack.c.l.b16 %v1442
        %v1466 = vunpack.c.l.b16 %v1443
        %v1467 = vunpack.c.l.b16 %v1444
        %v1468 = vunpack.c.l.b16 %v1445
        %v1469 = vunpack.c.l.b16 %v1446
        %v1470 = vpack.c.b16 %v1463, %v1462
        %v1471 = vpack.c.b16 %v1465, %v1464
        %v1472 = vpack.c.b16 %v1467, %v1466
        %v1473 = vpack.c.b16 %v1469, %v1468
        %v1479 = vsel %vm768, %v1438, 0
        %1481 = vmatprep.subr.bf16.mxu0 0
        %1482 = vmatpush1.bf16.msra.mxu0 0
        %1483 = vmatprep.subr.bf16.mxu0 0
        %1484 = vmatpush1.bf16.msra.mxu0 0
        %1485 = vmatprep.subr.bf16.mxu0 0
        %1486 = vmatpush1.bf16.msra.mxu0 0
        %1487 = vmatprep.subr.bf16.mxu0 0
        %1488 = vmatpush1.bf16.msra.mxu0 0
        %1489 = vmatprep.subr.bf16.mxu0 0
        %1490 = vmatpush1.bf16.msra.mxu0 %v1473
        %1491 = vmatprep.subr.bf16.mxu0 0
        %1492 = vmatpush1.bf16.msra.mxu0 %v1472
        %1493 = vmatprep.subr.bf16.mxu0 0
        %1494 = vmatpush1.bf16.msra.mxu0 %v1471
        %1495 = vmatprep.subr.bf16.mxu0 0
        %1496 = vmatpush1.bf16.msra.mxu0 %v1470
        %1497 = vmatprep.subr.bf16.mxu0 0
        %1498 = vmatpush2.bf16.msra.mxu0 0
        %1499 = vmatprep.subr.bf16.mxu0 0
        %1500 = vmatpush2.bf16.msra.mxu0 0
        %1501 = vmatprep.subr.bf16.mxu0 0
        %1502 = vmatpush2.bf16.msra.mxu0 0
        %1503 = vmatprep.subr.bf16.mxu0 0
        %1504 = vmatpush2.bf16.msra.mxu0 0
        %1505 = vmatprep.subr.bf16.mxu0 0
        %1506 = vmatpush2.bf16.msra.mxu0 0
        %1507 = vmatprep.subr.bf16.mxu0 0
        %1508 = vmatpush2.bf16.msra.mxu0 0
        %1509 = vmatprep.subr.bf16.mxu0 0
        %1510 = vmatpush2.bf16.msra.mxu0 0
        %1511 = vmatprep.subr.bf16.mxu0 0
        %1512 = vmatpush2.bf16.msra.mxu0 0
        %1513 = vmatprep.mubr.bf16.mxu0 0
        %1514 = vmatmul.mubr.bf16.gmra.mxu0 %v1479
        %v1515 = vpop.f32.mrf.mxu0
        %v1516 = vadd.f32 %v1452, %v1515
        %v1517 = vpop.f32.mrf.mxu0
        %v1518 = vpop.f32.mrf.mxu0
        %v1519 = vpop.f32.mrf.mxu0
        %1520 = vdwg.mxu0
        %v1521 = vadd.f32 %v721, %v1516
        %v1522 = vld [vmem:[%s12] sm:$0x1]
        %v1523 = vld [vmem:[%s13] sm:$0x1]
        %v1524 = vsel %vm768, %v1521, 0.0
        %1525 = vadd.xlane.f32.xlu0 %v1524
        %v1526 = vpop.xlane.xlu0 %1525
        %v1527 = vrcp.pop 64.0
        %v1528 = vmul.f32 %v1526, %v1527
        %v1529 = vsub.f32 %v1521, %v1528
        %v1530 = vmul.f32 %v1529, %v1529
        %v1531 = vsel %vm768, %v1530, 0.0
        %1532 = vadd.xlane.f32.xlu0 %v1531
        %v1533 = vpop.xlane.xlu0 %1532
        %v1534 = vmul.f32 %v1533, %v1527
        %v1535 = vadd.f32 %v1534, 1e-05
        %v1536 = vrsqrt.pop %v1535
        %v1537 = vmul.f32 %v1529, %v1536
        %v1539 = vlaneseq
        %v1540 = vshrl.u32 %v1539, 7
        %v1541 = vsub.s32 0, %v1540
        %v1542 = vrot.slane %v1522, %v1541
        %v1544 = vmul.f32 %v1537, %v1542
        %v1546 = vlaneseq
        %v1547 = vshrl.u32 %v1546, 7
        %v1548 = vsub.s32 0, %v1547
        %v1549 = vrot.slane %v1523, %v1548
        %v1551 = vadd.f32 %v1544, %v1549
        %v1552 = vpack.c.bf16 %v1551, %v1551
        %v1553 = vld [vmem:[#allocation8] sm:$0xf]
        %v1554 = vld [vmem:[#allocation8 + $0x4] sm:$0xf]
        %v1555 = vld [vmem:[#allocation8 + $0x8] sm:$0xf]
        %v1556 = vld [vmem:[#allocation8 + $0xc] sm:$0xf]
        %v1557 = vld [vmem:[#allocation8 + $0x10] sm:$0xf]
        %v1558 = vld [vmem:[#allocation8 + $0x14] sm:$0xf]
        %v1559 = vld [vmem:[#allocation8 + $0x18] sm:$0xf]
        %v1560 = vld [vmem:[#allocation8 + $0x1c] sm:$0xf]
        %v1561 = vld [vmem:[%s17] sm:$0x1]
        %v1563 = vlaneseq
        %v1564 = vshrl.u32 %v1563, 7
        %v1565 = vsub.s32 0, %v1564
        %v1566 = vrot.slane %v1561, %v1565
        %v1576 = vunpack.c.l.b16 %v1553
        %v1577 = vunpack.c.l.b16 %v1554
        %v1578 = vunpack.c.l.b16 %v1555
        %v1579 = vunpack.c.l.b16 %v1556
        %v1580 = vunpack.c.l.b16 %v1557
        %v1581 = vunpack.c.l.b16 %v1558
        %v1582 = vunpack.c.l.b16 %v1559
        %v1583 = vunpack.c.l.b16 %v1560
        %v1584 = vpack.c.b16 %v1577, %v1576
        %v1585 = vpack.c.b16 %v1579, %v1578
        %v1586 = vpack.c.b16 %v1581, %v1580
        %v1587 = vpack.c.b16 %v1583, %v1582
        %v1593 = vsel %vm768, %v1552, 0
        %1595 = vmatprep.subr.bf16.mxu0 0
        %1596 = vmatpush1.bf16.msra.mxu0 0
        %1597 = vmatprep.subr.bf16.mxu0 0
        %1598 = vmatpush1.bf16.msra.mxu0 0
        %1599 = vmatprep.subr.bf16.mxu0 0
        %1600 = vmatpush1.bf16.msra.mxu0 0
        %1601 = vmatprep.subr.bf16.mxu0 0
        %1602 = vmatpush1.bf16.msra.mxu0 0
        %1603 = vmatprep.subr.bf16.mxu0 0
        %1604 = vmatpush1.bf16.msra.mxu0 %v1587
        %1605 = vmatprep.subr.bf16.mxu0 0
        %1606 = vmatpush1.bf16.msra.mxu0 %v1586
        %1607 = vmatprep.subr.bf16.mxu0 0
        %1608 = vmatpush1.bf16.msra.mxu0 %v1585
        %1609 = vmatprep.subr.bf16.mxu0 0
        %1610 = vmatpush1.bf16.msra.mxu0 %v1584
        %1611 = vmatprep.subr.bf16.mxu0 0
        %1612 = vmatpush2.bf16.msra.mxu0 0
        %1613 = vmatprep.subr.bf16.mxu0 0
        %1614 = vmatpush2.bf16.msra.mxu0 0
        %1615 = vmatprep.subr.bf16.mxu0 0
        %1616 = vmatpush2.bf16.msra.mxu0 0
        %1617 = vmatprep.subr.bf16.mxu0 0
        %1618 = vmatpush2.bf16.msra.mxu0 0
        %1619 = vmatprep.subr.bf16.mxu0 0
        %1620 = vmatpush2.bf16.msra.mxu0 0
        %1621 = vmatprep.subr.bf16.mxu0 0
        %1622 = vmatpush2.bf16.msra.mxu0 0
        %1623 = vmatprep.subr.bf16.mxu0 0
        %1624 = vmatpush2.bf16.msra.mxu0 0
        %1625 = vmatprep.subr.bf16.mxu0 0
        %1626 = vmatpush2.bf16.msra.mxu0 0
        %1627 = vmatprep.mubr.bf16.mxu0 0
        %1628 = vmatmul.mubr.bf16.gmra.mxu0 %v1593
        %v1629 = vpop.f32.mrf.mxu0
        %v1630 = vadd.f32 %v1566, %v1629
        %v1631 = vpop.f32.mrf.mxu0
        %v1632 = vpop.f32.mrf.mxu0
        %v1633 = vpop.f32.mrf.mxu0
        %1634 = vdwg.mxu0
        %v1635 = vmax.f32 %v1630, 0.0
        %v1636 = vpack.c.bf16 %v1635, %v1635
        %v1637 = vld [vmem:[%s18] sm:$0xf]
        %v1638 = vld [vmem:[%s18 + $0x4] sm:$0xf]
        %v1639 = vld [vmem:[%s18 + $0x8] sm:$0xf]
        %v1640 = vld [vmem:[%s18 + $0xc] sm:$0xf]
        %v1641 = vld [vmem:[%s18 + $0x10] sm:$0xf]
        %v1642 = vld [vmem:[%s18 + $0x14] sm:$0xf]
        %v1643 = vld [vmem:[%s18 + $0x18] sm:$0xf]
        %v1644 = vld [vmem:[%s18 + $0x1c] sm:$0xf]
        %v1645 = vld [vmem:[%s18 + $0x20] sm:$0xf]
        %v1646 = vld [vmem:[%s18 + $0x24] sm:$0xf]
        %v1647 = vld [vmem:[%s18 + $0x28] sm:$0xf]
        %v1648 = vld [vmem:[%s18 + $0x2c] sm:$0xf]
        %v1649 = vld [vmem:[%s18 + $0x30] sm:$0xf]
        %v1650 = vld [vmem:[%s18 + $0x34] sm:$0xf]
        %v1651 = vld [vmem:[%s18 + $0x38] sm:$0xf]
        %v1652 = vld [vmem:[%s18 + $0x3c] sm:$0xf]
        %v1653 = vld [vmem:[%s19] sm:$0x1]
        %v1655 = vlaneseq
        %v1656 = vshrl.u32 %v1655, 7
        %v1657 = vsub.s32 0, %v1656
        %v1658 = vrot.slane %v1653, %v1657
        %v1676 = vunpack.c.l.b16 %v1637
        %v1677 = vunpack.c.l.b16 %v1638
        %v1678 = vunpack.c.l.b16 %v1639
        %v1679 = vunpack.c.l.b16 %v1640
        %v1680 = vunpack.c.l.b16 %v1641
        %v1681 = vunpack.c.l.b16 %v1642
        %v1682 = vunpack.c.l.b16 %v1643
        %v1683 = vunpack.c.l.b16 %v1644
        %v1684 = vunpack.c.l.b16 %v1645
        %v1685 = vunpack.c.l.b16 %v1646
        %v1686 = vunpack.c.l.b16 %v1647
        %v1687 = vunpack.c.l.b16 %v1648
        %v1688 = vunpack.c.l.b16 %v1649
        %v1689 = vunpack.c.l.b16 %v1650
        %v1690 = vunpack.c.l.b16 %v1651
        %v1691 = vunpack.c.l.b16 %v1652
        %v1692 = vpack.c.b16 %v1677, %v1676
        %v1693 = vpack.c.b16 %v1679, %v1678
        %v1694 = vpack.c.b16 %v1681, %v1680
        %v1695 = vpack.c.b16 %v1683, %v1682
        %v1696 = vpack.c.b16 %v1685, %v1684
        %v1697 = vpack.c.b16 %v1687, %v1686
        %v1698 = vpack.c.b16 %v1689, %v1688
        %v1699 = vpack.c.b16 %v1691, %v1690
        %1708 = vmatprep.subr.bf16.mxu0 0
        %1709 = vmatpush1.bf16.msra.mxu0 %v1699
        %1710 = vmatprep.subr.bf16.mxu0 0
        %1711 = vmatpush1.bf16.msra.mxu0 %v1698
        %1712 = vmatprep.subr.bf16.mxu0 0
        %1713 = vmatpush1.bf16.msra.mxu0 %v1697
        %1714 = vmatprep.subr.bf16.mxu0 0
        %1715 = vmatpush1.bf16.msra.mxu0 %v1696
        %1716 = vmatprep.subr.bf16.mxu0 0
        %1717 = vmatpush1.bf16.msra.mxu0 %v1695
        %1718 = vmatprep.subr.bf16.mxu0 0
        %1719 = vmatpush1.bf16.msra.mxu0 %v1694
        %1720 = vmatprep.subr.bf16.mxu0 0
        %1721 = vmatpush1.bf16.msra.mxu0 %v1693
        %1722 = vmatprep.subr.bf16.mxu0 0
        %1723 = vmatpush1.bf16.msra.mxu0 %v1692
        %1724 = vmatprep.subr.bf16.mxu0 0
        %1725 = vmatpush2.bf16.msra.mxu0 0
        %1726 = vmatprep.subr.bf16.mxu0 0
        %1727 = vmatpush2.bf16.msra.mxu0 0
        %1728 = vmatprep.subr.bf16.mxu0 0
        %1729 = vmatpush2.bf16.msra.mxu0 0
        %1730 = vmatprep.subr.bf16.mxu0 0
        %1731 = vmatpush2.bf16.msra.mxu0 0
        %1732 = vmatprep.subr.bf16.mxu0 0
        %1733 = vmatpush2.bf16.msra.mxu0 0
        %1734 = vmatprep.subr.bf16.mxu0 0
        %1735 = vmatpush2.bf16.msra.mxu0 0
        %1736 = vmatprep.subr.bf16.mxu0 0
        %1737 = vmatpush2.bf16.msra.mxu0 0
        %1738 = vmatprep.subr.bf16.mxu0 0
        %1739 = vmatpush2.bf16.msra.mxu0 0
        %1740 = vmatprep.mubr.bf16.mxu0 0
        %1741 = vmatmul.mubr.bf16.gmra.mxu0 %v1636
        %v1742 = vpop.f32.mrf.mxu0
        %v1743 = vadd.f32 %v1658, %v1742
        %v1744 = vpop.f32.mrf.mxu0
        %v1745 = vpop.f32.mrf.mxu0
        %v1746 = vpop.f32.mrf.mxu0
        %1747 = vdwg.mxu0
        %v1748 = vadd.f32 %v1551, %v1743
        %v1749 = vld [vmem:[%s14] sm:$0x1]
        %v1750 = vld [vmem:[%s15] sm:$0x1]
        %v1751 = vsel %vm768, %v1748, 0.0
        %1752 = vadd.xlane.f32.xlu0 %v1751
        %v1753 = vpop.xlane.xlu0 %1752
        %v1754 = vmul.f32 %v1753, %v1527
        %v1755 = vsub.f32 %v1748, %v1754
        %v1756 = vmul.f32 %v1755, %v1755
        %v1757 = vsel %vm768, %v1756, 0.0
        %1758 = vadd.xlane.f32.xlu0 %v1757
        %v1759 = vpop.xlane.xlu0 %1758
        %v1760 = vmul.f32 %v1759, %v1527
        %v1761 = vadd.f32 %v1760, 1e-05
        %v1762 = vrsqrt.pop %v1761
        %v1763 = vmul.f32 %v1755, %v1762
        %v1765 = vlaneseq
        %v1766 = vshrl.u32 %v1765, 7
        %v1767 = vsub.s32 0, %v1766
        %v1768 = vrot.slane %v1749, %v1767
        %v1770 = vmul.f32 %v1763, %v1768
        %v1772 = vlaneseq
        %v1773 = vshrl.u32 %v1772, 7
        %v1774 = vsub.s32 0, %v1773
        %v1775 = vrot.slane %v1750, %v1774
        %v1777 = vadd.f32 %v1770, %v1775
        %v1778 = vpack.c.bf16 %v1777, %v1777
        %s1779 = scalar_lea.vmem %s4, 32
        %v1780 = vld [vmem:[%s1779] sm:$0xf]
        %v1781 = vld [vmem:[%s1779 + $0x4] sm:$0xf]
        %v1782 = vld [vmem:[%s1779 + $0x8] sm:$0xf]
        %v1783 = vld [vmem:[%s1779 + $0xc] sm:$0xf]
        %v1784 = vld [vmem:[%s1779 + $0x10] sm:$0xf]
        %v1785 = vld [vmem:[%s1779 + $0x14] sm:$0xf]
        %v1786 = vld [vmem:[%s1779 + $0x18] sm:$0xf]
        %v1787 = vld [vmem:[%s1779 + $0x1c] sm:$0xf]
        %s1788 = scalar_lea.vmem %s5, 1
        %v1789 = vld [vmem:[%s1788] sm:$0x1]
        %v1791 = vlaneseq
        %v1792 = vshrl.u32 %v1791, 7
        %v1793 = vsub.s32 0, %v1792
        %v1794 = vrot.slane %v1789, %v1793
        %v1804 = vunpack.c.l.b16 %v1780
        %v1805 = vunpack.c.l.b16 %v1781
        %v1806 = vunpack.c.l.b16 %v1782
        %v1807 = vunpack.c.l.b16 %v1783
        %v1808 = vunpack.c.l.b16 %v1784
        %v1809 = vunpack.c.l.b16 %v1785
        %v1810 = vunpack.c.l.b16 %v1786
        %v1811 = vunpack.c.l.b16 %v1787
        %v1812 = vpack.c.b16 %v1805, %v1804
        %v1813 = vpack.c.b16 %v1807, %v1806
        %v1814 = vpack.c.b16 %v1809, %v1808
        %v1815 = vpack.c.b16 %v1811, %v1810
        %v1821 = vsel %vm768, %v1778, 0
        %1823 = vmatprep.subr.bf16.mxu0 0
        %1824 = vmatpush1.bf16.msra.mxu0 0
        %1825 = vmatprep.subr.bf16.mxu0 0
        %1826 = vmatpush1.bf16.msra.mxu0 0
        %1827 = vmatprep.subr.bf16.mxu0 0
        %1828 = vmatpush1.bf16.msra.mxu0 0
        %1829 = vmatprep.subr.bf16.mxu0 0
        %1830 = vmatpush1.bf16.msra.mxu0 0
        %1831 = vmatprep.subr.bf16.mxu0 0
        %1832 = vmatpush1.bf16.msra.mxu0 %v1815
        %1833 = vmatprep.subr.bf16.mxu0 0
        %1834 = vmatpush1.bf16.msra.mxu0 %v1814
        %1835 = vmatprep.subr.bf16.mxu0 0
        %1836 = vmatpush1.bf16.msra.mxu0 %v1813
        %1837 = vmatprep.subr.bf16.mxu0 0
        %1838 = vmatpush1.bf16.msra.mxu0 %v1812
        %1839 = vmatprep.subr.bf16.mxu0 0
        %1840 = vmatpush2.bf16.msra.mxu0 0
        %1841 = vmatprep.subr.bf16.mxu0 0
        %1842 = vmatpush2.bf16.msra.mxu0 0
        %1843 = vmatprep.subr.bf16.mxu0 0
        %1844 = vmatpush2.bf16.msra.mxu0 0
        %1845 = vmatprep.subr.bf16.mxu0 0
        %1846 = vmatpush2.bf16.msra.mxu0 0
        %1847 = vmatprep.subr.bf16.mxu0 0
        %1848 = vmatpush2.bf16.msra.mxu0 0
        %1849 = vmatprep.subr.bf16.mxu0 0
        %1850 = vmatpush2.bf16.msra.mxu0 0
        %1851 = vmatprep.subr.bf16.mxu0 0
        %1852 = vmatpush2.bf16.msra.mxu0 0
        %1853 = vmatprep.subr.bf16.mxu0 0
        %1854 = vmatpush2.bf16.msra.mxu0 0
        %1855 = vmatprep.mubr.bf16.mxu0 0
        %1856 = vmatmul.mubr.bf16.gmra.mxu0 %v1821
        %v1857 = vpop.f32.mrf.mxu0
        %v1858 = vadd.f32 %v1794, %v1857
        %v1859 = vpop.f32.mrf.mxu0
        %v1860 = vpop.f32.mrf.mxu0
        %v1861 = vpop.f32.mrf.mxu0
        %1862 = vdwg.mxu0
        %s1863 = scalar_lea.vmem %s6, 32
        %v1864 = vld [vmem:[%s1863] sm:$0xf]
        %v1865 = vld [vmem:[%s1863 + $0x4] sm:$0xf]
        %v1866 = vld [vmem:[%s1863 + $0x8] sm:$0xf]
        %v1867 = vld [vmem:[%s1863 + $0xc] sm:$0xf]
        %v1868 = vld [vmem:[%s1863 + $0x10] sm:$0xf]
        %v1869 = vld [vmem:[%s1863 + $0x14] sm:$0xf]
        %v1870 = vld [vmem:[%s1863 + $0x18] sm:$0xf]
        %v1871 = vld [vmem:[%s1863 + $0x1c] sm:$0xf]
        %s1872 = scalar_lea.vmem %s7, 1
        %v1873 = vld [vmem:[%s1872] sm:$0x1]
        %v1875 = vlaneseq
        %v1876 = vshrl.u32 %v1875, 7
        %v1877 = vsub.s32 0, %v1876
        %v1878 = vrot.slane %v1873, %v1877
        %v1888 = vunpack.c.l.b16 %v1864
        %v1889 = vunpack.c.l.b16 %v1865
        %v1890 = vunpack.c.l.b16 %v1866
        %v1891 = vunpack.c.l.b16 %v1867
        %v1892 = vunpack.c.l.b16 %v1868
        %v1893 = vunpack.c.l.b16 %v1869
        %v1894 = vunpack.c.l.b16 %v1870
        %v1895 = vunpack.c.l.b16 %v1871
        %v1896 = vpack.c.b16 %v1889, %v1888
        %v1897 = vpack.c.b16 %v1891, %v1890
        %v1898 = vpack.c.b16 %v1893, %v1892
        %v1899 = vpack.c.b16 %v1895, %v1894
        %1904 = vmatprep.subr.bf16.mxu0 0
        %1905 = vmatpush1.bf16.msra.mxu0 0
        %1906 = vmatprep.subr.bf16.mxu0 0
        %1907 = vmatpush1.bf16.msra.mxu0 0
        %1908 = vmatprep.subr.bf16.mxu0 0
        %1909 = vmatpush1.bf16.msra.mxu0 0
        %1910 = vmatprep.subr.bf16.mxu0 0
        %1911 = vmatpush1.bf16.msra.mxu0 0
        %1912 = vmatprep.subr.bf16.mxu0 0
        %1913 = vmatpush1.bf16.msra.mxu0 %v1899
        %1914 = vmatprep.subr.bf16.mxu0 0
        %1915 = vmatpush1.bf16.msra.mxu0 %v1898
        %1916 = vmatprep.subr.bf16.mxu0 0
        %1917 = vmatpush1.bf16.msra.mxu0 %v1897
        %1918 = vmatprep.subr.bf16.mxu0 0
        %1919 = vmatpush1.bf16.msra.mxu0 %v1896
        %1920 = vmatprep.subr.bf16.mxu0 0
        %1921 = vmatpush2.bf16.msra.mxu0 0
        %1922 = vmatprep.subr.bf16.mxu0 0
        %1923 = vmatpush2.bf16.msra.mxu0 0
        %1924 = vmatprep.subr.bf16.mxu0 0
        %1925 = vmatpush2.bf16.msra.mxu0 0
        %1926 = vmatprep.subr.bf16.mxu0 0
        %1927 = vmatpush2.bf16.msra.mxu0 0
        %1928 = vmatprep.subr.bf16.mxu0 0
        %1929 = vmatpush2.bf16.msra.mxu0 0
        %1930 = vmatprep.subr.bf16.mxu0 0
        %1931 = vmatpush2.bf16.msra.mxu0 0
        %1932 = vmatprep.subr.bf16.mxu0 0
        %1933 = vmatpush2.bf16.msra.mxu0 0
        %1934 = vmatprep.subr.bf16.mxu0 0
        %1935 = vmatpush2.bf16.msra.mxu0 0
        %1936 = vmatprep.mubr.bf16.mxu0 0
        %1937 = vmatmul.mubr.bf16.gmra.mxu0 %v1821
        %v1938 = vpop.f32.mrf.mxu0
        %v1939 = vadd.f32 %v1878, %v1938
        %v1940 = vpop.f32.mrf.mxu0
        %v1941 = vpop.f32.mrf.mxu0
        %v1942 = vpop.f32.mrf.mxu0
        %1943 = vdwg.mxu0
        %s1944 = scalar_lea.vmem %s8, 32
        %v1945 = vld [vmem:[%s1944] sm:$0xf]
        %v1946 = vld [vmem:[%s1944 + $0x4] sm:$0xf]
        %v1947 = vld [vmem:[%s1944 + $0x8] sm:$0xf]
        %v1948 = vld [vmem:[%s1944 + $0xc] sm:$0xf]
        %v1949 = vld [vmem:[%s1944 + $0x10] sm:$0xf]
        %v1950 = vld [vmem:[%s1944 + $0x14] sm:$0xf]
        %v1951 = vld [vmem:[%s1944 + $0x18] sm:$0xf]
        %v1952 = vld [vmem:[%s1944 + $0x1c] sm:$0xf]
        %s1953 = scalar_lea.vmem %s9, 1
        %v1954 = vld [vmem:[%s1953] sm:$0x1]
        %v1956 = vlaneseq
        %v1957 = vshrl.u32 %v1956, 7
        %v1958 = vsub.s32 0, %v1957
        %v1959 = vrot.slane %v1954, %v1958
        %v1969 = vunpack.c.l.b16 %v1945
        %v1970 = vunpack.c.l.b16 %v1946
        %v1971 = vunpack.c.l.b16 %v1947
        %v1972 = vunpack.c.l.b16 %v1948
        %v1973 = vunpack.c.l.b16 %v1949
        %v1974 = vunpack.c.l.b16 %v1950
        %v1975 = vunpack.c.l.b16 %v1951
        %v1976 = vunpack.c.l.b16 %v1952
        %v1977 = vpack.c.b16 %v1970, %v1969
        %v1978 = vpack.c.b16 %v1972, %v1971
        %v1979 = vpack.c.b16 %v1974, %v1973
        %v1980 = vpack.c.b16 %v1976, %v1975
        %1985 = vmatprep.subr.bf16.mxu0 0
        %1986 = vmatpush1.bf16.msra.mxu0 0
        %1987 = vmatprep.subr.bf16.mxu0 0
        %1988 = vmatpush1.bf16.msra.mxu0 0
        %1989 = vmatprep.subr.bf16.mxu0 0
        %1990 = vmatpush1.bf16.msra.mxu0 0
        %1991 = vmatprep.subr.bf16.mxu0 0
        %1992 = vmatpush1.bf16.msra.mxu0 0
        %1993 = vmatprep.subr.bf16.mxu0 0
        %1994 = vmatpush1.bf16.msra.mxu0 %v1980
        %1995 = vmatprep.subr.bf16.mxu0 0
        %1996 = vmatpush1.bf16.msra.mxu0 %v1979
        %1997 = vmatprep.subr.bf16.mxu0 0
        %1998 = vmatpush1.bf16.msra.mxu0 %v1978
        %1999 = vmatprep.subr.bf16.mxu0 0
        %2000 = vmatpush1.bf16.msra.mxu0 %v1977
        %2001 = vmatprep.subr.bf16.mxu0 0
        %2002 = vmatpush2.bf16.msra.mxu0 0
        %2003 = vmatprep.subr.bf16.mxu0 0
        %2004 = vmatpush2.bf16.msra.mxu0 0
        %2005 = vmatprep.subr.bf16.mxu0 0
        %2006 = vmatpush2.bf16.msra.mxu0 0
        %2007 = vmatprep.subr.bf16.mxu0 0
        %2008 = vmatpush2.bf16.msra.mxu0 0
        %2009 = vmatprep.subr.bf16.mxu0 0
        %2010 = vmatpush2.bf16.msra.mxu0 0
        %2011 = vmatprep.subr.bf16.mxu0 0
        %2012 = vmatpush2.bf16.msra.mxu0 0
        %2013 = vmatprep.subr.bf16.mxu0 0
        %2014 = vmatpush2.bf16.msra.mxu0 0
        %2015 = vmatprep.subr.bf16.mxu0 0
        %2016 = vmatpush2.bf16.msra.mxu0 0
        %2017 = vmatprep.mubr.bf16.mxu0 0
        %2018 = vmatmul.mubr.bf16.gmra.mxu0 %v1821
        %v2019 = vpop.f32.mrf.mxu0
        %v2020 = vadd.f32 %v1959, %v2019
        %v2021 = vpop.f32.mrf.mxu0
        %v2022 = vpop.f32.mrf.mxu0
        %v2023 = vpop.f32.mrf.mxu0
        %2024 = vdwg.mxu0
        %v2025 = vpack.c.bf16 %v1858, %v1858
        %v2026 = vpack.c.bf16 %v1939, %v1939
        %v2027 = vpack.c.bf16 %v2020, %v2020
        %v2029 = vsel %vm973, %v2025, 0
        %v2032 = vsel %vm973, %v2026, 0
        %2034 = vmatprep.subr.bf16.mxu0 0
        %2035 = vmatpush1.bf16.xpose.msra.mxu0 0
        %2036 = vmatprep.subr.bf16.mxu0 0
        %2037 = vmatpush1.bf16.xpose.msra.mxu0 0
        %2038 = vmatprep.subr.bf16.mxu0 0
        %2039 = vmatpush1.bf16.xpose.msra.mxu0 0
        %2040 = vmatprep.subr.bf16.mxu0 0
        %2041 = vmatpush1.bf16.xpose.msra.mxu0 0
        %2042 = vmatprep.subr.bf16.mxu0 0
        %2043 = vmatpush1.bf16.xpose.msra.mxu0 0
        %2044 = vmatprep.subr.bf16.mxu0 0
        %2045 = vmatpush1.bf16.xpose.msra.mxu0 0
        %2046 = vmatprep.subr.bf16.mxu0 0
        %2047 = vmatpush1.bf16.xpose.msra.mxu0 0
        %2048 = vmatprep.subr.bf16.mxu0 0
        %2049 = vmatpush1.bf16.xpose.msra.mxu0 %v2032
        %2050 = vmatprep.subr.bf16.mxu0 0
        %2051 = vmatpush2.bf16.xpose.msra.mxu0 0
        %2052 = vmatprep.subr.bf16.mxu0 0
        %2053 = vmatpush2.bf16.xpose.msra.mxu0 0
        %2054 = vmatprep.subr.bf16.mxu0 0
        %2055 = vmatpush2.bf16.xpose.msra.mxu0 0
        %2056 = vmatprep.subr.bf16.mxu0 0
        %2057 = vmatpush2.bf16.xpose.msra.mxu0 0
        %2058 = vmatprep.subr.bf16.mxu0 0
        %2059 = vmatpush2.bf16.xpose.msra.mxu0 0
        %2060 = vmatprep.subr.bf16.mxu0 0
        %2061 = vmatpush2.bf16.xpose.msra.mxu0 0
        %2062 = vmatprep.subr.bf16.mxu0 0
        %2063 = vmatpush2.bf16.xpose.msra.mxu0 0
        %2064 = vmatprep.subr.bf16.mxu0 0
        %2065 = vmatpush2.bf16.xpose.msra.mxu0 0
        %2066 = vmatprep.mubr.bf16.mxu0 0
        %2067 = vmatmul.mubr.bf16.gmra.mxu0 %v2029
        %v2068 = vpop.f32.mrf.mxu0
        %v2069 = vadd.f32 0.0, %v2068
        %v2070 = vpop.f32.mrf.mxu0
        %v2071 = vpop.f32.mrf.mxu0
        %v2072 = vpop.f32.mrf.mxu0
        %2073 = vdwg.mxu0
        %v2074 = vmul.f32 %v2069, 0.25
        %v2075 = vadd.f32 %v2074, %v727
        %v2076 = vsel %vm1022, %v2075, -inf
        %2077 = vmax.xlane.f32.xlu0 %v2076
        %v2078 = vpop.xlane.xlu0 %2077
        %v2079 = vsub.f32 %v2075, %v2078
        %v2080 = vmul.f32 %v2079, 1.442695
        %v2081 = vpow.pop %v2080
        %v2082 = vsel %vm1022, %v2081, 0.0
        %2083 = vadd.xlane.f32.xlu0 %v2082
        %v2084 = vpop.xlane.xlu0 %2083
        %v2085 = vrcp.pop %v2084
        %v2086 = vmul.f32 %v2081, %v2085
        %v2087 = vpack.c.bf16 %v2086, %v2086
        %v2089 = vsel %vm1022, %v2087, 0
        %v2092 = vsel %vm1038, %v2027, 0
        %2094 = vmatprep.subr.bf16.mxu0 0
        %2095 = vmatpush1.bf16.msra.mxu0 0
        %2096 = vmatprep.subr.bf16.mxu0 0
        %2097 = vmatpush1.bf16.msra.mxu0 0
        %2098 = vmatprep.subr.bf16.mxu0 0
        %2099 = vmatpush1.bf16.msra.mxu0 0
        %2100 = vmatprep.subr.bf16.mxu0 0
        %2101 = vmatpush1.bf16.msra.mxu0 0
        %2102 = vmatprep.subr.bf16.mxu0 0
        %2103 = vmatpush1.bf16.msra.mxu0 0
        %2104 = vmatprep.subr.bf16.mxu0 0
        %2105 = vmatpush1.bf16.msra.mxu0 0
        %2106 = vmatprep.subr.bf16.mxu0 0
        %2107 = vmatpush1.bf16.msra.mxu0 0
        %2108 = vmatprep.subr.bf16.mxu0 0
        %2109 = vmatpush1.bf16.msra.mxu0 %v2092
        %2110 = vmatprep.subr.bf16.mxu0 0
        %2111 = vmatpush2.bf16.msra.mxu0 0
        %2112 = vmatprep.subr.bf16.mxu0 0
        %2113 = vmatpush2.bf16.msra.mxu0 0
        %2114 = vmatprep.subr.bf16.mxu0 0
        %2115 = vmatpush2.bf16.msra.mxu0 0
        %2116 = vmatprep.subr.bf16.mxu0 0
        %2117 = vmatpush2.bf16.msra.mxu0 0
        %2118 = vmatprep.subr.bf16.mxu0 0
        %2119 = vmatpush2.bf16.msra.mxu0 0
        %2120 = vmatprep.subr.bf16.mxu0 0
        %2121 = vmatpush2.bf16.msra.mxu0 0
        %2122 = vmatprep.subr.bf16.mxu0 0
        %2123 = vmatpush2.bf16.msra.mxu0 0
        %2124 = vmatprep.subr.bf16.mxu0 0
        %2125 = vmatpush2.bf16.msra.mxu0 0
        %2126 = vmatprep.mubr.bf16.mxu0 0
        %2127 = vmatmul.mubr.bf16.gmra.mxu0 %v2089
        %v2128 = vpop.f32.mrf.mxu0
        %v2129 = vadd.f32 0.0, %v2128
        %v2130 = vpop.f32.mrf.mxu0
        %v2131 = vpop.f32.mrf.mxu0
        %v2132 = vpop.f32.mrf.mxu0
        %2133 = vdwg.mxu0
        %2135 = vrot.lane.b32.xlu0 %v2025, 112
        %v2136 = vpop.permute.xlu0 %2135
        %2138 = vrot.lane.b32.xlu0 %v2026, 112
        %v2139 = vpop.permute.xlu0 %2138
        %v2141 = vsel %vm973, %v2136, 0
        %v2144 = vsel %vm973, %v2139, 0
        %2146 = vmatprep.subr.bf16.mxu0 0
        %2147 = vmatpush1.bf16.xpose.msra.mxu0 0
        %2148 = vmatprep.subr.bf16.mxu0 0
        %2149 = vmatpush1.bf16.xpose.msra.mxu0 0
        %2150 = vmatprep.subr.bf16.mxu0 0
        %2151 = vmatpush1.bf16.xpose.msra.mxu0 0
        %2152 = vmatprep.subr.bf16.mxu0 0
        %2153 = vmatpush1.bf16.xpose.msra.mxu0 0
        %2154 = vmatprep.subr.bf16.mxu0 0
        %2155 = vmatpush1.bf16.xpose.msra.mxu0 0
        %2156 = vmatprep.subr.bf16.mxu0 0
        %2157 = vmatpush1.bf16.xpose.msra.mxu0 0
        %2158 = vmatprep.subr.bf16.mxu0 0
        %2159 = vmatpush1.bf16.xpose.msra.mxu0 0
        %2160 = vmatprep.subr.bf16.mxu0 0
        %2161 = vmatpush1.bf16.xpose.msra.mxu0 %v2144
        %2162 = vmatprep.subr.bf16.mxu0 0
        %2163 = vmatpush2.bf16.xpose.msra.mxu0 0
        %2164 = vmatprep.subr.bf16.mxu0 0
        %2165 = vmatpush2.bf16.xpose.msra.mxu0 0
        %2166 = vmatprep.subr.bf16.mxu0 0
        %2167 = vmatpush2.bf16.xpose.msra.mxu0 0
        %2168 = vmatprep.subr.bf16.mxu0 0
        %2169 = vmatpush2.bf16.xpose.msra.mxu0 0
        %2170 = vmatprep.subr.bf16.mxu0 0
        %2171 = vmatpush2.bf16.xpose.msra.mxu0 0
        %2172 = vmatprep.subr.bf16.mxu0 0
        %2173 = vmatpush2.bf16.xpose.msra.mxu0 0
        %2174 = vmatprep.subr.bf16.mxu0 0
        %2175 = vmatpush2.bf16.xpose.msra.mxu0 0
        %2176 = vmatprep.subr.bf16.mxu0 0
        %2177 = vmatpush2.bf16.xpose.msra.mxu0 0
        %2178 = vmatprep.mubr.bf16.mxu0 0
        %2179 = vmatmul.mubr.bf16.gmra.mxu0 %v2141
        %v2180 = vpop.f32.mrf.mxu0
        %v2181 = vadd.f32 0.0, %v2180
        %v2182 = vpop.f32.mrf.mxu0
        %v2183 = vpop.f32.mrf.mxu0
        %v2184 = vpop.f32.mrf.mxu0
        %2185 = vdwg.mxu0
        %v2186 = vmul.f32 %v2181, 0.25
        %v2187 = vadd.f32 %v2186, %v727
        %v2188 = vsel %vm1022, %v2187, -inf
        %2189 = vmax.xlane.f32.xlu0 %v2188
        %v2190 = vpop.xlane.xlu0 %2189
        %v2191 = vsub.f32 %v2187, %v2190
        %v2192 = vmul.f32 %v2191, 1.442695
        %v2193 = vpow.pop %v2192
        %v2194 = vsel %vm1022, %v2193, 0.0
        %2195 = vadd.xlane.f32.xlu0 %v2194
        %v2196 = vpop.xlane.xlu0 %2195
        %v2197 = vrcp.pop %v2196
        %v2198 = vmul.f32 %v2193, %v2197
        %v2199 = vpack.c.bf16 %v2198, %v2198
        %2201 = vrot.lane.b32.xlu0 %v2027, 112
        %v2202 = vpop.permute.xlu0 %2201
        %v2204 = vsel %vm1022, %v2199, 0
        %v2207 = vsel %vm1038, %v2202, 0
        %2209 = vmatprep.subr.bf16.mxu0 0
        %2210 = vmatpush1.bf16.msra.mxu0 0
        %2211 = vmatprep.subr.bf16.mxu0 0
        %2212 = vmatpush1.bf16.msra.mxu0 0
        %2213 = vmatprep.subr.bf16.mxu0 0
        %2214 = vmatpush1.bf16.msra.mxu0 0
        %2215 = vmatprep.subr.bf16.mxu0 0
        %2216 = vmatpush1.bf16.msra.mxu0 0
        %2217 = vmatprep.subr.bf16.mxu0 0
        %2218 = vmatpush1.bf16.msra.mxu0 0
        %2219 = vmatprep.subr.bf16.mxu0 0
        %2220 = vmatpush1.bf16.msra.mxu0 0
        %2221 = vmatprep.subr.bf16.mxu0 0
        %2222 = vmatpush1.bf16.msra.mxu0 0
        %2223 = vmatprep.subr.bf16.mxu0 0
        %2224 = vmatpush1.bf16.msra.mxu0 %v2207
        %2225 = vmatprep.subr.bf16.mxu0 0
        %2226 = vmatpush2.bf16.msra.mxu0 0
        %2227 = vmatprep.subr.bf16.mxu0 0
        %2228 = vmatpush2.bf16.msra.mxu0 0
        %2229 = vmatprep.subr.bf16.mxu0 0
        %2230 = vmatpush2.bf16.msra.mxu0 0
        %2231 = vmatprep.subr.bf16.mxu0 0
        %2232 = vmatpush2.bf16.msra.mxu0 0
        %2233 = vmatprep.subr.bf16.mxu0 0
        %2234 = vmatpush2.bf16.msra.mxu0 0
        %2235 = vmatprep.subr.bf16.mxu0 0
        %2236 = vmatpush2.bf16.msra.mxu0 0
        %2237 = vmatprep.subr.bf16.mxu0 0
        %2238 = vmatpush2.bf16.msra.mxu0 0
        %2239 = vmatprep.subr.bf16.mxu0 0
        %2240 = vmatpush2.bf16.msra.mxu0 0
        %2241 = vmatprep.mubr.bf16.mxu0 0
        %2242 = vmatmul.mubr.bf16.gmra.mxu0 %v2204
        %v2243 = vpop.f32.mrf.mxu0
        %v2244 = vadd.f32 0.0, %v2243
        %v2245 = vpop.f32.mrf.mxu0
        %v2246 = vpop.f32.mrf.mxu0
        %v2247 = vpop.f32.mrf.mxu0
        %2248 = vdwg.mxu0
        %2249 = vrot.lane.b32.xlu0 %v2025, 96
        %v2250 = vpop.permute.xlu0 %2249
        %2251 = vrot.lane.b32.xlu0 %v2026, 96
        %v2252 = vpop.permute.xlu0 %2251
        %v2254 = vsel %vm973, %v2250, 0
        %v2257 = vsel %vm973, %v2252, 0
        %2259 = vmatprep.subr.bf16.mxu0 0
        %2260 = vmatpush1.bf16.xpose.msra.mxu0 0
        %2261 = vmatprep.subr.bf16.mxu0 0
        %2262 = vmatpush1.bf16.xpose.msra.mxu0 0
        %2263 = vmatprep.subr.bf16.mxu0 0
        %2264 = vmatpush1.bf16.xpose.msra.mxu0 0
        %2265 = vmatprep.subr.bf16.mxu0 0
        %2266 = vmatpush1.bf16.xpose.msra.mxu0 0
        %2267 = vmatprep.subr.bf16.mxu0 0
        %2268 = vmatpush1.bf16.xpose.msra.mxu0 0
        %2269 = vmatprep.subr.bf16.mxu0 0
        %2270 = vmatpush1.bf16.xpose.msra.mxu0 0
        %2271 = vmatprep.subr.bf16.mxu0 0
        %2272 = vmatpush1.bf16.xpose.msra.mxu0 0
        %2273 = vmatprep.subr.bf16.mxu0 0
        %2274 = vmatpush1.bf16.xpose.msra.mxu0 %v2257
        %2275 = vmatprep.subr.bf16.mxu0 0
        %2276 = vmatpush2.bf16.xpose.msra.mxu0 0
        %2277 = vmatprep.subr.bf16.mxu0 0
        %2278 = vmatpush2.bf16.xpose.msra.mxu0 0
        %2279 = vmatprep.subr.bf16.mxu0 0
        %2280 = vmatpush2.bf16.xpose.msra.mxu0 0
        %2281 = vmatprep.subr.bf16.mxu0 0
        %2282 = vmatpush2.bf16.xpose.msra.mxu0 0
        %2283 = vmatprep.subr.bf16.mxu0 0
        %2284 = vmatpush2.bf16.xpose.msra.mxu0 0
        %2285 = vmatprep.subr.bf16.mxu0 0
        %2286 = vmatpush2.bf16.xpose.msra.mxu0 0
        %2287 = vmatprep.subr.bf16.mxu0 0
        %2288 = vmatpush2.bf16.xpose.msra.mxu0 0
        %2289 = vmatprep.subr.bf16.mxu0 0
        %2290 = vmatpush2.bf16.xpose.msra.mxu0 0
        %2291 = vmatprep.mubr.bf16.mxu0 0
        %2292 = vmatmul.mubr.bf16.gmra.mxu0 %v2254
        %v2293 = vpop.f32.mrf.mxu0
        %v2294 = vadd.f32 0.0, %v2293
        %v2295 = vpop.f32.mrf.mxu0
        %v2296 = vpop.f32.mrf.mxu0
        %v2297 = vpop.f32.mrf.mxu0
        %2298 = vdwg.mxu0
        %v2299 = vmul.f32 %v2294, 0.25
        %v2300 = vadd.f32 %v2299, %v727
        %v2301 = vsel %vm1022, %v2300, -inf
        %2302 = vmax.xlane.f32.xlu0 %v2301
        %v2303 = vpop.xlane.xlu0 %2302
        %v2304 = vsub.f32 %v2300, %v2303
        %v2305 = vmul.f32 %v2304, 1.442695
        %v2306 = vpow.pop %v2305
        %v2307 = vsel %vm1022, %v2306, 0.0
        %2308 = vadd.xlane.f32.xlu0 %v2307
        %v2309 = vpop.xlane.xlu0 %2308
        %v2310 = vrcp.pop %v2309
        %v2311 = vmul.f32 %v2306, %v2310
        %v2312 = vpack.c.bf16 %v2311, %v2311
        %2313 = vrot.lane.b32.xlu0 %v2027, 96
        %v2314 = vpop.permute.xlu0 %2313
        %v2316 = vsel %vm1022, %v2312, 0
        %v2319 = vsel %vm1038, %v2314, 0
        %2321 = vmatprep.subr.bf16.mxu0 0
        %2322 = vmatpush1.bf16.msra.mxu0 0
        %2323 = vmatprep.subr.bf16.mxu0 0
        %2324 = vmatpush1.bf16.msra.mxu0 0
        %2325 = vmatprep.subr.bf16.mxu0 0
        %2326 = vmatpush1.bf16.msra.mxu0 0
        %2327 = vmatprep.subr.bf16.mxu0 0
        %2328 = vmatpush1.bf16.msra.mxu0 0
        %2329 = vmatprep.subr.bf16.mxu0 0
        %2330 = vmatpush1.bf16.msra.mxu0 0
        %2331 = vmatprep.subr.bf16.mxu0 0
        %2332 = vmatpush1.bf16.msra.mxu0 0
        %2333 = vmatprep.subr.bf16.mxu0 0
        %2334 = vmatpush1.bf16.msra.mxu0 0
        %2335 = vmatprep.subr.bf16.mxu0 0
        %2336 = vmatpush1.bf16.msra.mxu0 %v2319
        %2337 = vmatprep.subr.bf16.mxu0 0
        %2338 = vmatpush2.bf16.msra.mxu0 0
        %2339 = vmatprep.subr.bf16.mxu0 0
        %2340 = vmatpush2.bf16.msra.mxu0 0
        %2341 = vmatprep.subr.bf16.mxu0 0
        %2342 = vmatpush2.bf16.msra.mxu0 0
        %2343 = vmatprep.subr.bf16.mxu0 0
        %2344 = vmatpush2.bf16.msra.mxu0 0
        %2345 = vmatprep.subr.bf16.mxu0 0
        %2346 = vmatpush2.bf16.msra.mxu0 0
        %2347 = vmatprep.subr.bf16.mxu0 0
        %2348 = vmatpush2.bf16.msra.mxu0 0
        %2349 = vmatprep.subr.bf16.mxu0 0
        %2350 = vmatpush2.bf16.msra.mxu0 0
        %2351 = vmatprep.subr.bf16.mxu0 0
        %2352 = vmatpush2.bf16.msra.mxu0 0
        %2353 = vmatprep.mubr.bf16.mxu0 0
        %2354 = vmatmul.mubr.bf16.gmra.mxu0 %v2316
        %v2355 = vpop.f32.mrf.mxu0
        %v2356 = vadd.f32 0.0, %v2355
        %v2357 = vpop.f32.mrf.mxu0
        %v2358 = vpop.f32.mrf.mxu0
        %v2359 = vpop.f32.mrf.mxu0
        %2360 = vdwg.mxu0
        %2361 = vrot.lane.b32.xlu0 %v2025, 80
        %v2362 = vpop.permute.xlu0 %2361
        %2363 = vrot.lane.b32.xlu0 %v2026, 80
        %v2364 = vpop.permute.xlu0 %2363
        %v2366 = vsel %vm973, %v2362, 0
        %v2369 = vsel %vm973, %v2364, 0
        %2371 = vmatprep.subr.bf16.mxu0 0
        %2372 = vmatpush1.bf16.xpose.msra.mxu0 0
        %2373 = vmatprep.subr.bf16.mxu0 0
        %2374 = vmatpush1.bf16.xpose.msra.mxu0 0
        %2375 = vmatprep.subr.bf16.mxu0 0
        %2376 = vmatpush1.bf16.xpose.msra.mxu0 0
        %2377 = vmatprep.subr.bf16.mxu0 0
        %2378 = vmatpush1.bf16.xpose.msra.mxu0 0
        %2379 = vmatprep.subr.bf16.mxu0 0
        %2380 = vmatpush1.bf16.xpose.msra.mxu0 0
        %2381 = vmatprep.subr.bf16.mxu0 0
        %2382 = vmatpush1.bf16.xpose.msra.mxu0 0
        %2383 = vmatprep.subr.bf16.mxu0 0
        %2384 = vmatpush1.bf16.xpose.msra.mxu0 0
        %2385 = vmatprep.subr.bf16.mxu0 0
        %2386 = vmatpush1.bf16.xpose.msra.mxu0 %v2369
        %2387 = vmatprep.subr.bf16.mxu0 0
        %2388 = vmatpush2.bf16.xpose.msra.mxu0 0
        %2389 = vmatprep.subr.bf16.mxu0 0
        %2390 = vmatpush2.bf16.xpose.msra.mxu0 0
        %2391 = vmatprep.subr.bf16.mxu0 0
        %2392 = vmatpush2.bf16.xpose.msra.mxu0 0
        %2393 = vmatprep.subr.bf16.mxu0 0
        %2394 = vmatpush2.bf16.xpose.msra.mxu0 0
        %2395 = vmatprep.subr.bf16.mxu0 0
        %2396 = vmatpush2.bf16.xpose.msra.mxu0 0
        %2397 = vmatprep.subr.bf16.mxu0 0
        %2398 = vmatpush2.bf16.xpose.msra.mxu0 0
        %2399 = vmatprep.subr.bf16.mxu0 0
        %2400 = vmatpush2.bf16.xpose.msra.mxu0 0
        %2401 = vmatprep.subr.bf16.mxu0 0
        %2402 = vmatpush2.bf16.xpose.msra.mxu0 0
        %2403 = vmatprep.mubr.bf16.mxu0 0
        %2404 = vmatmul.mubr.bf16.gmra.mxu0 %v2366
        %v2405 = vpop.f32.mrf.mxu0
        %v2406 = vadd.f32 0.0, %v2405
        %v2407 = vpop.f32.mrf.mxu0
        %v2408 = vpop.f32.mrf.mxu0
        %v2409 = vpop.f32.mrf.mxu0
        %2410 = vdwg.mxu0
        %v2411 = vmul.f32 %v2406, 0.25
        %v2412 = vadd.f32 %v2411, %v727
        %v2413 = vsel %vm1022, %v2412, -inf
        %2414 = vmax.xlane.f32.xlu0 %v2413
        %v2415 = vpop.xlane.xlu0 %2414
        %v2416 = vsub.f32 %v2412, %v2415
        %v2417 = vmul.f32 %v2416, 1.442695
        %v2418 = vpow.pop %v2417
        %v2419 = vsel %vm1022, %v2418, 0.0
        %2420 = vadd.xlane.f32.xlu0 %v2419
        %v2421 = vpop.xlane.xlu0 %2420
        %v2422 = vrcp.pop %v2421
        %v2423 = vmul.f32 %v2418, %v2422
        %v2424 = vpack.c.bf16 %v2423, %v2423
        %2425 = vrot.lane.b32.xlu0 %v2027, 80
        %v2426 = vpop.permute.xlu0 %2425
        %v2428 = vsel %vm1022, %v2424, 0
        %v2431 = vsel %vm1038, %v2426, 0
        %2433 = vmatprep.subr.bf16.mxu0 0
        %2434 = vmatpush1.bf16.msra.mxu0 0
        %2435 = vmatprep.subr.bf16.mxu0 0
        %2436 = vmatpush1.bf16.msra.mxu0 0
        %2437 = vmatprep.subr.bf16.mxu0 0
        %2438 = vmatpush1.bf16.msra.mxu0 0
        %2439 = vmatprep.subr.bf16.mxu0 0
        %2440 = vmatpush1.bf16.msra.mxu0 0
        %2441 = vmatprep.subr.bf16.mxu0 0
        %2442 = vmatpush1.bf16.msra.mxu0 0
        %2443 = vmatprep.subr.bf16.mxu0 0
        %2444 = vmatpush1.bf16.msra.mxu0 0
        %2445 = vmatprep.subr.bf16.mxu0 0
        %2446 = vmatpush1.bf16.msra.mxu0 0
        %2447 = vmatprep.subr.bf16.mxu0 0
        %2448 = vmatpush1.bf16.msra.mxu0 %v2431
        %2449 = vmatprep.subr.bf16.mxu0 0
        %2450 = vmatpush2.bf16.msra.mxu0 0
        %2451 = vmatprep.subr.bf16.mxu0 0
        %2452 = vmatpush2.bf16.msra.mxu0 0
        %2453 = vmatprep.subr.bf16.mxu0 0
        %2454 = vmatpush2.bf16.msra.mxu0 0
        %2455 = vmatprep.subr.bf16.mxu0 0
        %2456 = vmatpush2.bf16.msra.mxu0 0
        %2457 = vmatprep.subr.bf16.mxu0 0
        %2458 = vmatpush2.bf16.msra.mxu0 0
        %2459 = vmatprep.subr.bf16.mxu0 0
        %2460 = vmatpush2.bf16.msra.mxu0 0
        %2461 = vmatprep.subr.bf16.mxu0 0
        %2462 = vmatpush2.bf16.msra.mxu0 0
        %2463 = vmatprep.subr.bf16.mxu0 0
        %2464 = vmatpush2.bf16.msra.mxu0 0
        %2465 = vmatprep.mubr.bf16.mxu0 0
        %2466 = vmatmul.mubr.bf16.gmra.mxu0 %v2428
        %v2467 = vpop.f32.mrf.mxu0
        %v2468 = vadd.f32 0.0, %v2467
        %v2469 = vpop.f32.mrf.mxu0
        %v2470 = vpop.f32.mrf.mxu0
        %v2471 = vpop.f32.mrf.mxu0
        %2472 = vdwg.mxu0
        %2474 = vrot.lane.b32.xlu0 %v2244, 16
        %v2475 = vpop.permute.xlu0 %2474
        %2478 = vrot.lane.b32.xlu0 %v2356, 32
        %v2479 = vpop.permute.xlu0 %2478
        %2482 = vrot.lane.b32.xlu0 %v2468, 48
        %v2483 = vpop.permute.xlu0 %2482
        %v2485 = vsel %vm973, %v2129, %v2475
        %v2486 = vsel %vm1434, %v2485, %v2479
        %v2487 = vsel %vm1436, %v2486, %v2483
        %v2488 = vpack.c.bf16 %v2487, %v2487
        %s2489 = scalar_lea.vmem [#allocation7], 32
        %v2490 = vld [vmem:[%s2489] sm:$0xf]
        %v2491 = vld [vmem:[%s2489 + $0x4] sm:$0xf]
        %v2492 = vld [vmem:[%s2489 + $0x8] sm:$0xf]
        %v2493 = vld [vmem:[%s2489 + $0xc] sm:$0xf]
        %v2494 = vld [vmem:[%s2489 + $0x10] sm:$0xf]
        %v2495 = vld [vmem:[%s2489 + $0x14] sm:$0xf]
        %v2496 = vld [vmem:[%s2489 + $0x18] sm:$0xf]
        %v2497 = vld [vmem:[%s2489 + $0x1c] sm:$0xf]
        %s2498 = scalar_lea.vmem %s11, 1
        %v2499 = vld [vmem:[%s2498] sm:$0x1]
        %v2501 = vlaneseq
        %v2502 = vshrl.u32 %v2501, 7
        %v2503 = vsub.s32 0, %v2502
        %v2504 = vrot.slane %v2499, %v2503
        %v2514 = vunpack.c.l.b16 %v2490
        %v2515 = vunpack.c.l.b16 %v2491
        %v2516 = vunpack.c.l.b16 %v2492
        %v2517 = vunpack.c.l.b16 %v2493
        %v2518 = vunpack.c.l.b16 %v2494
        %v2519 = vunpack.c.l.b16 %v2495
        %v2520 = vunpack.c.l.b16 %v2496
        %v2521 = vunpack.c.l.b16 %v2497
        %v2522 = vpack.c.b16 %v2515, %v2514
        %v2523 = vpack.c.b16 %v2517, %v2516
        %v2524 = vpack.c.b16 %v2519, %v2518
        %v2525 = vpack.c.b16 %v2521, %v2520
        %v2531 = vsel %vm768, %v2488, 0
        %2533 = vmatprep.subr.bf16.mxu0 0
        %2534 = vmatpush1.bf16.msra.mxu0 0
        %2535 = vmatprep.subr.bf16.mxu0 0
        %2536 = vmatpush1.bf16.msra.mxu0 0
        %2537 = vmatprep.subr.bf16.mxu0 0
        %2538 = vmatpush1.bf16.msra.mxu0 0
        %2539 = vmatprep.subr.bf16.mxu0 0
        %2540 = vmatpush1.bf16.msra.mxu0 0
        %2541 = vmatprep.subr.bf16.mxu0 0
        %2542 = vmatpush1.bf16.msra.mxu0 %v2525
        %2543 = vmatprep.subr.bf16.mxu0 0
        %2544 = vmatpush1.bf16.msra.mxu0 %v2524
        %2545 = vmatprep.subr.bf16.mxu0 0
        %2546 = vmatpush1.bf16.msra.mxu0 %v2523
        %2547 = vmatprep.subr.bf16.mxu0 0
        %2548 = vmatpush1.bf16.msra.mxu0 %v2522
        %2549 = vmatprep.subr.bf16.mxu0 0
        %2550 = vmatpush2.bf16.msra.mxu0 0
        %2551 = vmatprep.subr.bf16.mxu0 0
        %2552 = vmatpush2.bf16.msra.mxu0 0
        %2553 = vmatprep.subr.bf16.mxu0 0
        %2554 = vmatpush2.bf16.msra.mxu0 0
        %2555 = vmatprep.subr.bf16.mxu0 0
        %2556 = vmatpush2.bf16.msra.mxu0 0
        %2557 = vmatprep.subr.bf16.mxu0 0
        %2558 = vmatpush2.bf16.msra.mxu0 0
        %2559 = vmatprep.subr.bf16.mxu0 0
        %2560 = vmatpush2.bf16.msra.mxu0 0
        %2561 = vmatprep.subr.bf16.mxu0 0
        %2562 = vmatpush2.bf16.msra.mxu0 0
        %2563 = vmatprep.subr.bf16.mxu0 0
        %2564 = vmatpush2.bf16.msra.mxu0 0
        %2565 = vmatprep.mubr.bf16.mxu0 0
        %2566 = vmatmul.mubr.bf16.gmra.mxu0 %v2531
        %v2567 = vpop.f32.mrf.mxu0
        %v2568 = vadd.f32 %v2504, %v2567
        %v2569 = vpop.f32.mrf.mxu0
        %v2570 = vpop.f32.mrf.mxu0
        %v2571 = vpop.f32.mrf.mxu0
        %2572 = vdwg.mxu0
        %v2573 = vadd.f32 %v1777, %v2568
        %s2574 = scalar_lea.vmem %s12, 1
        %v2575 = vld [vmem:[%s2574] sm:$0x1]
        %s2576 = scalar_lea.vmem %s13, 1
        %v2577 = vld [vmem:[%s2576] sm:$0x1]
        %v2578 = vsel %vm768, %v2573, 0.0
        %2579 = vadd.xlane.f32.xlu0 %v2578
        %v2580 = vpop.xlane.xlu0 %2579
        %v2581 = vmul.f32 %v2580, %v1527
        %v2582 = vsub.f32 %v2573, %v2581
        %v2583 = vmul.f32 %v2582, %v2582
        %v2584 = vsel %vm768, %v2583, 0.0
        %2585 = vadd.xlane.f32.xlu0 %v2584
        %v2586 = vpop.xlane.xlu0 %2585
        %v2587 = vmul.f32 %v2586, %v1527
        %v2588 = vadd.f32 %v2587, 1e-05
        %v2589 = vrsqrt.pop %v2588
        %v2590 = vmul.f32 %v2582, %v2589
        %v2592 = vlaneseq
        %v2593 = vshrl.u32 %v2592, 7
        %v2594 = vsub.s32 0, %v2593
        %v2595 = vrot.slane %v2575, %v2594
        %v2597 = vmul.f32 %v2590, %v2595
        %v2599 = vlaneseq
        %v2600 = vshrl.u32 %v2599, 7
        %v2601 = vsub.s32 0, %v2600
        %v2602 = vrot.slane %v2577, %v2601
        %v2604 = vadd.f32 %v2597, %v2602
        %v2605 = vpack.c.bf16 %v2604, %v2604
        %s2606 = scalar_lea.vmem [#allocation8], 32
        %v2607 = vld [vmem:[%s2606] sm:$0xf]
        %v2608 = vld [vmem:[%s2606 + $0x4] sm:$0xf]
        %v2609 = vld [vmem:[%s2606 + $0x8] sm:$0xf]
        %v2610 = vld [vmem:[%s2606 + $0xc] sm:$0xf]
        %v2611 = vld [vmem:[%s2606 + $0x10] sm:$0xf]
        %v2612 = vld [vmem:[%s2606 + $0x14] sm:$0xf]
        %v2613 = vld [vmem:[%s2606 + $0x18] sm:$0xf]
        %v2614 = vld [vmem:[%s2606 + $0x1c] sm:$0xf]
        %s2615 = scalar_lea.vmem %s17, 1
        %v2616 = vld [vmem:[%s2615] sm:$0x1]
        %v2618 = vlaneseq
        %v2619 = vshrl.u32 %v2618, 7
        %v2620 = vsub.s32 0, %v2619
        %v2621 = vrot.slane %v2616, %v2620
        %v2631 = vunpack.c.l.b16 %v2607
        %v2632 = vunpack.c.l.b16 %v2608
        %v2633 = vunpack.c.l.b16 %v2609
        %v2634 = vunpack.c.l.b16 %v2610
        %v2635 = vunpack.c.l.b16 %v2611
        %v2636 = vunpack.c.l.b16 %v2612
        %v2637 = vunpack.c.l.b16 %v2613
        %v2638 = vunpack.c.l.b16 %v2614
        %v2639 = vpack.c.b16 %v2632, %v2631
        %v2640 = vpack.c.b16 %v2634, %v2633
        %v2641 = vpack.c.b16 %v2636, %v2635
        %v2642 = vpack.c.b16 %v2638, %v2637
        %v2648 = vsel %vm768, %v2605, 0
        %2650 = vmatprep.subr.bf16.mxu0 0
        %2651 = vmatpush1.bf16.msra.mxu0 0
        %2652 = vmatprep.subr.bf16.mxu0 0
        %2653 = vmatpush1.bf16.msra.mxu0 0
        %2654 = vmatprep.subr.bf16.mxu0 0
        %2655 = vmatpush1.bf16.msra.mxu0 0
        %2656 = vmatprep.subr.bf16.mxu0 0
        %2657 = vmatpush1.bf16.msra.mxu0 0
        %2658 = vmatprep.subr.bf16.mxu0 0
        %2659 = vmatpush1.bf16.msra.mxu0 %v2642
        %2660 = vmatprep.subr.bf16.mxu0 0
        %2661 = vmatpush1.bf16.msra.mxu0 %v2641
        %2662 = vmatprep.subr.bf16.mxu0 0
        %2663 = vmatpush1.bf16.msra.mxu0 %v2640
        %2664 = vmatprep.subr.bf16.mxu0 0
        %2665 = vmatpush1.bf16.msra.mxu0 %v2639
        %2666 = vmatprep.subr.bf16.mxu0 0
        %2667 = vmatpush2.bf16.msra.mxu0 0
        %2668 = vmatprep.subr.bf16.mxu0 0
        %2669 = vmatpush2.bf16.msra.mxu0 0
        %2670 = vmatprep.subr.bf16.mxu0 0
        %2671 = vmatpush2.bf16.msra.mxu0 0
        %2672 = vmatprep.subr.bf16.mxu0 0
        %2673 = vmatpush2.bf16.msra.mxu0 0
        %2674 = vmatprep.subr.bf16.mxu0 0
        %2675 = vmatpush2.bf16.msra.mxu0 0
        %2676 = vmatprep.subr.bf16.mxu0 0
        %2677 = vmatpush2.bf16.msra.mxu0 0
        %2678 = vmatprep.subr.bf16.mxu0 0
        %2679 = vmatpush2.bf16.msra.mxu0 0
        %2680 = vmatprep.subr.bf16.mxu0 0
        %2681 = vmatpush2.bf16.msra.mxu0 0
        %2682 = vmatprep.mubr.bf16.mxu0 0
        %2683 = vmatmul.mubr.bf16.gmra.mxu0 %v2648
        %v2684 = vpop.f32.mrf.mxu0
        %v2685 = vadd.f32 %v2621, %v2684
        %v2686 = vpop.f32.mrf.mxu0
        %v2687 = vpop.f32.mrf.mxu0
        %v2688 = vpop.f32.mrf.mxu0
        %2689 = vdwg.mxu0
        %v2690 = vmax.f32 %v2685, 0.0
        %v2691 = vpack.c.bf16 %v2690, %v2690
        %s2692 = scalar_lea.vmem %s18, 64
        %v2693 = vld [vmem:[%s2692] sm:$0xf]
        %v2694 = vld [vmem:[%s2692 + $0x4] sm:$0xf]
        %v2695 = vld [vmem:[%s2692 + $0x8] sm:$0xf]
        %v2696 = vld [vmem:[%s2692 + $0xc] sm:$0xf]
        %v2697 = vld [vmem:[%s2692 + $0x10] sm:$0xf]
        %v2698 = vld [vmem:[%s2692 + $0x14] sm:$0xf]
        %v2699 = vld [vmem:[%s2692 + $0x18] sm:$0xf]
        %v2700 = vld [vmem:[%s2692 + $0x1c] sm:$0xf]
        %v2701 = vld [vmem:[%s2692 + $0x20] sm:$0xf]
        %v2702 = vld [vmem:[%s2692 + $0x24] sm:$0xf]
        %v2703 = vld [vmem:[%s2692 + $0x28] sm:$0xf]
        %v2704 = vld [vmem:[%s2692 + $0x2c] sm:$0xf]
        %v2705 = vld [vmem:[%s2692 + $0x30] sm:$0xf]
        %v2706 = vld [vmem:[%s2692 + $0x34] sm:$0xf]
        %v2707 = vld [vmem:[%s2692 + $0x38] sm:$0xf]
        %v2708 = vld [vmem:[%s2692 + $0x3c] sm:$0xf]
        %s2709 = scalar_lea.vmem %s19, 1
        %v2710 = vld [vmem:[%s2709] sm:$0x1]
        %v2712 = vlaneseq
        %v2713 = vshrl.u32 %v2712, 7
        %v2714 = vsub.s32 0, %v2713
        %v2715 = vrot.slane %v2710, %v2714
        %v2733 = vunpack.c.l.b16 %v2693
        %v2734 = vunpack.c.l.b16 %v2694
        %v2735 = vunpack.c.l.b16 %v2695
        %v2736 = vunpack.c.l.b16 %v2696
        %v2737 = vunpack.c.l.b16 %v2697
        %v2738 = vunpack.c.l.b16 %v2698
        %v2739 = vunpack.c.l.b16 %v2699
        %v2740 = vunpack.c.l.b16 %v2700
        %v2741 = vunpack.c.l.b16 %v2701
        %v2742 = vunpack.c.l.b16 %v2702
        %v2743 = vunpack.c.l.b16 %v2703
        %v2744 = vunpack.c.l.b16 %v2704
        %v2745 = vunpack.c.l.b16 %v2705
        %v2746 = vunpack.c.l.b16 %v2706
        %v2747 = vunpack.c.l.b16 %v2707
        %v2748 = vunpack.c.l.b16 %v2708
        %v2749 = vpack.c.b16 %v2734, %v2733
        %v2750 = vpack.c.b16 %v2736, %v2735
        %v2751 = vpack.c.b16 %v2738, %v2737
        %v2752 = vpack.c.b16 %v2740, %v2739
        %v2753 = vpack.c.b16 %v2742, %v2741
        %v2754 = vpack.c.b16 %v2744, %v2743
        %v2755 = vpack.c.b16 %v2746, %v2745
        %v2756 = vpack.c.b16 %v2748, %v2747
        %2765 = vmatprep.subr.bf16.mxu0 0
        %2766 = vmatpush1.bf16.msra.mxu0 %v2756
        %2767 = vmatprep.subr.bf16.mxu0 0
        %2768 = vmatpush1.bf16.msra.mxu0 %v2755
        %2769 = vmatprep.subr.bf16.mxu0 0
        %2770 = vmatpush1.bf16.msra.mxu0 %v2754
        %2771 = vmatprep.subr.bf16.mxu0 0
        %2772 = vmatpush1.bf16.msra.mxu0 %v2753
        %2773 = vmatprep.subr.bf16.mxu0 0
        %2774 = vmatpush1.bf16.msra.mxu0 %v2752
        %2775 = vmatprep.subr.bf16.mxu0 0
        %2776 = vmatpush1.bf16.msra.mxu0 %v2751
        %2777 = vmatprep.subr.bf16.mxu0 0
        %2778 = vmatpush1.bf16.msra.mxu0 %v2750
        %2779 = vmatprep.subr.bf16.mxu0 0
        %2780 = vmatpush1.bf16.msra.mxu0 %v2749
        %2781 = vmatprep.subr.bf16.mxu0 0
        %2782 = vmatpush2.bf16.msra.mxu0 0
        %2783 = vmatprep.subr.bf16.mxu0 0
        %2784 = vmatpush2.bf16.msra.mxu0 0
        %2785 = vmatprep.subr.bf16.mxu0 0
        %2786 = vmatpush2.bf16.msra.mxu0 0
        %2787 = vmatprep.subr.bf16.mxu0 0
        %2788 = vmatpush2.bf16.msra.mxu0 0
        %2789 = vmatprep.subr.bf16.mxu0 0
        %2790 = vmatpush2.bf16.msra.mxu0 0
        %2791 = vmatprep.subr.bf16.mxu0 0
        %2792 = vmatpush2.bf16.msra.mxu0 0
        %2793 = vmatprep.subr.bf16.mxu0 0
        %2794 = vmatpush2.bf16.msra.mxu0 0
        %2795 = vmatprep.subr.bf16.mxu0 0
        %2796 = vmatpush2.bf16.msra.mxu0 0
        %2797 = vmatprep.mubr.bf16.mxu0 0
        %2798 = vmatmul.mubr.bf16.gmra.mxu0 %v2691
        %v2799 = vpop.f32.mrf.mxu0
        %v2800 = vadd.f32 %v2715, %v2799
        %v2801 = vpop.f32.mrf.mxu0
        %v2802 = vpop.f32.mrf.mxu0
        %v2803 = vpop.f32.mrf.mxu0
        %2804 = vdwg.mxu0
        %v2805 = vadd.f32 %v2604, %v2800
        %s2806 = scalar_lea.vmem %s14, 1
        %v2807 = vld [vmem:[%s2806] sm:$0x1]
        %s2808 = scalar_lea.vmem %s15, 1
        %v2809 = vld [vmem:[%s2808] sm:$0x1]
        %v2810 = vsel %vm768, %v2805, 0.0
        %2811 = vadd.xlane.f32.xlu0 %v2810
        %v2812 = vpop.xlane.xlu0 %2811
        %v2813 = vmul.f32 %v2812, %v1527
        %v2814 = vsub.f32 %v2805, %v2813
        %v2815 = vmul.f32 %v2814, %v2814
        %v2816 = vsel %vm768, %v2815, 0.0
        %2817 = vadd.xlane.f32.xlu0 %v2816
        %v2818 = vpop.xlane.xlu0 %2817
        %v2819 = vmul.f32 %v2818, %v1527
        %v2820 = vadd.f32 %v2819, 1e-05
        %v2821 = vrsqrt.pop %v2820
        %v2822 = vmul.f32 %v2814, %v2821
        %v2824 = vlaneseq
        %v2825 = vshrl.u32 %v2824, 7
        %v2826 = vsub.s32 0, %v2825
        %v2827 = vrot.slane %v2807, %v2826
        %v2829 = vmul.f32 %v2822, %v2827
        %v2831 = vlaneseq
        %v2832 = vshrl.u32 %v2831, 7
        %v2833 = vsub.s32 0, %v2832
        %v2834 = vrot.slane %v2809, %v2833
        %v2836 = vadd.f32 %v2829, %v2834
        %2837 = vst.msk [vmem:[%s688] sm:$0xff] %vm768, %v2836
        %s2838 = sand.u32 %s475, 1
        %s2839 = scalar_lea.sflag [#allocation4], %s2838
        %s2840 = sand.u32 %s475, 1
        %s2841 = smul.addr %s2840, 8
        %s2842 = scalar_lea.vmem [#allocation10], %s2841
        // Predicated region
        $region117: #{tpu_custom_call.1} parent=99 // pred_check
          %p2843 = pneg %p485
        $region118: #{tpu_custom_call.1} parent=99 // pred_check_branch
          %2845 = sbr.rel (%p2843) target = $region120
        $region119: #{tpu_custom_call.1} parent=99 // pred_region
          %s2847 = ssub.s32 128, 128
          %2848 = vsyncadd %s2839, %s2847
          %s2849 = smul.addr %s37, 128
          %s2850 = scalar_lea.hbm %s20, %s2849
          %s2852 = sshll.u32 %s2842, 4
          %s2853 = int_to_ptr.vmem [resolvable:$true] %s2852
          %2855 = dma.vmem_to_hbm [thread:$0]  %s2853, 128, %s2850, %s2839
        $region120: #{tpu_custom_call.1} parent=99 // pred_fallthru
          _
      $region100: #{tpu_custom_call.1} parent=5 // pred_fallthru
        _
      %p2856 = scmp.le.s32.totalorder 2, %s32
      // Predicated region
      $region121: #{tpu_custom_call.1} parent=5 // pred_check
        %p2857 = pneg %p2856
      $region122: #{tpu_custom_call.1} parent=5 // pred_check_branch
        %2859 = sbr.rel (%p2857) target = $region124
      $region123: #{tpu_custom_call.1} parent=5 // pred_region
        %s2860 = ssub.s32 %s32, 2
        // Predicated region
        $region125: #{tpu_custom_call.1} parent=123 // pred_check
          %p2861 = pneg %p491
        $region126: #{tpu_custom_call.1} parent=123 // pred_check_branch
          %2863 = sbr.rel (%p2861) target = $region128
        $region127: #{tpu_custom_call.1} parent=123 // pred_region
          %s2864 = sand.u32 %s476, 1
          %s2865 = scalar_lea.sflag [#allocation4], %s2864
          %s2866 = sand.u32 %s476, 1
          %s2867 = smul.addr %s2866, 8
          %s2868 = scalar_lea.vmem [#allocation10], %s2867
          %2869 = dma.done %s2865, 128
        $region128: #{tpu_custom_call.1} parent=123 // pred_fallthru
          _
      $region124: #{tpu_custom_call.1} parent=5 // pred_fallthru
        _
    $region6: #{tpu_custom_call.1} parent=1 // loop_footer
      %s36 = sadd.s32 1, %s32
    $region7: #{tpu_custom_call.1} parent=1 // loop_footer_branch
      %31 = sbr.rel target = $region3
    $region8: #{tpu_custom_call.1} parent=1 // loop_exit
      _
    %2870 = vsyncpa [#allocation3], 1
    %s2871 = scalar_lea.sflag [#allocation3], 1
    %2872 = vsyncpa %s2871, 1
    %2873 = vsyncpa [#allocation6], 1
    %2874 = vsyncpa [#allocation9], 1
    %2875 = vsyncpa [#allocation4], 1
    %s2876 = scalar_lea.sflag [#allocation4], 1
    %2877 = vsyncpa %s2876, 1

</llo_original>
